<compile_context>
chip_gen: v7x
topology: tpu7x:2x2x1
jax: 0.10.0
libtpu: 0.0.40
codegen_flags: <defaults>
</compile_context>

<pallas_src>
import functools

import jax
import jax.numpy as jnp
from jax import lax
from jax.experimental import pallas as pl
from jax.experimental.pallas import tpu as pltpu

INPUT_SIZE = 4096
HIDDEN = 256
GATES = 4 * HIDDEN  # 1024


def _pick_tile(n, candidates):
    """Largest candidate that evenly divides n (and is <= n); else n itself."""
    for c in candidates:
        if n >= c and n % c == 0:
            return c
    return n


# ---------------------------------------------------------------------------
# Kernel 1: input projection  (B*T, 4096) @ (4096, 1024) + (b_ih + b_hh)
#   grid = (M//tm, K//tk); output block (tm, 1024) is resident across K and
#   used directly as the accumulator.
# ---------------------------------------------------------------------------
def _proj_kernel(x_ref, w_ref, b_ref, o_ref):
    k = pl.program_id(1)

    @pl.when(k == 0)
    def _():
        o_ref[...] = jnp.zeros_like(o_ref)

    o_ref[...] += jnp.dot(
        x_ref[...].astype(jnp.bfloat16),      # bf16 MXU operands,
        w_ref[...],                            # f32 accumulation
        preferred_element_type=jnp.float32,
    )

    @pl.when(k == pl.num_programs(1) - 1)
    def _():
        o_ref[...] += b_ref[...]               # fused (b_ih + b_hh)


def input_projection(x2d, w_ihT_bf16, bias_row):
    M, K = x2d.shape
    N = w_ihT_bf16.shape[1]
    tm = _pick_tile(M, (256, 128, 64, 32, 16, 8))
    tk = _pick_tile(K, (512, 256, 128))
    return pl.pallas_call(
        _proj_kernel,
        out_shape=jax.ShapeDtypeStruct((M, N), jnp.float32),
        grid_spec=pltpu.PrefetchScalarGridSpec(
            num_scalar_prefetch=0,
            grid=(M // tm, K // tk),
            in_specs=[
                pl.BlockSpec((tm, tk), lambda m, k: (m, k)),
                pl.BlockSpec((tk, N), lambda m, k: (k, 0)),
                pl.BlockSpec((1, N), lambda m, k: (0, 0)),
            ],
            out_specs=pl.BlockSpec((tm, N), lambda m, k: (m, 0)),
        ),
        compiler_params=pltpu.CompilerParams(
            dimension_semantics=("parallel", "arbitrary"),
        ),
    )(x2d, w_ihT_bf16, bias_row)


# ---------------------------------------------------------------------------
# Kernel 2: LSTM recurrence over time chunks + fused final Linear(256 -> 1)
#   x_proj: (B, T, 1024) (already contains x_t @ W_ih^T + b_ih + b_hh)
#   gates  = x_proj[:, t, :] + h @ W_hh^T ; gate order (i, f, g, o) as PyTorch.
# ---------------------------------------------------------------------------
def _recurrence_kernel(xp_ref, whh_ref, wfc_ref, bfc_ref, o_ref,
                       h_ref, c_ref, *, chunk):
    ci = pl.program_id(0)

    @pl.when(ci == 0)
    def _():
        h_ref[...] = jnp.zeros_like(h_ref)
        c_ref[...] = jnp.zeros_like(c_ref)

    h = h_ref[...]
    c = c_ref[...]
    for tt in range(chunk):                     # static unroll within the chunk
        gates = xp_ref[:, tt, :] + jnp.dot(
            h, whh_ref[...], preferred_element_type=jnp.float32)
        i_g = jax.nn.sigmoid(gates[:, 0 * HIDDEN:1 * HIDDEN])
        f_g = jax.nn.sigmoid(gates[:, 1 * HIDDEN:2 * HIDDEN])
        g_g = jnp.tanh(gates[:, 2 * HIDDEN:3 * HIDDEN])
        o_g = jax.nn.sigmoid(gates[:, 3 * HIDDEN:4 * HIDDEN])
        c = f_g * c + i_g * g_g
        h = o_g * jnp.tanh(c)
    h_ref[...] = h
    c_ref[...] = c

    @pl.when(ci == pl.num_programs(0) - 1)
    def _():
        # Linear(256 -> 1) as a VPU/XLU reduction instead of a 1-col MXU matmul.
        score = jnp.sum(h * wfc_ref[...], axis=-1, keepdims=True) + bfc_ref[...]
        o_ref[...] = score.astype(o_ref.dtype)


def lstm_recurrence(x_proj_btg, w_hhT, w_fc_row, b_fc_11):
    B, T, G = x_proj_btg.shape
    chunk = _pick_tile(T, (32, 16, 8))
    kernel = functools.partial(_recurrence_kernel, chunk=chunk)
    return pl.pallas_call(
        kernel,
        out_shape=jax.ShapeDtypeStruct((B, 1), jnp.float32),
        grid_spec=pltpu.PrefetchScalarGridSpec(
            num_scalar_prefetch=0,
            grid=(T // chunk,),
            in_specs=[
                pl.BlockSpec((B, chunk, G), lambda c: (0, c, 0)),
                pl.BlockSpec((HIDDEN, G), lambda c: (0, 0)),
                pl.BlockSpec((1, HIDDEN), lambda c: (0, 0)),
                pl.BlockSpec((1, 1), lambda c: (0, 0)),
            ],
            out_specs=pl.BlockSpec((B, 1), lambda c: (0, 0)),
            scratch_shapes=[
                pltpu.VMEM((B, HIDDEN), jnp.float32),  # h
                pltpu.VMEM((B, HIDDEN), jnp.float32),  # c
            ],
        ),
        compiler_params=pltpu.CompilerParams(
            dimension_semantics=("arbitrary",),
        ),
    )(x_proj_btg, w_hhT, w_fc_row, b_fc_11)


# ---------------------------------------------------------------------------
# Parameter prep (ONE-TIME, outside jit): pre-transpose / pre-cast weights so
# no HBM transposes happen per forward call.
# ---------------------------------------------------------------------------
def prepare_params(params):
    return {
        "w_ihT_bf16": jnp.asarray(params["w_ih"].T, jnp.bfloat16),   # (4096, 1024)
        "bias_row": (params["b_ih"] + params["b_hh"]).reshape(1, GATES)
                    .astype(jnp.float32),                            # (1, 1024)
        "w_hhT": jnp.asarray(params["w_hh"].T, jnp.float32),         # (256, 1024)
        "w_fc_row": params["w_fc"].reshape(1, HIDDEN).astype(jnp.float32),
        "b_fc_11": params["b_fc"].reshape(1, 1).astype(jnp.float32),
    }


@jax.jit
def lstm_anno_forward(x, prepped):
    B, T, I = x.shape
    x_proj = input_projection(
        x.reshape(B * T, I), prepped["w_ihT_bf16"], prepped["bias_row"]
    )                                            # (B*T, 1024) f32
    x_proj = x_proj.reshape(B, T, GATES)         # free reshape, no transpose
    return lstm_recurrence(
        x_proj, prepped["w_hhT"], prepped["w_fc_row"], prepped["b_fc_11"]
    )


# ---------------------------------------------------------------------------
# Pure-JAX reference (PyTorch LSTM semantics).  The kernel uses bf16 MXU
# operands for the input projection, so the reference optionally rounds those
# operands to bf16 (then computes in f32) for a tight comparison.
# ---------------------------------------------------------------------------
def lstm_anno_reference(x, params, *, round_proj_to_bf16=True):
    B, T, _ = x.shape
    w_ih, w_hh, b_ih, b_hh = (
        params["w_ih"], params["w_hh"], params["b_ih"], params["b_hh"]
    )
    if round_proj_to_bf16:
        xq = x.astype(jnp.bfloat16).astype(jnp.float32)
        w_ihq = w_ih.astype(jnp.bfloat16).astype(jnp.float32)
    else:
        xq, w_ihq = x, w_ih

    def step(carry, x_t):
        h, c = carry
        gates = x_t @ w_ihq.T + b_ih + h @ w_hh.T + b_hh
        i = jax.nn.sigmoid(gates[:, 0 * HIDDEN:1 * HIDDEN])
        f = jax.nn.sigmoid(gates[:, 1 * HIDDEN:2 * HIDDEN])
        g = jnp.tanh(gates[:, 2 * HIDDEN:3 * HIDDEN])
        o = jax.nn.sigmoid(gates[:, 3 * HIDDEN:4 * HIDDEN])
        c = f * c + i * g
        h = o * jnp.tanh(c)
        return (h, c), None

    h0 = jnp.zeros((B, HIDDEN), jnp.float32)
    c0 = jnp.zeros((B, HIDDEN), jnp.float32)
    (h_T, _), _ = lax.scan(step, (h0, c0), xq.transpose(1, 0, 2))
    return h_T @ params["w_fc"].T + params["b_fc"]


def init_params(key):
    ks = jax.random.split(key, 6)
    scale = 1.0 / jnp.sqrt(HIDDEN)  # PyTorch default uniform(-1/sqrt(H), 1/sqrt(H))
    u = lambda k, shape: jax.random.uniform(
        k, shape, jnp.float32, minval=-scale, maxval=scale)
    return {
        "w_ih": u(ks[0], (GATES, INPUT_SIZE)),
        "w_hh": u(ks[1], (GATES, HIDDEN)),
        "b_ih": u(ks[2], (GATES,)),
        "b_hh": u(ks[3], (GATES,)),
        "w_fc": u(ks[4], (1, HIDDEN)),
        "b_fc": u(ks[5], (1,)),
    }


if __name__ == "__main__":
    key = jax.random.PRNGKey(0)
    k_x, k_p = jax.random.split(key)
    B, T = 2, 8
    x = jax.random.normal(k_x, (B, T, INPUT_SIZE), jnp.float32)
    params = init_params(k_p)
    prepped = prepare_params(params)

    out = jax.block_until_ready(lstm_anno_forward(x, prepped))
    assert out.shape == (B, 1), out.shape

    with jax.default_matmul_precision("highest"):
        ref = jax.block_until_ready(lstm_anno_reference(x, params))
    assert jnp.allclose(out, ref, atol=1e-3, rtol=1e-3), (out, ref)

    print("KERNEL_OK")
</pallas_src>

<mosaic_0001>
module attributes {stable_mosaic.version = 11 : i64} {
  func.func @_proj_kernel(%arg0: i32, %arg1: i32, %arg2: memref<16x512xf32, #tpu.memory_space<vmem>>, %arg3: memref<512x1024xbf16, #tpu.memory_space<vmem>>, %arg4: memref<1x1024xf32, #tpu.memory_space<vmem>>, %arg5: memref<16x1024xf32, #tpu.memory_space<vmem>>) attributes {dimension_semantics = [#tpu.dimension_semantics<parallel>, #tpu.dimension_semantics<arbitrary>], iteration_bounds = array<i64: 1, 8>, scalar_prefetch = 0 : i64, scratch_operands = 0 : i64, tpu.core_type = #tpu.core_type<tc>, window_params = [{transform_indices = @transform_0, window_bounds = array<i64: 16, 512>}, {transform_indices = @transform_1, window_bounds = array<i64: 512, 1024>}, {pipeline_mode = #tpu.pipeline_mode<synchronous>, transform_indices = @transform_2, window_bounds = array<i64: 1, 1024>}, {transform_indices = @transform_3, window_bounds = array<i64: 16, 1024>}]} {
    %c0_i32 = arith.constant 0 : i32
    %0 = arith.cmpi eq, %arg1, %c0_i32 : i32
    %1 = arith.extui %0 : i1 to i32
    %c0_i32_0 = arith.constant 0 : i32
    %2 = arith.cmpi ne, %1, %c0_i32_0 : i32
    scf.if %2 {
      %cst_9 = arith.constant 0.000000e+00 : f32
      %13 = vector.broadcast %cst_9 : f32 to vector<16x1024xf32>
      %c0_10 = arith.constant 0 : index
      %c0_11 = arith.constant 0 : index
      %14 = vector.load %arg5[%c0_10, %c0_11] : memref<16x1024xf32, #tpu.memory_space<vmem>>, vector<16x1024xf32>
      tpu.vector_store %arg5[%c0_10, %c0_11], %13 {strides = array<i32>} : memref<16x1024xf32, #tpu.memory_space<vmem>>, vector<16x1024xf32>,
    } else {
    }
    %c0 = arith.constant 0 : index
    %c0_1 = arith.constant 0 : index
    %3 = vector.load %arg5[%c0, %c0_1] : memref<16x1024xf32, #tpu.memory_space<vmem>>, vector<16x1024xf32>
    %c0_2 = arith.constant 0 : index
    %c0_3 = arith.constant 0 : index
    %4 = vector.load %arg2[%c0_2, %c0_3] : memref<16x512xf32, #tpu.memory_space<vmem>>, vector<16x512xf32>
    %5 = arith.truncf %4 : vector<16x512xf32> to vector<16x512xbf16>
    %c0_4 = arith.constant 0 : index
    %c0_5 = arith.constant 0 : index
    %6 = vector.load %arg3[%c0_4, %c0_5] : memref<512x1024xbf16, #tpu.memory_space<vmem>>, vector<512x1024xbf16>
    %cst = arith.constant dense<0.000000e+00> : vector<16x1024xf32>
    %7 = tpu.matmul %5, %6, %cst {dimension_numbers = #tpu.dot_dimension_numbers<[1], [0], [0], [1], [0, 0, 1, 1], [], []>} : vector<16x512xbf16>, vector<512x1024xbf16>, vector<16x1024xf32> -> vector<16x1024xf32>
    %8 = arith.addf %3, %7 : vector<16x1024xf32>
    %c0_6 = arith.constant 0 : index
    %c0_7 = arith.constant 0 : index
    %9 = vector.load %arg5[%c0_6, %c0_7] : memref<16x1024xf32, #tpu.memory_space<vmem>>, vector<16x1024xf32>
    tpu.vector_store %arg5[%c0_6, %c0_7], %8 {strides = array<i32>} : memref<16x1024xf32, #tpu.memory_space<vmem>>, vector<16x1024xf32>,
    %c7_i32 = arith.constant 7 : i32
    %10 = arith.cmpi eq, %arg1, %c7_i32 : i32
    %11 = arith.extui %10 : i1 to i32
    %c0_i32_8 = arith.constant 0 : i32
    %12 = arith.cmpi ne, %11, %c0_i32_8 : i32
    scf.if %12 {
      %c0_9 = arith.constant 0 : index
      %c0_10 = arith.constant 0 : index
      %13 = vector.load %arg5[%c0_9, %c0_10] : memref<16x1024xf32, #tpu.memory_space<vmem>>, vector<16x1024xf32>
      %c0_11 = arith.constant 0 : index
      %c0_12 = arith.constant 0 : index
      %14 = vector.load %arg4[%c0_11, %c0_12] : memref<1x1024xf32, #tpu.memory_space<vmem>>, vector<1x1024xf32>
      %15 = vector.broadcast %14 : vector<1x1024xf32> to vector<16x1024xf32>
      %16 = arith.addf %13, %15 : vector<16x1024xf32>
      %c0_13 = arith.constant 0 : index
      %c0_14 = arith.constant 0 : index
      %17 = vector.load %arg5[%c0_13, %c0_14] : memref<16x1024xf32, #tpu.memory_space<vmem>>, vector<16x1024xf32>
      tpu.vector_store %arg5[%c0_13, %c0_14], %16 {strides = array<i32>} : memref<16x1024xf32, #tpu.memory_space<vmem>>, vector<16x1024xf32>,
    } else {
    }
    return
  }
  func.func @transform_0(%arg0: i32, %arg1: i32) -> (i32, i32) {
    %c0_i32 = arith.constant 0 : i32
    return %arg0, %arg1 : i32, i32
  }
  func.func @transform_1(%arg0: i32, %arg1: i32) -> (i32, i32) {
    %c0_i32 = arith.constant 0 : i32
    %c0_i32_0 = arith.constant 0 : i32
    return %arg1, %c0_i32 : i32, i32
  }
  func.func @transform_2(%arg0: i32, %arg1: i32) -> (i32, i32) {
    %c0_i32 = arith.constant 0 : i32
    %c0_i32_0 = arith.constant 0 : i32
    %c0_i32_1 = arith.constant 0 : i32
    return %c0_i32, %c0_i32_0 : i32, i32
  }
  func.func @transform_3(%arg0: i32, %arg1: i32) -> (i32, i32) {
    %c0_i32 = arith.constant 0 : i32
    %c0_i32_0 = arith.constant 0 : i32
    return %arg0, %c0_i32 : i32, i32
  }
}

module attributes {stable_mosaic.version = 11 : i64} {
  func.func @_recurrence_kernel(%arg0: i32, %arg1: memref<2x8x1024xf32, #tpu.memory_space<vmem>>, %arg2: memref<256x1024xf32, #tpu.memory_space<vmem>>, %arg3: memref<1x256xf32, #tpu.memory_space<vmem>>, %arg4: memref<1x1xf32, #tpu.memory_space<vmem>>, %arg5: memref<2x1xf32, #tpu.memory_space<vmem>>, %arg6: memref<2x256xf32, #tpu.memory_space<vmem>>, %arg7: memref<2x256xf32, #tpu.memory_space<vmem>>) attributes {dimension_semantics = [#tpu.dimension_semantics<arbitrary>], iteration_bounds = array<i64: 1>, scalar_prefetch = 0 : i64, scratch_operands = 2 : i64, tpu.core_type = #tpu.core_type<tc>, window_params = [{transform_indices = @transform_0, window_bounds = array<i64: 2, 8, 1024>}, {pipeline_mode = #tpu.pipeline_mode<synchronous>, transform_indices = @transform_1, window_bounds = array<i64: 256, 1024>}, {pipeline_mode = #tpu.pipeline_mode<synchronous>, transform_indices = @transform_2, window_bounds = array<i64: 1, 256>}, {pipeline_mode = #tpu.pipeline_mode<synchronous>, transform_indices = @transform_3, window_bounds = array<i64: 1, 1>}, {pipeline_mode = #tpu.pipeline_mode<synchronous>, transform_indices = @transform_4, window_bounds = array<i64: 2, 1>}]} {
    %c0_i32 = arith.constant 0 : i32
    %0 = arith.cmpi eq, %arg0, %c0_i32 : i32
    %1 = arith.extui %0 : i1 to i32
    %c0_i32_0 = arith.constant 0 : i32
    %2 = arith.cmpi ne, %1, %c0_i32_0 : i32
    scf.if %2 {
      %cst_74 = arith.constant 0.000000e+00 : f32
      %250 = vector.broadcast %cst_74 : f32 to vector<2x256xf32>
      %c0_75 = arith.constant 0 : index
      %c0_76 = arith.constant 0 : index
      %251 = vector.load %arg6[%c0_75, %c0_76] : memref<2x256xf32, #tpu.memory_space<vmem>>, vector<2x256xf32>
      tpu.vector_store %arg6[%c0_75, %c0_76], %250 {strides = array<i32>} : memref<2x256xf32, #tpu.memory_space<vmem>>, vector<2x256xf32>,
      %cst_77 = arith.constant 0.000000e+00 : f32
      %252 = vector.broadcast %cst_77 : f32 to vector<2x256xf32>
      %c0_78 = arith.constant 0 : index
      %c0_79 = arith.constant 0 : index
      %253 = vector.load %arg7[%c0_78, %c0_79] : memref<2x256xf32, #tpu.memory_space<vmem>>, vector<2x256xf32>
      tpu.vector_store %arg7[%c0_78, %c0_79], %252 {strides = array<i32>} : memref<2x256xf32, #tpu.memory_space<vmem>>, vector<2x256xf32>,
    } else {
    }
    %c0 = arith.constant 0 : index
    %c0_1 = arith.constant 0 : index
    %3 = vector.load %arg6[%c0, %c0_1] : memref<2x256xf32, #tpu.memory_space<vmem>>, vector<2x256xf32>
    %c0_2 = arith.constant 0 : index
    %c0_3 = arith.constant 0 : index
    %4 = vector.load %arg7[%c0_2, %c0_3] : memref<2x256xf32, #tpu.memory_space<vmem>>, vector<2x256xf32>
    %c0_4 = arith.constant 0 : index
    %c0_5 = arith.constant 0 : index
    %c0_6 = arith.constant 0 : index
    %5 = vector.load %arg1[%c0_4, %c0_5, %c0_6] : memref<2x8x1024xf32, #tpu.memory_space<vmem>>, vector<2x1x1024xf32>
    %6 = vector.shape_cast %5 : vector<2x1x1024xf32> to vector<2x1024xf32>
    %c0_7 = arith.constant 0 : index
    %c0_8 = arith.constant 0 : index
    %7 = vector.load %arg2[%c0_7, %c0_8] : memref<256x1024xf32, #tpu.memory_space<vmem>>, vector<256x1024xf32>
    %cst = arith.constant dense<0.000000e+00> : vector<2x1024xf32>
    %8 = tpu.matmul %3, %7, %cst {dimension_numbers = #tpu.dot_dimension_numbers<[1], [0], [0], [1], [0, 0, 1, 1], [], []>} : vector<2x256xf32>, vector<256x1024xf32>, vector<2x1024xf32> -> vector<2x1024xf32>
    %9 = arith.addf %6, %8 : vector<2x1024xf32>
    %10 = vector.extract_strided_slice %9 {offsets = [0, 0], sizes = [2, 256], strides = [1, 1]} : vector<2x1024xf32> to vector<2x256xf32>
    %11 = arith.negf %10 : vector<2x256xf32>
    %12 = math.exp %11 : vector<2x256xf32>
    %cst_9 = arith.constant 1.000000e+00 : f32
    %13 = vector.broadcast %cst_9 : f32 to vector<2x256xf32>
    %14 = arith.addf %13, %12 : vector<2x256xf32>
    %15 = arith.divf %13, %14 : vector<2x256xf32>
    %16 = vector.extract_strided_slice %9 {offsets = [0, 256], sizes = [2, 256], strides = [1, 1]} : vector<2x1024xf32> to vector<2x256xf32>
    %17 = arith.negf %16 : vector<2x256xf32>
    %18 = math.exp %17 : vector<2x256xf32>
    %cst_10 = arith.constant 1.000000e+00 : f32
    %19 = vector.broadcast %cst_10 : f32 to vector<2x256xf32>
    %20 = arith.addf %19, %18 : vector<2x256xf32>
    %21 = arith.divf %19, %20 : vector<2x256xf32>
    %22 = vector.extract_strided_slice %9 {offsets = [0, 512], sizes = [2, 256], strides = [1, 1]} : vector<2x1024xf32> to vector<2x256xf32>
    %23 = math.tanh %22 : vector<2x256xf32>
    %24 = vector.extract_strided_slice %9 {offsets = [0, 768], sizes = [2, 256], strides = [1, 1]} : vector<2x1024xf32> to vector<2x256xf32>
    %25 = arith.negf %24 : vector<2x256xf32>
    %26 = math.exp %25 : vector<2x256xf32>
    %cst_11 = arith.constant 1.000000e+00 : f32
    %27 = vector.broadcast %cst_11 : f32 to vector<2x256xf32>
    %28 = arith.addf %27, %26 : vector<2x256xf32>
    %29 = arith.divf %27, %28 : vector<2x256xf32>
    %30 = arith.mulf %21, %4 : vector<2x256xf32>
    %31 = arith.mulf %15, %23 : vector<2x256xf32>
    %32 = arith.addf %30, %31 : vector<2x256xf32>
    %33 = math.tanh %32 : vector<2x256xf32>
    %34 = arith.mulf %29, %33 : vector<2x256xf32>
    %c0_12 = arith.constant 0 : index
    %c1 = arith.constant 1 : index
    %c0_13 = arith.constant 0 : index
    %35 = vector.load %arg1[%c0_12, %c1, %c0_13] : memref<2x8x1024xf32, #tpu.memory_space<vmem>>, vector<2x1x1024xf32>
    %36 = vector.shape_cast %35 : vector<2x1x1024xf32> to vector<2x1024xf32>
    %c0_14 = arith.constant 0 : index
    %c0_15 = arith.constant 0 : index
    %37 = vector.load %arg2[%c0_14, %c0_15] : memref<256x1024xf32, #tpu.memory_space<vmem>>, vector<256x1024xf32>
    %cst_16 = arith.constant dense<0.000000e+00> : vector<2x1024xf32>
    %38 = tpu.matmul %34, %37, %cst_16 {dimension_numbers = #tpu.dot_dimension_numbers<[1], [0], [0], [1], [0, 0, 1, 1], [], []>} : vector<2x256xf32>, vector<256x1024xf32>, vector<2x1024xf32> -> vector<2x1024xf32>
    %39 = arith.addf %36, %38 : vector<2x1024xf32>
    %40 = vector.extract_strided_slice %39 {offsets = [0, 0], sizes = [2, 256], strides = [1, 1]} : vector<2x1024xf32> to vector<2x256xf32>
    %41 = arith.negf %40 : vector<2x256xf32>
    %42 = math.exp %41 : vector<2x256xf32>
    %cst_17 = arith.constant 1.000000e+00 : f32
    %43 = vector.broadcast %cst_17 : f32 to vector<2x256xf32>
    %44 = arith.addf %43, %42 : vector<2x256xf32>
    %45 = arith.divf %43, %44 : vector<2x256xf32>
    %46 = vector.extract_strided_slice %39 {offsets = [0, 256], sizes = [2, 256], strides = [1, 1]} : vector<2x1024xf32> to vector<2x256xf32>
    %47 = arith.negf %46 : vector<2x256xf32>
    %48 = math.exp %47 : vector<2x256xf32>
    %cst_18 = arith.constant 1.000000e+00 : f32
    %49 = vector.broadcast %cst_18 : f32 to vector<2x256xf32>
    %50 = arith.addf %49, %48 : vector<2x256xf32>
    %51 = arith.divf %49, %50 : vector<2x256xf32>
    %52 = vector.extract_strided_slice %39 {offsets = [0, 512], sizes = [2, 256], strides = [1, 1]} : vector<2x1024xf32> to vector<2x256xf32>
    %53 = math.tanh %52 : vector<2x256xf32>
    %54 = vector.extract_strided_slice %39 {offsets = [0, 768], sizes = [2, 256], strides = [1, 1]} : vector<2x1024xf32> to vector<2x256xf32>
    %55 = arith.negf %54 : vector<2x256xf32>
    %56 = math.exp %55 : vector<2x256xf32>
    %cst_19 = arith.constant 1.000000e+00 : f32
    %57 = vector.broadcast %cst_19 : f32 to vector<2x256xf32>
    %58 = arith.addf %57, %56 : vector<2x256xf32>
    %59 = arith.divf %57, %58 : vector<2x256xf32>
    %60 = arith.mulf %51, %32 : vector<2x256xf32>
    %61 = arith.mulf %45, %53 : vector<2x256xf32>
    %62 = arith.addf %60, %61 : vector<2x256xf32>
    %63 = math.tanh %62 : vector<2x256xf32>
    %64 = arith.mulf %59, %63 : vector<2x256xf32>
    %c0_20 = arith.constant 0 : index
    %c2 = arith.constant 2 : index
    %c0_21 = arith.constant 0 : index
    %65 = vector.load %arg1[%c0_20, %c2, %c0_21] : memref<2x8x1024xf32, #tpu.memory_space<vmem>>, vector<2x1x1024xf32>
    %66 = vector.shape_cast %65 : vector<2x1x1024xf32> to vector<2x1024xf32>
    %c0_22 = arith.constant 0 : index
    %c0_23 = arith.constant 0 : index
    %67 = vector.load %arg2[%c0_22, %c0_23] : memref<256x1024xf32, #tpu.memory_space<vmem>>, vector<256x1024xf32>
    %cst_24 = arith.constant dense<0.000000e+00> : vector<2x1024xf32>
    %68 = tpu.matmul %64, %67, %cst_24 {dimension_numbers = #tpu.dot_dimension_numbers<[1], [0], [0], [1], [0, 0, 1, 1], [], []>} : vector<2x256xf32>, vector<256x1024xf32>, vector<2x1024xf32> -> vector<2x1024xf32>
    %69 = arith.addf %66, %68 : vector<2x1024xf32>
    %70 = vector.extract_strided_slice %69 {offsets = [0, 0], sizes = [2, 256], strides = [1, 1]} : vector<2x1024xf32> to vector<2x256xf32>
    %71 = arith.negf %70 : vector<2x256xf32>
    %72 = math.exp %71 : vector<2x256xf32>
    %cst_25 = arith.constant 1.000000e+00 : f32
    %73 = vector.broadcast %cst_25 : f32 to vector<2x256xf32>
    %74 = arith.addf %73, %72 : vector<2x256xf32>
    %75 = arith.divf %73, %74 : vector<2x256xf32>
    %76 = vector.extract_strided_slice %69 {offsets = [0, 256], sizes = [2, 256], strides = [1, 1]} : vector<2x1024xf32> to vector<2x256xf32>
    %77 = arith.negf %76 : vector<2x256xf32>
    %78 = math.exp %77 : vector<2x256xf32>
    %cst_26 = arith.constant 1.000000e+00 : f32
    %79 = vector.broadcast %cst_26 : f32 to vector<2x256xf32>
    %80 = arith.addf %79, %78 : vector<2x256xf32>
    %81 = arith.divf %79, %80 : vector<2x256xf32>
    %82 = vector.extract_strided_slice %69 {offsets = [0, 512], sizes = [2, 256], strides = [1, 1]} : vector<2x1024xf32> to vector<2x256xf32>
    %83 = math.tanh %82 : vector<2x256xf32>
    %84 = vector.extract_strided_slice %69 {offsets = [0, 768], sizes = [2, 256], strides = [1, 1]} : vector<2x1024xf32> to vector<2x256xf32>
    %85 = arith.negf %84 : vector<2x256xf32>
    %86 = math.exp %85 : vector<2x256xf32>
    %cst_27 = arith.constant 1.000000e+00 : f32
    %87 = vector.broadcast %cst_27 : f32 to vector<2x256xf32>
    %88 = arith.addf %87, %86 : vector<2x256xf32>
    %89 = arith.divf %87, %88 : vector<2x256xf32>
    %90 = arith.mulf %81, %62 : vector<2x256xf32>
    %91 = arith.mulf %75, %83 : vector<2x256xf32>
    %92 = arith.addf %90, %91 : vector<2x256xf32>
    %93 = math.tanh %92 : vector<2x256xf32>
    %94 = arith.mulf %89, %93 : vector<2x256xf32>
    %c0_28 = arith.constant 0 : index
    %c3 = arith.constant 3 : index
    %c0_29 = arith.constant 0 : index
    %95 = vector.load %arg1[%c0_28, %c3, %c0_29] : memref<2x8x1024xf32, #tpu.memory_space<vmem>>, vector<2x1x1024xf32>
    %96 = vector.shape_cast %95 : vector<2x1x1024xf32> to vector<2x1024xf32>
    %c0_30 = arith.constant 0 : index
    %c0_31 = arith.constant 0 : index
    %97 = vector.load %arg2[%c0_30, %c0_31] : memref<256x1024xf32, #tpu.memory_space<vmem>>, vector<256x1024xf32>
    %cst_32 = arith.constant dense<0.000000e+00> : vector<2x1024xf32>
    %98 = tpu.matmul %94, %97, %cst_32 {dimension_numbers = #tpu.dot_dimension_numbers<[1], [0], [0], [1], [0, 0, 1, 1], [], []>} : vector<2x256xf32>, vector<256x1024xf32>, vector<2x1024xf32> -> vector<2x1024xf32>
    %99 = arith.addf %96, %98 : vector<2x1024xf32>
    %100 = vector.extract_strided_slice %99 {offsets = [0, 0], sizes = [2, 256], strides = [1, 1]} : vector<2x1024xf32> to vector<2x256xf32>
    %101 = arith.negf %100 : vector<2x256xf32>
    %102 = math.exp %101 : vector<2x256xf32>
    %cst_33 = arith.constant 1.000000e+00 : f32
    %103 = vector.broadcast %cst_33 : f32 to vector<2x256xf32>
    %104 = arith.addf %103, %102 : vector<2x256xf32>
    %105 = arith.divf %103, %104 : vector<2x256xf32>
    %106 = vector.extract_strided_slice %99 {offsets = [0, 256], sizes = [2, 256], strides = [1, 1]} : vector<2x1024xf32> to vector<2x256xf32>
    %107 = arith.negf %106 : vector<2x256xf32>
    %108 = math.exp %107 : vector<2x256xf32>
    %cst_34 = arith.constant 1.000000e+00 : f32
    %109 = vector.broadcast %cst_34 : f32 to vector<2x256xf32>
    %110 = arith.addf %109, %108 : vector<2x256xf32>
    %111 = arith.divf %109, %110 : vector<2x256xf32>
    %112 = vector.extract_strided_slice %99 {offsets = [0, 512], sizes = [2, 256], strides = [1, 1]} : vector<2x1024xf32> to vector<2x256xf32>
    %113 = math.tanh %112 : vector<2x256xf32>
    %114 = vector.extract_strided_slice %99 {offsets = [0, 768], sizes = [2, 256], strides = [1, 1]} : vector<2x1024xf32> to vector<2x256xf32>
    %115 = arith.negf %114 : vector<2x256xf32>
    %116 = math.exp %115 : vector<2x256xf32>
    %cst_35 = arith.constant 1.000000e+00 : f32
    %117 = vector.broadcast %cst_35 : f32 to vector<2x256xf32>
    %118 = arith.addf %117, %116 : vector<2x256xf32>
    %119 = arith.divf %117, %118 : vector<2x256xf32>
    %120 = arith.mulf %111, %92 : vector<2x256xf32>
    %121 = arith.mulf %105, %113 : vector<2x256xf32>
    %122 = arith.addf %120, %121 : vector<2x256xf32>
    %123 = math.tanh %122 : vector<2x256xf32>
    %124 = arith.mulf %119, %123 : vector<2x256xf32>
    %c0_36 = arith.constant 0 : index
    %c4 = arith.constant 4 : index
    %c0_37 = arith.constant 0 : index
    %125 = vector.load %arg1[%c0_36, %c4, %c0_37] : memref<2x8x1024xf32, #tpu.memory_space<vmem>>, vector<2x1x1024xf32>
    %126 = vector.shape_cast %125 : vector<2x1x1024xf32> to vector<2x1024xf32>
    %c0_38 = arith.constant 0 : index
    %c0_39 = arith.constant 0 : index
    %127 = vector.load %arg2[%c0_38, %c0_39] : memref<256x1024xf32, #tpu.memory_space<vmem>>, vector<256x1024xf32>
    %cst_40 = arith.constant dense<0.000000e+00> : vector<2x1024xf32>
    %128 = tpu.matmul %124, %127, %cst_40 {dimension_numbers = #tpu.dot_dimension_numbers<[1], [0], [0], [1], [0, 0, 1, 1], [], []>} : vector<2x256xf32>, vector<256x1024xf32>, vector<2x1024xf32> -> vector<2x1024xf32>
    %129 = arith.addf %126, %128 : vector<2x1024xf32>
    %130 = vector.extract_strided_slice %129 {offsets = [0, 0], sizes = [2, 256], strides = [1, 1]} : vector<2x1024xf32> to vector<2x256xf32>
    %131 = arith.negf %130 : vector<2x256xf32>
    %132 = math.exp %131 : vector<2x256xf32>
    %cst_41 = arith.constant 1.000000e+00 : f32
    %133 = vector.broadcast %cst_41 : f32 to vector<2x256xf32>
    %134 = arith.addf %133, %132 : vector<2x256xf32>
    %135 = arith.divf %133, %134 : vector<2x256xf32>
    %136 = vector.extract_strided_slice %129 {offsets = [0, 256], sizes = [2, 256], strides = [1, 1]} : vector<2x1024xf32> to vector<2x256xf32>
    %137 = arith.negf %136 : vector<2x256xf32>
    %138 = math.exp %137 : vector<2x256xf32>
    %cst_42 = arith.constant 1.000000e+00 : f32
    %139 = vector.broadcast %cst_42 : f32 to vector<2x256xf32>
    %140 = arith.addf %139, %138 : vector<2x256xf32>
    %141 = arith.divf %139, %140 : vector<2x256xf32>
    %142 = vector.extract_strided_slice %129 {offsets = [0, 512], sizes = [2, 256], strides = [1, 1]} : vector<2x1024xf32> to vector<2x256xf32>
    %143 = math.tanh %142 : vector<2x256xf32>
    %144 = vector.extract_strided_slice %129 {offsets = [0, 768], sizes = [2, 256], strides = [1, 1]} : vector<2x1024xf32> to vector<2x256xf32>
    %145 = arith.negf %144 : vector<2x256xf32>
    %146 = math.exp %145 : vector<2x256xf32>
    %cst_43 = arith.constant 1.000000e+00 : f32
    %147 = vector.broadcast %cst_43 : f32 to vector<2x256xf32>
    %148 = arith.addf %147, %146 : vector<2x256xf32>
    %149 = arith.divf %147, %148 : vector<2x256xf32>
    %150 = arith.mulf %141, %122 : vector<2x256xf32>
    %151 = arith.mulf %135, %143 : vector<2x256xf32>
    %152 = arith.addf %150, %151 : vector<2x256xf32>
    %153 = math.tanh %152 : vector<2x256xf32>
    %154 = arith.mulf %149, %153 : vector<2x256xf32>
    %c0_44 = arith.constant 0 : index
    %c5 = arith.constant 5 : index
    %c0_45 = arith.constant 0 : index
    %155 = vector.load %arg1[%c0_44, %c5, %c0_45] : memref<2x8x1024xf32, #tpu.memory_space<vmem>>, vector<2x1x1024xf32>
    %156 = vector.shape_cast %155 : vector<2x1x1024xf32> to vector<2x1024xf32>
    %c0_46 = arith.constant 0 : index
    %c0_47 = arith.constant 0 : index
    %157 = vector.load %arg2[%c0_46, %c0_47] : memref<256x1024xf32, #tpu.memory_space<vmem>>, vector<256x1024xf32>
    %cst_48 = arith.constant dense<0.000000e+00> : vector<2x1024xf32>
    %158 = tpu.matmul %154, %157, %cst_48 {dimension_numbers = #tpu.dot_dimension_numbers<[1], [0], [0], [1], [0, 0, 1, 1], [], []>} : vector<2x256xf32>, vector<256x1024xf32>, vector<2x1024xf32> -> vector<2x1024xf32>
    %159 = arith.addf %156, %158 : vector<2x1024xf32>
    %160 = vector.extract_strided_slice %159 {offsets = [0, 0], sizes = [2, 256], strides = [1, 1]} : vector<2x1024xf32> to vector<2x256xf32>
    %161 = arith.negf %160 : vector<2x256xf32>
    %162 = math.exp %161 : vector<2x256xf32>
    %cst_49 = arith.constant 1.000000e+00 : f32
    %163 = vector.broadcast %cst_49 : f32 to vector<2x256xf32>
    %164 = arith.addf %163, %162 : vector<2x256xf32>
    %165 = arith.divf %163, %164 : vector<2x256xf32>
    %166 = vector.extract_strided_slice %159 {offsets = [0, 256], sizes = [2, 256], strides = [1, 1]} : vector<2x1024xf32> to vector<2x256xf32>
    %167 = arith.negf %166 : vector<2x256xf32>
    %168 = math.exp %167 : vector<2x256xf32>
    %cst_50 = arith.constant 1.000000e+00 : f32
    %169 = vector.broadcast %cst_50 : f32 to vector<2x256xf32>
    %170 = arith.addf %169, %168 : vector<2x256xf32>
    %171 = arith.divf %169, %170 : vector<2x256xf32>
    %172 = vector.extract_strided_slice %159 {offsets = [0, 512], sizes = [2, 256], strides = [1, 1]} : vector<2x1024xf32> to vector<2x256xf32>
    %173 = math.tanh %172 : vector<2x256xf32>
    %174 = vector.extract_strided_slice %159 {offsets = [0, 768], sizes = [2, 256], strides = [1, 1]} : vector<2x1024xf32> to vector<2x256xf32>
    %175 = arith.negf %174 : vector<2x256xf32>
    %176 = math.exp %175 : vector<2x256xf32>
    %cst_51 = arith.constant 1.000000e+00 : f32
    %177 = vector.broadcast %cst_51 : f32 to vector<2x256xf32>
    %178 = arith.addf %177, %176 : vector<2x256xf32>
    %179 = arith.divf %177, %178 : vector<2x256xf32>
    %180 = arith.mulf %171, %152 : vector<2x256xf32>
    %181 = arith.mulf %165, %173 : vector<2x256xf32>
    %182 = arith.addf %180, %181 : vector<2x256xf32>
    %183 = math.tanh %182 : vector<2x256xf32>
    %184 = arith.mulf %179, %183 : vector<2x256xf32>
    %c0_52 = arith.constant 0 : index
    %c6 = arith.constant 6 : index
    %c0_53 = arith.constant 0 : index
    %185 = vector.load %arg1[%c0_52, %c6, %c0_53] : memref<2x8x1024xf32, #tpu.memory_space<vmem>>, vector<2x1x1024xf32>
    %186 = vector.shape_cast %185 : vector<2x1x1024xf32> to vector<2x1024xf32>
    %c0_54 = arith.constant 0 : index
    %c0_55 = arith.constant 0 : index
    %187 = vector.load %arg2[%c0_54, %c0_55] : memref<256x1024xf32, #tpu.memory_space<vmem>>, vector<256x1024xf32>
    %cst_56 = arith.constant dense<0.000000e+00> : vector<2x1024xf32>
    %188 = tpu.matmul %184, %187, %cst_56 {dimension_numbers = #tpu.dot_dimension_numbers<[1], [0], [0], [1], [0, 0, 1, 1], [], []>} : vector<2x256xf32>, vector<256x1024xf32>, vector<2x1024xf32> -> vector<2x1024xf32>
    %189 = arith.addf %186, %188 : vector<2x1024xf32>
    %190 = vector.extract_strided_slice %189 {offsets = [0, 0], sizes = [2, 256], strides = [1, 1]} : vector<2x1024xf32> to vector<2x256xf32>
    %191 = arith.negf %190 : vector<2x256xf32>
    %192 = math.exp %191 : vector<2x256xf32>
    %cst_57 = arith.constant 1.000000e+00 : f32
    %193 = vector.broadcast %cst_57 : f32 to vector<2x256xf32>
    %194 = arith.addf %193, %192 : vector<2x256xf32>
    %195 = arith.divf %193, %194 : vector<2x256xf32>
    %196 = vector.extract_strided_slice %189 {offsets = [0, 256], sizes = [2, 256], strides = [1, 1]} : vector<2x1024xf32> to vector<2x256xf32>
    %197 = arith.negf %196 : vector<2x256xf32>
    %198 = math.exp %197 : vector<2x256xf32>
    %cst_58 = arith.constant 1.000000e+00 : f32
    %199 = vector.broadcast %cst_58 : f32 to vector<2x256xf32>
    %200 = arith.addf %199, %198 : vector<2x256xf32>
    %201 = arith.divf %199, %200 : vector<2x256xf32>
    %202 = vector.extract_strided_slice %189 {offsets = [0, 512], sizes = [2, 256], strides = [1, 1]} : vector<2x1024xf32> to vector<2x256xf32>
    %203 = math.tanh %202 : vector<2x256xf32>
    %204 = vector.extract_strided_slice %189 {offsets = [0, 768], sizes = [2, 256], strides = [1, 1]} : vector<2x1024xf32> to vector<2x256xf32>
    %205 = arith.negf %204 : vector<2x256xf32>
    %206 = math.exp %205 : vector<2x256xf32>
    %cst_59 = arith.constant 1.000000e+00 : f32
    %207 = vector.broadcast %cst_59 : f32 to vector<2x256xf32>
    %208 = arith.addf %207, %206 : vector<2x256xf32>
    %209 = arith.divf %207, %208 : vector<2x256xf32>
    %210 = arith.mulf %201, %182 : vector<2x256xf32>
    %211 = arith.mulf %195, %203 : vector<2x256xf32>
    %212 = arith.addf %210, %211 : vector<2x256xf32>
    %213 = math.tanh %212 : vector<2x256xf32>
    %214 = arith.mulf %209, %213 : vector<2x256xf32>
    %c0_60 = arith.constant 0 : index
    %c7 = arith.constant 7 : index
    %c0_61 = arith.constant 0 : index
    %215 = vector.load %arg1[%c0_60, %c7, %c0_61] : memref<2x8x1024xf32, #tpu.memory_space<vmem>>, vector<2x1x1024xf32>
    %216 = vector.shape_cast %215 : vector<2x1x1024xf32> to vector<2x1024xf32>
    %c0_62 = arith.constant 0 : index
    %c0_63 = arith.constant 0 : index
    %217 = vector.load %arg2[%c0_62, %c0_63] : memref<256x1024xf32, #tpu.memory_space<vmem>>, vector<256x1024xf32>
    %cst_64 = arith.constant dense<0.000000e+00> : vector<2x1024xf32>
    %218 = tpu.matmul %214, %217, %cst_64 {dimension_numbers = #tpu.dot_dimension_numbers<[1], [0], [0], [1], [0, 0, 1, 1], [], []>} : vector<2x256xf32>, vector<256x1024xf32>, vector<2x1024xf32> -> vector<2x1024xf32>
    %219 = arith.addf %216, %218 : vector<2x1024xf32>
    %220 = vector.extract_strided_slice %219 {offsets = [0, 0], sizes = [2, 256], strides = [1, 1]} : vector<2x1024xf32> to vector<2x256xf32>
    %221 = arith.negf %220 : vector<2x256xf32>
    %222 = math.exp %221 : vector<2x256xf32>
    %cst_65 = arith.constant 1.000000e+00 : f32
    %223 = vector.broadcast %cst_65 : f32 to vector<2x256xf32>
    %224 = arith.addf %223, %222 : vector<2x256xf32>
    %225 = arith.divf %223, %224 : vector<2x256xf32>
    %226 = vector.extract_strided_slice %219 {offsets = [0, 256], sizes = [2, 256], strides = [1, 1]} : vector<2x1024xf32> to vector<2x256xf32>
    %227 = arith.negf %226 : vector<2x256xf32>
    %228 = math.exp %227 : vector<2x256xf32>
    %cst_66 = arith.constant 1.000000e+00 : f32
    %229 = vector.broadcast %cst_66 : f32 to vector<2x256xf32>
    %230 = arith.addf %229, %228 : vector<2x256xf32>
    %231 = arith.divf %229, %230 : vector<2x256xf32>
    %232 = vector.extract_strided_slice %219 {offsets = [0, 512], sizes = [2, 256], strides = [1, 1]} : vector<2x1024xf32> to vector<2x256xf32>
    %233 = math.tanh %232 : vector<2x256xf32>
    %234 = vector.extract_strided_slice %219 {offsets = [0, 768], sizes = [2, 256], strides = [1, 1]} : vector<2x1024xf32> to vector<2x256xf32>
    %235 = arith.negf %234 : vector<2x256xf32>
    %236 = math.exp %235 : vector<2x256xf32>
    %cst_67 = arith.constant 1.000000e+00 : f32
    %237 = vector.broadcast %cst_67 : f32 to vector<2x256xf32>
    %238 = arith.addf %237, %236 : vector<2x256xf32>
    %239 = arith.divf %237, %238 : vector<2x256xf32>
    %240 = arith.mulf %231, %212 : vector<2x256xf32>
    %241 = arith.mulf %225, %233 : vector<2x256xf32>
    %242 = arith.addf %240, %241 : vector<2x256xf32>
    %243 = math.tanh %242 : vector<2x256xf32>
    %244 = arith.mulf %239, %243 : vector<2x256xf32>
    %c0_68 = arith.constant 0 : index
    %c0_69 = arith.constant 0 : index
    %245 = vector.load %arg6[%c0_68, %c0_69] : memref<2x256xf32, #tpu.memory_space<vmem>>, vector<2x256xf32>
    tpu.vector_store %arg6[%c0_68, %c0_69], %244 {strides = array<i32>} : memref<2x256xf32, #tpu.memory_space<vmem>>, vector<2x256xf32>,
    %c0_70 = arith.constant 0 : index
    %c0_71 = arith.constant 0 : index
    %246 = vector.load %arg7[%c0_70, %c0_71] : memref<2x256xf32, #tpu.memory_space<vmem>>, vector<2x256xf32>
    tpu.vector_store %arg7[%c0_70, %c0_71], %242 {strides = array<i32>} : memref<2x256xf32, #tpu.memory_space<vmem>>, vector<2x256xf32>,
    %c0_i32_72 = arith.constant 0 : i32
    %247 = arith.cmpi eq, %arg0, %c0_i32_72 : i32
    %248 = arith.extui %247 : i1 to i32
    %c0_i32_73 = arith.constant 0 : i32
    %249 = arith.cmpi ne, %248, %c0_i32_73 : i32
    scf.if %249 {
      %c0_74 = arith.constant 0 : index
      %c0_75 = arith.constant 0 : index
      %250 = vector.load %arg3[%c0_74, %c0_75] : memref<1x256xf32, #tpu.memory_space<vmem>>, vector<1x256xf32>
      %251 = vector.broadcast %250 : vector<1x256xf32> to vector<2x256xf32>
      %252 = arith.mulf %244, %251 : vector<2x256xf32>
      %cst_76 = arith.constant dense<0.000000e+00> : vector<2xf32>
      %253 = vector.multi_reduction <add>, %252, %cst_76 [1] : vector<2x256xf32> to vector<2xf32>
      %254 = vector.shape_cast %253 : vector<2xf32> to vector<2x1xf32>
      %c0_77 = arith.constant 0 : index
      %c0_78 = arith.constant 0 : index
      %255 = vector.load %arg4[%c0_77, %c0_78] : memref<1x1xf32, #tpu.memory_space<vmem>>, vector<1x1xf32>
      %256 = vector.broadcast %255 : vector<1x1xf32> to vector<2x1xf32>
      %257 = arith.addf %254, %256 : vector<2x1xf32>
      %c0_79 = arith.constant 0 : index
      %c0_80 = arith.constant 0 : index
      %258 = vector.load %arg5[%c0_79, %c0_80] : memref<2x1xf32, #tpu.memory_space<vmem>>, vector<2x1xf32>
      tpu.vector_store %arg5[%c0_79, %c0_80], %257 {strides = array<i32>} : memref<2x1xf32, #tpu.memory_space<vmem>>, vector<2x1xf32>,
    } else {
    }
    return
  }
  func.func @transform_0(%arg0: i32) -> (i32, i32, i32) {
    %c0_i32 = arith.constant 0 : i32
    %c0_i32_0 = arith.constant 0 : i32
    %c0_i32_1 = arith.constant 0 : i32
    return %c0_i32, %arg0, %c0_i32_0 : i32, i32, i32
  }
  func.func @transform_1(%arg0: i32) -> (i32, i32) {
    %c0_i32 = arith.constant 0 : i32
    %c0_i32_0 = arith.constant 0 : i32
    %c0_i32_1 = arith.constant 0 : i32
    return %c0_i32, %c0_i32_0 : i32, i32
  }
  func.func @transform_2(%arg0: i32) -> (i32, i32) {
    %c0_i32 = arith.constant 0 : i32
    %c0_i32_0 = arith.constant 0 : i32
    %c0_i32_1 = arith.constant 0 : i32
    return %c0_i32, %c0_i32_0 : i32, i32
  }
  func.func @transform_3(%arg0: i32) -> (i32, i32) {
    %c0_i32 = arith.constant 0 : i32
    %c0_i32_0 = arith.constant 0 : i32
    %c0_i32_1 = arith.constant 0 : i32
    return %c0_i32, %c0_i32_0 : i32, i32
  }
  func.func @transform_4(%arg0: i32) -> (i32, i32) {
    %c0_i32 = arith.constant 0 : i32
    %c0_i32_0 = arith.constant 0 : i32
    %c0_i32_1 = arith.constant 0 : i32
    return %c0_i32, %c0_i32_0 : i32, i32
  }
}

</mosaic_0001>

<llo_original>
// kernel: lstm_anno_forward.2
$region0: #{lstm_anno_forward.2}
  #allocation0 [shape = 'u32[]', space=smem, size = 0x4, offset = 0x4, fixed_abs, tag = 'smem constant byte address 0x4 - core index']
  #allocation1 [shape = 'u32[144,128]{1,0:T(1,128)}', space=vmem, size = 0x12000, scoped, tag = 'internal scratch']
  %s0 = inlined_call_operand.hbm [shape: f32[16,4096], index: 0, kind: input, shape index: {}]
  %s1 = inlined_call_operand.hbm [shape: bf16[4096,1024], index: 1, kind: input, shape index: {}]
  %s2 = inlined_call_operand.hbm [shape: f32[1,1024], index: 2, kind: input, shape index: {}]
  %s3 = inlined_call_operand.vmem [shape: f32[16,1024], index: 3, kind: output, shape index: {}]
  %s4 = sld [smem:[#allocation0]]
  $region65: #{lstm_anno_forward.2} parent=0
    _
  %s6 = ssub.s32 1, %s4
  %s7 = scalar_select 0, %s6, %s4
  $region1: #{lstm_anno_forward.2} parent=0
    #allocation2 [shape = 'u8[65536]{0}', space=vmem, size = 0x10000, scoped, tag = 'input window, operand 0']
    #allocation3 [shape = 's32[2]{0}', space=sflag, size = 0x8, scoped, tag = 'scoped memory for lstm_anno_forward.2']
    #allocation4 [shape = 'u8[2097152]{0}', space=vmem, size = 0x200000, scoped, tag = 'input window, operand 1']
    #allocation5 [shape = 's32[2]{0}', space=sflag, size = 0x8, scoped, tag = 'scoped memory for lstm_anno_forward.2']
    #allocation6 [shape = 'u8[4096]{0}', space=vmem, size = 0x1000, scoped, tag = 'input window, operand 2, single buffered']
    %8 = vsyncpa [#allocation3], 0
    %s9 = scalar_lea.sflag [#allocation3], 1
    %10 = vsyncpa %s9, 0
    %11 = vsyncpa [#allocation5], 0
    %s12 = scalar_lea.sflag [#allocation5], 1
    %13 = vsyncpa %s12, 0
    loop: start=0, step=1, limit=10
    $region2: #{lstm_anno_forward.2} parent=1 // loop_pre_header
      _
    $region3: #{lstm_anno_forward.2} parent=1 // loop_header
      %s15 = sphi 0, %s19
      %p16 = scmp.ge.s32.totalorder %s15, 10
      %s22 = sphi 0, %s34
      %s23 = sphi 0, %s30
      %s24 = sphi 0, %s22
      %s25 = sphi 0, %s23
      %s26 = sphi 0, %s24
      %s27 = sphi 0, %s25
      %s39 = sphi 0, %s41
      %s42 = sphi 0, %s39
      %s43 = sphi 0, %s42
      %s59 = sphi 0, %s43
      %s65 = sphi 0, %s67
      %s68 = sphi 0, %s65
      %s69 = sphi 0, %s68
      %s85 = sphi 0, %s69
      %s89 = sphi 0, %s89
      %s91 = sphi 0, %s89
      %s92 = sphi 0, %s91
      %s106 = sphi 0, %s92
      %s112 = sphi 0, %s114
      %s115 = sphi 0, %s112
      %s116 = sphi 0, %s115
      %s132 = sphi 0, %s116
    $region4: #{lstm_anno_forward.2} parent=1 // loop_header_branch
      %18 = sbr.rel (%p16) target = $region8
    $region5: #{lstm_anno_forward.2} parent=1 // loop_body
      %s20 = ssub.s32 %s15, 1
      %s21 = ssub.s32 %s15, 2
      %s28 = sadd.s32 1, %s23
      %p29 = scmp.ge.s32.totalorder %s28, 8
      %s30 = scalar_select %p29, 0, %s28
      %s31 = sadd.s32 1, %s22
      %s32 = scalar_select %p29, %s31, %s22
      %p33 = scmp.ge.s32.totalorder %s32, 1
      %s34 = scalar_select %p33, 0, %s32
      %s35 = ssub.s32 %s22, %s34
      %s36 = ssub.s32 %s23, %s30
      %s37 = sor.u32 %s35, %s36
      %p38 = scmp.eq.s32.totalorder %s37, 0
      %s40 = sadd.s32 %s39, 1
      %s41 = scalar_select %p38, %s39, %s40
      %p44 = pneg %p38
      %p45 = scmp.eq.s32.totalorder %s15, 7
      %p46 = por %p44, %p45
      %p47 = scmp.ne.s32.totalorder %s39, %s42
      %p48 = scmp.eq.s32.totalorder %s15, 0
      %p49 = por %p47, %p48
      %p50 = scmp.ne.s32.totalorder %s39, %s42
      %p51 = scmp.eq.s32.totalorder %s20, 7
      %p52 = por %p50, %p51
      %p53 = scmp.ne.s32.totalorder %s42, %s43
      %p54 = scmp.eq.s32.totalorder %s20, 0
      %p55 = por %p53, %p54
      %p56 = scmp.ne.s32.totalorder %s42, %s43
      %p57 = scmp.eq.s32.totalorder %s21, 7
      %p58 = por %p56, %p57
      %p60 = scmp.ne.s32.totalorder %s43, %s59
      %p61 = scmp.eq.s32.totalorder %s21, 0
      %p62 = por %p60, %p61
      %s63 = ssub.s32 %s23, %s30
      %p64 = scmp.eq.s32.totalorder %s63, 0
      %s66 = sadd.s32 %s65, 1
      %s67 = scalar_select %p64, %s65, %s66
      %p70 = pneg %p64
      %p71 = scmp.eq.s32.totalorder %s15, 7
      %p72 = por %p70, %p71
      %p73 = scmp.ne.s32.totalorder %s65, %s68
      %p74 = scmp.eq.s32.totalorder %s15, 0
      %p75 = por %p73, %p74
      %p76 = scmp.ne.s32.totalorder %s65, %s68
      %p77 = scmp.eq.s32.totalorder %s20, 7
      %p78 = por %p76, %p77
      %p79 = scmp.ne.s32.totalorder %s68, %s69
      %p80 = scmp.eq.s32.totalorder %s20, 0
      %p81 = por %p79, %p80
      %p82 = scmp.ne.s32.totalorder %s68, %s69
      %p83 = scmp.eq.s32.totalorder %s21, 7
      %p84 = por %p82, %p83
      %p86 = scmp.ne.s32.totalorder %s69, %s85
      %p87 = scmp.eq.s32.totalorder %s21, 0
      %p88 = por %p86, %p87
      %s90 = sadd.s32 %s89, 1
      %p93 = scmp.eq.s32.totalorder %s15, 7
      %p94 = scmp.ne.s32.totalorder %s89, %s91
      %p95 = scmp.eq.s32.totalorder %s15, 0
      %p96 = por %p94, %p95
      %p97 = scmp.ne.s32.totalorder %s89, %s91
      %p98 = scmp.eq.s32.totalorder %s20, 7
      %p99 = por %p97, %p98
      %p100 = scmp.ne.s32.totalorder %s91, %s92
      %p101 = scmp.eq.s32.totalorder %s20, 0
      %p102 = por %p100, %p101
      %p103 = scmp.ne.s32.totalorder %s91, %s92
      %p104 = scmp.eq.s32.totalorder %s21, 7
      %p105 = por %p103, %p104
      %p107 = scmp.ne.s32.totalorder %s92, %s106
      %p108 = scmp.eq.s32.totalorder %s21, 0
      %p109 = por %p107, %p108
      %s110 = ssub.s32 %s22, %s34
      %p111 = scmp.eq.s32.totalorder %s110, 0
      %s113 = sadd.s32 %s112, 1
      %s114 = scalar_select %p111, %s112, %s113
      %p117 = pneg %p111
      %p118 = scmp.eq.s32.totalorder %s15, 7
      %p119 = por %p117, %p118
      %p120 = scmp.ne.s32.totalorder %s112, %s115
      %p121 = scmp.eq.s32.totalorder %s15, 0
      %p122 = por %p120, %p121
      %p123 = scmp.ne.s32.totalorder %s112, %s115
      %p124 = scmp.eq.s32.totalorder %s20, 7
      %p125 = por %p123, %p124
      %p126 = scmp.ne.s32.totalorder %s115, %s116
      %p127 = scmp.eq.s32.totalorder %s20, 0
      %p128 = por %p126, %p127
      %p129 = scmp.ne.s32.totalorder %s115, %s116
      %p130 = scmp.eq.s32.totalorder %s21, 7
      %p131 = por %p129, %p130
      %p133 = scmp.ne.s32.totalorder %s116, %s132
      %p134 = scmp.eq.s32.totalorder %s21, 0
      %p135 = por %p133, %p134
      %p136 = scmp.le.s32.totalorder 1, %s15
      %p137 = scmp.lt.s32.totalorder %s15, 9
      %p138 = pnand %p136, %p137
      %p139 = pneg %p138
      // Predicated region
      $region9: #{lstm_anno_forward.2} parent=5 // pred_check
        _
      $region10: #{lstm_anno_forward.2} parent=5 // pred_check_branch
        %141 = sbr.rel (%p138) target = $region12
      $region11: #{lstm_anno_forward.2} parent=5 // pred_region
        %s142 = ssub.s32 %s15, 1
        // Predicated region
        $region13: #{lstm_anno_forward.2} parent=11 // pred_check
          %p143 = pneg %p102
        $region14: #{lstm_anno_forward.2} parent=11 // pred_check_branch
          %145 = sbr.rel (%p143) target = $region16
        $region15: #{lstm_anno_forward.2} parent=11 // pred_region
          %s147 = ssub.s32 128, 128
          %148 = vsyncadd [#allocation5], %s147
          %s150 = sshll.u32 [#allocation6], 4
          %s151 = int_to_ptr.vmem [resolvable:$true] %s150
          %153 = dma.hbm_to_vmem [thread:$0]  %s2, 128, %s151, [#allocation5]
        $region16: #{lstm_anno_forward.2} parent=11 // pred_fallthru
          _
      $region12: #{lstm_anno_forward.2} parent=5 // pred_fallthru
        _
      %p154 = scmp.lt.s32.totalorder %s15, 8
      // Predicated region
      $region17: #{lstm_anno_forward.2} parent=5 // pred_check
        %p155 = pneg %p154
      $region18: #{lstm_anno_forward.2} parent=5 // pred_check_branch
        %157 = sbr.rel (%p155) target = $region20
      $region19: #{lstm_anno_forward.2} parent=5 // pred_region
        // Predicated region
        $region21: #{lstm_anno_forward.2} parent=19 // pred_check
          %p158 = pneg %p49
        $region22: #{lstm_anno_forward.2} parent=19 // pred_check_branch
          %160 = sbr.rel (%p158) target = $region24
        $region23: #{lstm_anno_forward.2} parent=19 // pred_region
          %s161 = sand.u32 %s39, 1
          %s162 = scalar_lea.sflag [#allocation3], %s161
          %s163 = sand.u32 %s39, 1
          %s164 = smul.addr %s163, 64
          %s165 = scalar_lea.vmem [#allocation2], %s164
          %s166 = smul.u32 2, %s22
          %s167 = smul.u32 4, %s23
          %s169 = ssub.s32 1024, 1024
          %170 = vsyncadd %s162, %s169
          %s171 = smul.addr %s166, 32
          %s172 = sadd.s32 %s167, %s171
          %s173 = smul.addr %s172, 128
          %s174 = scalar_lea.hbm %s0, %s173
          %s175 = sshll.u32 %s165, 4
          %s176 = int_to_ptr.vmem [resolvable:$true] %s175
          %181 = dma.hbm_to_vmem [thread:$0]  %s174, 1024, %s176, %s162, 4096, 512, 32
        $region24: #{lstm_anno_forward.2} parent=19 // pred_fallthru
          _
        // Predicated region
        $region25: #{lstm_anno_forward.2} parent=19 // pred_check
          %p182 = pneg %p75
        $region26: #{lstm_anno_forward.2} parent=19 // pred_check_branch
          %184 = sbr.rel (%p182) target = $region28
        $region27: #{lstm_anno_forward.2} parent=19 // pred_region
          %s185 = sand.u32 %s15, 1
          %s186 = scalar_lea.sflag [#allocation5], %s185
          %s187 = sand.u32 %s65, 1
          %s188 = smul.addr %s187, 2048
          %s189 = scalar_lea.vmem [#allocation4], %s188
          %s190 = smul.u32 64, %s23
          %s192 = ssub.s32 32768, 32768
          %193 = vsyncadd %s186, %s192
          %s194 = smul.addr %s190, 8
          %s195 = smul.addr %s194, 64
          %s196 = scalar_lea.hbm %s1, %s195
          %s197 = sshll.u32 %s189, 4
          %s198 = int_to_ptr.vmem [resolvable:$true] %s197
          %203 = dma.hbm_to_vmem [thread:$0]  %s196, 32768, %s198, %s186, 512, 512, 32
        $region28: #{lstm_anno_forward.2} parent=19 // pred_fallthru
          _
      $region20: #{lstm_anno_forward.2} parent=5 // pred_fallthru
        _
      %p204 = scmp.le.s32.totalorder 1, %s15
      %p205 = scmp.lt.s32.totalorder %s15, 9
      %p206 = pnand %p204, %p205
      %p207 = pneg %p206
      // Predicated region
      $region29: #{lstm_anno_forward.2} parent=5 // pred_check
        _
      $region30: #{lstm_anno_forward.2} parent=5 // pred_check_branch
        %209 = sbr.rel (%p206) target = $region32
      $region31: #{lstm_anno_forward.2} parent=5 // pred_region
        %s210 = ssub.s32 %s15, 1
        %s211 = sand.u32 %s42, 1
        %s212 = scalar_lea.sflag [#allocation3], %s211
        %s213 = sand.u32 %s42, 1
        %s214 = smul.addr %s213, 64
        %s215 = scalar_lea.vmem [#allocation2], %s214
        // Predicated region
        $region33: #{lstm_anno_forward.2} parent=31 // pred_check
          %p216 = pneg %p55
        $region34: #{lstm_anno_forward.2} parent=31 // pred_check_branch
          %218 = sbr.rel (%p216) target = $region36
        $region35: #{lstm_anno_forward.2} parent=31 // pred_region
          %219 = dma.done %s212, 1024
        $region36: #{lstm_anno_forward.2} parent=31 // pred_fallthru
          _
        %s220 = sand.u32 %s20, 1
        %s221 = scalar_lea.sflag [#allocation5], %s220
        %s222 = sand.u32 %s68, 1
        %s223 = smul.addr %s222, 2048
        %s224 = scalar_lea.vmem [#allocation4], %s223
        // Predicated region
        $region37: #{lstm_anno_forward.2} parent=31 // pred_check
          %p225 = pneg %p81
        $region38: #{lstm_anno_forward.2} parent=31 // pred_check_branch
          %227 = sbr.rel (%p225) target = $region40
        $region39: #{lstm_anno_forward.2} parent=31 // pred_region
          %228 = dma.done %s221, 32768
        $region40: #{lstm_anno_forward.2} parent=31 // pred_fallthru
          _
        // Predicated region
        $region41: #{lstm_anno_forward.2} parent=31 // pred_check
          %p229 = pneg %p102
        $region42: #{lstm_anno_forward.2} parent=31 // pred_check_branch
          %231 = sbr.rel (%p229) target = $region44
        $region43: #{lstm_anno_forward.2} parent=31 // pred_region
          %232 = dma.done [#allocation5], 128
        $region44: #{lstm_anno_forward.2} parent=31 // pred_fallthru
          _
        %s233 = sand.u32 %s42, 1
        %s234 = scalar_lea.sflag [#allocation3], %s233
        %s235 = sand.u32 %s42, 1
        %s236 = smul.addr %s235, 64
        %s237 = scalar_lea.vmem [#allocation2], %s236
        %p238 = pneg %p55
        %p239 = pneg %p52
        %s240 = sand.u32 %s20, 1
        %s241 = scalar_lea.sflag [#allocation5], %s240
        %s242 = sand.u32 %s68, 1
        %s243 = smul.addr %s242, 2048
        %s244 = scalar_lea.vmem [#allocation4], %s243
        %p245 = pneg %p81
        %p246 = pneg %p78
        %p247 = pneg %p102
        %p248 = pneg %p99
        %p249 = pneg %p128
        %p250 = pneg %p125
        %s251 = smul.u32 2, %s24
        %p252 = scmp.lt.s32.totalorder %s251, 1
        %s253 = scalar_select %p252, %s251, 1
        %s254 = smul.addr %s253, 8
        %s255 = smul.addr %s254, 8
        %s256 = scalar_lea.vmem %s3, %s255
        %s257 = smul.u32 2, %s24
        %s258 = smul.u32 4, %s25
        %s259 = smul.u32 64, %s25
        %s260 = smul.u32 2, %s24
        %p261 = scmp.lt.s32.totalorder %s260, 1
        %s262 = scalar_select %p261, %s260, 1
        %s263 = smul.addr %s262, 8
        %s264 = smul.addr %s263, 8
        %s265 = scalar_lea.vmem %s3, %s264
        %s266 = smul.u32 2, %s24
        %p267 = scmp.eq.s32.totalorder %s25, 0
        // Predicated region
        $region45: #{lstm_anno_forward.2} parent=31 // pred_check
          %p268 = pneg %p267
        $region46: #{lstm_anno_forward.2} parent=31 // pred_check_branch
          %270 = sbr.rel (%p268) target = $region48
        $region47: #{lstm_anno_forward.2} parent=31 // pred_region
          %271 = vst [vmem:[%s265] sm:$0xff] 0.0
          %272 = vst [vmem:[%s265 + $0x8] sm:$0xff] 0.0
          %273 = vst [vmem:[%s265 + $0x10] sm:$0xff] 0.0
          %274 = vst [vmem:[%s265 + $0x18] sm:$0xff] 0.0
          %275 = vst [vmem:[%s265 + $0x20] sm:$0xff] 0.0
          %276 = vst [vmem:[%s265 + $0x28] sm:$0xff] 0.0
          %277 = vst [vmem:[%s265 + $0x30] sm:$0xff] 0.0
          %278 = vst [vmem:[%s265 + $0x38] sm:$0xff] 0.0
          %279 = vst [vmem:[%s265 + $0x40] sm:$0xff] 0.0
          %280 = vst [vmem:[%s265 + $0x48] sm:$0xff] 0.0
          %281 = vst [vmem:[%s265 + $0x50] sm:$0xff] 0.0
          %282 = vst [vmem:[%s265 + $0x58] sm:$0xff] 0.0
          %283 = vst [vmem:[%s265 + $0x60] sm:$0xff] 0.0
          %284 = vst [vmem:[%s265 + $0x68] sm:$0xff] 0.0
          %285 = vst [vmem:[%s265 + $0x70] sm:$0xff] 0.0
          %286 = vst [vmem:[%s265 + $0x78] sm:$0xff] 0.0
        $region48: #{lstm_anno_forward.2} parent=31 // pred_fallthru
          _
        %v287 = vld [vmem:[%s265] sm:$0xff]
        %v288 = vld [vmem:[%s265 + $0x8] sm:$0xff]
        %v289 = vld [vmem:[%s265 + $0x10] sm:$0xff]
        %v290 = vld [vmem:[%s265 + $0x18] sm:$0xff]
        %v291 = vld [vmem:[%s265 + $0x20] sm:$0xff]
        %v292 = vld [vmem:[%s265 + $0x28] sm:$0xff]
        %v293 = vld [vmem:[%s265 + $0x30] sm:$0xff]
        %v294 = vld [vmem:[%s265 + $0x38] sm:$0xff]
        %v295 = vld [vmem:[%s265 + $0x40] sm:$0xff]
        %v296 = vld [vmem:[%s265 + $0x48] sm:$0xff]
        %v297 = vld [vmem:[%s265 + $0x50] sm:$0xff]
        %v298 = vld [vmem:[%s265 + $0x58] sm:$0xff]
        %v299 = vld [vmem:[%s265 + $0x60] sm:$0xff]
        %v300 = vld [vmem:[%s265 + $0x68] sm:$0xff]
        %v301 = vld [vmem:[%s265 + $0x70] sm:$0xff]
        %v302 = vld [vmem:[%s265 + $0x78] sm:$0xff]
        %v303 = vld [vmem:[%s215] sm:$0xff]
        %v304 = vld [vmem:[%s215 + $0x8] sm:$0xff]
        %v305 = vld [vmem:[%s215 + $0x10] sm:$0xff]
        %v306 = vld [vmem:[%s215 + $0x18] sm:$0xff]
        %v307 = vld [vmem:[%s215 + $0x20] sm:$0xff]
        %v308 = vld [vmem:[%s215 + $0x28] sm:$0xff]
        %v309 = vld [vmem:[%s215 + $0x30] sm:$0xff]
        %v310 = vld [vmem:[%s215 + $0x38] sm:$0xff]
        %v311 = vpack.c.bf16 %v307, %v303
        %v312 = vpack.c.bf16 %v308, %v304
        %v313 = vpack.c.bf16 %v309, %v305
        %v314 = vpack.c.bf16 %v310, %v306
        %v315 = vld [vmem:[%s224] sm:$0xff]
        %v316 = vld [vmem:[%s224 + $0x8] sm:$0xff]
        %v317 = vld [vmem:[%s224 + $0x10] sm:$0xff]
        %v318 = vld [vmem:[%s224 + $0x18] sm:$0xff]
        %v319 = vld [vmem:[%s224 + $0x20] sm:$0xff]
        %v320 = vld [vmem:[%s224 + $0x28] sm:$0xff]
        %v321 = vld [vmem:[%s224 + $0x30] sm:$0xff]
        %v322 = vld [vmem:[%s224 + $0x38] sm:$0xff]
        %v323 = vld [vmem:[%s224 + $0x40] sm:$0xff]
        %v324 = vld [vmem:[%s224 + $0x48] sm:$0xff]
        %v325 = vld [vmem:[%s224 + $0x50] sm:$0xff]
        %v326 = vld [vmem:[%s224 + $0x58] sm:$0xff]
        %v327 = vld [vmem:[%s224 + $0x60] sm:$0xff]
        %v328 = vld [vmem:[%s224 + $0x68] sm:$0xff]
        %v329 = vld [vmem:[%s224 + $0x70] sm:$0xff]
        %v330 = vld [vmem:[%s224 + $0x78] sm:$0xff]
        %v331 = vld [vmem:[%s224 + $0x80] sm:$0xff]
        %v332 = vld [vmem:[%s224 + $0x88] sm:$0xff]
        %v333 = vld [vmem:[%s224 + $0x90] sm:$0xff]
        %v334 = vld [vmem:[%s224 + $0x98] sm:$0xff]
        %v335 = vld [vmem:[%s224 + $0xa0] sm:$0xff]
        %v336 = vld [vmem:[%s224 + $0xa8] sm:$0xff]
        %v337 = vld [vmem:[%s224 + $0xb0] sm:$0xff]
        %v338 = vld [vmem:[%s224 + $0xb8] sm:$0xff]
        %v339 = vld [vmem:[%s224 + $0xc0] sm:$0xff]
        %v340 = vld [vmem:[%s224 + $0xc8] sm:$0xff]
        %v341 = vld [vmem:[%s224 + $0xd0] sm:$0xff]
        %v342 = vld [vmem:[%s224 + $0xd8] sm:$0xff]
        %v343 = vld [vmem:[%s224 + $0xe0] sm:$0xff]
        %v344 = vld [vmem:[%s224 + $0xe8] sm:$0xff]
        %v345 = vld [vmem:[%s224 + $0xf0] sm:$0xff]
        %v346 = vld [vmem:[%s224 + $0xf8] sm:$0xff]
        %v347 = vld [vmem:[%s224 + $0x100] sm:$0xff]
        %v348 = vld [vmem:[%s224 + $0x108] sm:$0xff]
        %v349 = vld [vmem:[%s224 + $0x110] sm:$0xff]
        %v350 = vld [vmem:[%s224 + $0x118] sm:$0xff]
        %v351 = vld [vmem:[%s224 + $0x120] sm:$0xff]
        %v352 = vld [vmem:[%s224 + $0x128] sm:$0xff]
        %v353 = vld [vmem:[%s224 + $0x130] sm:$0xff]
        %v354 = vld [vmem:[%s224 + $0x138] sm:$0xff]
        %v355 = vld [vmem:[%s224 + $0x140] sm:$0xff]
        %v356 = vld [vmem:[%s224 + $0x148] sm:$0xff]
        %v357 = vld [vmem:[%s224 + $0x150] sm:$0xff]
        %v358 = vld [vmem:[%s224 + $0x158] sm:$0xff]
        %v359 = vld [vmem:[%s224 + $0x160] sm:$0xff]
        %v360 = vld [vmem:[%s224 + $0x168] sm:$0xff]
        %v361 = vld [vmem:[%s224 + $0x170] sm:$0xff]
        %v362 = vld [vmem:[%s224 + $0x178] sm:$0xff]
        %v363 = vld [vmem:[%s224 + $0x180] sm:$0xff]
        %v364 = vld [vmem:[%s224 + $0x188] sm:$0xff]
        %v365 = vld [vmem:[%s224 + $0x190] sm:$0xff]
        %v366 = vld [vmem:[%s224 + $0x198] sm:$0xff]
        %v367 = vld [vmem:[%s224 + $0x1a0] sm:$0xff]
        %v368 = vld [vmem:[%s224 + $0x1a8] sm:$0xff]
        %v369 = vld [vmem:[%s224 + $0x1b0] sm:$0xff]
        %v370 = vld [vmem:[%s224 + $0x1b8] sm:$0xff]
        %v371 = vld [vmem:[%s224 + $0x1c0] sm:$0xff]
        %v372 = vld [vmem:[%s224 + $0x1c8] sm:$0xff]
        %v373 = vld [vmem:[%s224 + $0x1d0] sm:$0xff]
        %v374 = vld [vmem:[%s224 + $0x1d8] sm:$0xff]
        %v375 = vld [vmem:[%s224 + $0x1e0] sm:$0xff]
        %v376 = vld [vmem:[%s224 + $0x1e8] sm:$0xff]
        %v377 = vld [vmem:[%s224 + $0x1f0] sm:$0xff]
        %v378 = vld [vmem:[%s224 + $0x1f8] sm:$0xff]
        %v379 = vld [vmem:[%s224 + $0x200] sm:$0xff]
        %v380 = vld [vmem:[%s224 + $0x208] sm:$0xff]
        %v381 = vld [vmem:[%s224 + $0x210] sm:$0xff]
        %v382 = vld [vmem:[%s224 + $0x218] sm:$0xff]
        %v383 = vld [vmem:[%s224 + $0x220] sm:$0xff]
        %v384 = vld [vmem:[%s224 + $0x228] sm:$0xff]
        %v385 = vld [vmem:[%s224 + $0x230] sm:$0xff]
        %v386 = vld [vmem:[%s224 + $0x238] sm:$0xff]
        %v387 = vld [vmem:[%s224 + $0x240] sm:$0xff]
        %v388 = vld [vmem:[%s224 + $0x248] sm:$0xff]
        %v389 = vld [vmem:[%s224 + $0x250] sm:$0xff]
        %v390 = vld [vmem:[%s224 + $0x258] sm:$0xff]
        %v391 = vld [vmem:[%s224 + $0x260] sm:$0xff]
        %v392 = vld [vmem:[%s224 + $0x268] sm:$0xff]
        %v393 = vld [vmem:[%s224 + $0x270] sm:$0xff]
        %v394 = vld [vmem:[%s224 + $0x278] sm:$0xff]
        %v395 = vld [vmem:[%s224 + $0x280] sm:$0xff]
        %v396 = vld [vmem:[%s224 + $0x288] sm:$0xff]
        %v397 = vld [vmem:[%s224 + $0x290] sm:$0xff]
        %v398 = vld [vmem:[%s224 + $0x298] sm:$0xff]
        %v399 = vld [vmem:[%s224 + $0x2a0] sm:$0xff]
        %v400 = vld [vmem:[%s224 + $0x2a8] sm:$0xff]
        %v401 = vld [vmem:[%s224 + $0x2b0] sm:$0xff]
        %v402 = vld [vmem:[%s224 + $0x2b8] sm:$0xff]
        %v403 = vld [vmem:[%s224 + $0x2c0] sm:$0xff]
        %v404 = vld [vmem:[%s224 + $0x2c8] sm:$0xff]
        %v405 = vld [vmem:[%s224 + $0x2d0] sm:$0xff]
        %v406 = vld [vmem:[%s224 + $0x2d8] sm:$0xff]
        %v407 = vld [vmem:[%s224 + $0x2e0] sm:$0xff]
        %v408 = vld [vmem:[%s224 + $0x2e8] sm:$0xff]
        %v409 = vld [vmem:[%s224 + $0x2f0] sm:$0xff]
        %v410 = vld [vmem:[%s224 + $0x2f8] sm:$0xff]
        %v411 = vld [vmem:[%s224 + $0x300] sm:$0xff]
        %v412 = vld [vmem:[%s224 + $0x308] sm:$0xff]
        %v413 = vld [vmem:[%s224 + $0x310] sm:$0xff]
        %v414 = vld [vmem:[%s224 + $0x318] sm:$0xff]
        %v415 = vld [vmem:[%s224 + $0x320] sm:$0xff]
        %v416 = vld [vmem:[%s224 + $0x328] sm:$0xff]
        %v417 = vld [vmem:[%s224 + $0x330] sm:$0xff]
        %v418 = vld [vmem:[%s224 + $0x338] sm:$0xff]
        %v419 = vld [vmem:[%s224 + $0x340] sm:$0xff]
        %v420 = vld [vmem:[%s224 + $0x348] sm:$0xff]
        %v421 = vld [vmem:[%s224 + $0x350] sm:$0xff]
        %v422 = vld [vmem:[%s224 + $0x358] sm:$0xff]
        %v423 = vld [vmem:[%s224 + $0x360] sm:$0xff]
        %v424 = vld [vmem:[%s224 + $0x368] sm:$0xff]
        %v425 = vld [vmem:[%s224 + $0x370] sm:$0xff]
        %v426 = vld [vmem:[%s224 + $0x378] sm:$0xff]
        %v427 = vld [vmem:[%s224 + $0x380] sm:$0xff]
        %v428 = vld [vmem:[%s224 + $0x388] sm:$0xff]
        %v429 = vld [vmem:[%s224 + $0x390] sm:$0xff]
        %v430 = vld [vmem:[%s224 + $0x398] sm:$0xff]
        %v431 = vld [vmem:[%s224 + $0x3a0] sm:$0xff]
        %v432 = vld [vmem:[%s224 + $0x3a8] sm:$0xff]
        %v433 = vld [vmem:[%s224 + $0x3b0] sm:$0xff]
        %v434 = vld [vmem:[%s224 + $0x3b8] sm:$0xff]
        %v435 = vld [vmem:[%s224 + $0x3c0] sm:$0xff]
        %v436 = vld [vmem:[%s224 + $0x3c8] sm:$0xff]
        %v437 = vld [vmem:[%s224 + $0x3d0] sm:$0xff]
        %v438 = vld [vmem:[%s224 + $0x3d8] sm:$0xff]
        %v439 = vld [vmem:[%s224 + $0x3e0] sm:$0xff]
        %v440 = vld [vmem:[%s224 + $0x3e8] sm:$0xff]
        %v441 = vld [vmem:[%s224 + $0x3f0] sm:$0xff]
        %v442 = vld [vmem:[%s224 + $0x3f8] sm:$0xff]
        %v443 = vld [vmem:[%s224 + $0x400] sm:$0xff]
        %v444 = vld [vmem:[%s224 + $0x408] sm:$0xff]
        %v445 = vld [vmem:[%s224 + $0x410] sm:$0xff]
        %v446 = vld [vmem:[%s224 + $0x418] sm:$0xff]
        %v447 = vld [vmem:[%s224 + $0x420] sm:$0xff]
        %v448 = vld [vmem:[%s224 + $0x428] sm:$0xff]
        %v449 = vld [vmem:[%s224 + $0x430] sm:$0xff]
        %v450 = vld [vmem:[%s224 + $0x438] sm:$0xff]
        %v451 = vld [vmem:[%s224 + $0x440] sm:$0xff]
        %v452 = vld [vmem:[%s224 + $0x448] sm:$0xff]
        %v453 = vld [vmem:[%s224 + $0x450] sm:$0xff]
        %v454 = vld [vmem:[%s224 + $0x458] sm:$0xff]
        %v455 = vld [vmem:[%s224 + $0x460] sm:$0xff]
        %v456 = vld [vmem:[%s224 + $0x468] sm:$0xff]
        %v457 = vld [vmem:[%s224 + $0x470] sm:$0xff]
        %v458 = vld [vmem:[%s224 + $0x478] sm:$0xff]
        %v459 = vld [vmem:[%s224 + $0x480] sm:$0xff]
        %v460 = vld [vmem:[%s224 + $0x488] sm:$0xff]
        %v461 = vld [vmem:[%s224 + $0x490] sm:$0xff]
        %v462 = vld [vmem:[%s224 + $0x498] sm:$0xff]
        %v463 = vld [vmem:[%s224 + $0x4a0] sm:$0xff]
        %v464 = vld [vmem:[%s224 + $0x4a8] sm:$0xff]
        %v465 = vld [vmem:[%s224 + $0x4b0] sm:$0xff]
        %v466 = vld [vmem:[%s224 + $0x4b8] sm:$0xff]
        %v467 = vld [vmem:[%s224 + $0x4c0] sm:$0xff]
        %v468 = vld [vmem:[%s224 + $0x4c8] sm:$0xff]
        %v469 = vld [vmem:[%s224 + $0x4d0] sm:$0xff]
        %v470 = vld [vmem:[%s224 + $0x4d8] sm:$0xff]
        %v471 = vld [vmem:[%s224 + $0x4e0] sm:$0xff]
        %v472 = vld [vmem:[%s224 + $0x4e8] sm:$0xff]
        %v473 = vld [vmem:[%s224 + $0x4f0] sm:$0xff]
        %v474 = vld [vmem:[%s224 + $0x4f8] sm:$0xff]
        %v475 = vld [vmem:[%s224 + $0x500] sm:$0xff]
        %v476 = vld [vmem:[%s224 + $0x508] sm:$0xff]
        %v477 = vld [vmem:[%s224 + $0x510] sm:$0xff]
        %v478 = vld [vmem:[%s224 + $0x518] sm:$0xff]
        %v479 = vld [vmem:[%s224 + $0x520] sm:$0xff]
        %v480 = vld [vmem:[%s224 + $0x528] sm:$0xff]
        %v481 = vld [vmem:[%s224 + $0x530] sm:$0xff]
        %v482 = vld [vmem:[%s224 + $0x538] sm:$0xff]
        %v483 = vld [vmem:[%s224 + $0x540] sm:$0xff]
        %v484 = vld [vmem:[%s224 + $0x548] sm:$0xff]
        %v485 = vld [vmem:[%s224 + $0x550] sm:$0xff]
        %v486 = vld [vmem:[%s224 + $0x558] sm:$0xff]
        %v487 = vld [vmem:[%s224 + $0x560] sm:$0xff]
        %v488 = vld [vmem:[%s224 + $0x568] sm:$0xff]
        %v489 = vld [vmem:[%s224 + $0x570] sm:$0xff]
        %v490 = vld [vmem:[%s224 + $0x578] sm:$0xff]
        %v491 = vld [vmem:[%s224 + $0x580] sm:$0xff]
        %v492 = vld [vmem:[%s224 + $0x588] sm:$0xff]
        %v493 = vld [vmem:[%s224 + $0x590] sm:$0xff]
        %v494 = vld [vmem:[%s224 + $0x598] sm:$0xff]
        %v495 = vld [vmem:[%s224 + $0x5a0] sm:$0xff]
        %v496 = vld [vmem:[%s224 + $0x5a8] sm:$0xff]
        %v497 = vld [vmem:[%s224 + $0x5b0] sm:$0xff]
        %v498 = vld [vmem:[%s224 + $0x5b8] sm:$0xff]
        %v499 = vld [vmem:[%s224 + $0x5c0] sm:$0xff]
        %v500 = vld [vmem:[%s224 + $0x5c8] sm:$0xff]
        %v501 = vld [vmem:[%s224 + $0x5d0] sm:$0xff]
        %v502 = vld [vmem:[%s224 + $0x5d8] sm:$0xff]
        %v503 = vld [vmem:[%s224 + $0x5e0] sm:$0xff]
        %v504 = vld [vmem:[%s224 + $0x5e8] sm:$0xff]
        %v505 = vld [vmem:[%s224 + $0x5f0] sm:$0xff]
        %v506 = vld [vmem:[%s224 + $0x5f8] sm:$0xff]
        %v507 = vld [vmem:[%s224 + $0x600] sm:$0xff]
        %v508 = vld [vmem:[%s224 + $0x608] sm:$0xff]
        %v509 = vld [vmem:[%s224 + $0x610] sm:$0xff]
        %v510 = vld [vmem:[%s224 + $0x618] sm:$0xff]
        %v511 = vld [vmem:[%s224 + $0x620] sm:$0xff]
        %v512 = vld [vmem:[%s224 + $0x628] sm:$0xff]
        %v513 = vld [vmem:[%s224 + $0x630] sm:$0xff]
        %v514 = vld [vmem:[%s224 + $0x638] sm:$0xff]
        %v515 = vld [vmem:[%s224 + $0x640] sm:$0xff]
        %v516 = vld [vmem:[%s224 + $0x648] sm:$0xff]
        %v517 = vld [vmem:[%s224 + $0x650] sm:$0xff]
        %v518 = vld [vmem:[%s224 + $0x658] sm:$0xff]
        %v519 = vld [vmem:[%s224 + $0x660] sm:$0xff]
        %v520 = vld [vmem:[%s224 + $0x668] sm:$0xff]
        %v521 = vld [vmem:[%s224 + $0x670] sm:$0xff]
        %v522 = vld [vmem:[%s224 + $0x678] sm:$0xff]
        %v523 = vld [vmem:[%s224 + $0x680] sm:$0xff]
        %v524 = vld [vmem:[%s224 + $0x688] sm:$0xff]
        %v525 = vld [vmem:[%s224 + $0x690] sm:$0xff]
        %v526 = vld [vmem:[%s224 + $0x698] sm:$0xff]
        %v527 = vld [vmem:[%s224 + $0x6a0] sm:$0xff]
        %v528 = vld [vmem:[%s224 + $0x6a8] sm:$0xff]
        %v529 = vld [vmem:[%s224 + $0x6b0] sm:$0xff]
        %v530 = vld [vmem:[%s224 + $0x6b8] sm:$0xff]
        %v531 = vld [vmem:[%s224 + $0x6c0] sm:$0xff]
        %v532 = vld [vmem:[%s224 + $0x6c8] sm:$0xff]
        %v533 = vld [vmem:[%s224 + $0x6d0] sm:$0xff]
        %v534 = vld [vmem:[%s224 + $0x6d8] sm:$0xff]
        %v535 = vld [vmem:[%s224 + $0x6e0] sm:$0xff]
        %v536 = vld [vmem:[%s224 + $0x6e8] sm:$0xff]
        %v537 = vld [vmem:[%s224 + $0x6f0] sm:$0xff]
        %v538 = vld [vmem:[%s224 + $0x6f8] sm:$0xff]
        %v539 = vld [vmem:[%s224 + $0x700] sm:$0xff]
        %v540 = vld [vmem:[%s224 + $0x708] sm:$0xff]
        %v541 = vld [vmem:[%s224 + $0x710] sm:$0xff]
        %v542 = vld [vmem:[%s224 + $0x718] sm:$0xff]
        %v543 = vld [vmem:[%s224 + $0x720] sm:$0xff]
        %v544 = vld [vmem:[%s224 + $0x728] sm:$0xff]
        %v545 = vld [vmem:[%s224 + $0x730] sm:$0xff]
        %v546 = vld [vmem:[%s224 + $0x738] sm:$0xff]
        %v547 = vld [vmem:[%s224 + $0x740] sm:$0xff]
        %v548 = vld [vmem:[%s224 + $0x748] sm:$0xff]
        %v549 = vld [vmem:[%s224 + $0x750] sm:$0xff]
        %v550 = vld [vmem:[%s224 + $0x758] sm:$0xff]
        %v551 = vld [vmem:[%s224 + $0x760] sm:$0xff]
        %v552 = vld [vmem:[%s224 + $0x768] sm:$0xff]
        %v553 = vld [vmem:[%s224 + $0x770] sm:$0xff]
        %v554 = vld [vmem:[%s224 + $0x778] sm:$0xff]
        %v555 = vld [vmem:[%s224 + $0x780] sm:$0xff]
        %v556 = vld [vmem:[%s224 + $0x788] sm:$0xff]
        %v557 = vld [vmem:[%s224 + $0x790] sm:$0xff]
        %v558 = vld [vmem:[%s224 + $0x798] sm:$0xff]
        %v559 = vld [vmem:[%s224 + $0x7a0] sm:$0xff]
        %v560 = vld [vmem:[%s224 + $0x7a8] sm:$0xff]
        %v561 = vld [vmem:[%s224 + $0x7b0] sm:$0xff]
        %v562 = vld [vmem:[%s224 + $0x7b8] sm:$0xff]
        %v563 = vld [vmem:[%s224 + $0x7c0] sm:$0xff]
        %v564 = vld [vmem:[%s224 + $0x7c8] sm:$0xff]
        %v565 = vld [vmem:[%s224 + $0x7d0] sm:$0xff]
        %v566 = vld [vmem:[%s224 + $0x7d8] sm:$0xff]
        %v567 = vld [vmem:[%s224 + $0x7e0] sm:$0xff]
        %v568 = vld [vmem:[%s224 + $0x7e8] sm:$0xff]
        %v569 = vld [vmem:[%s224 + $0x7f0] sm:$0xff]
        %v570 = vld [vmem:[%s224 + $0x7f8] sm:$0xff]
        %v827 = vunpack.c.l.b16 %v315
        %v828 = vunpack.c.h.b16 %v315
        %v829 = vunpack.c.l.b16 %v316
        %v830 = vunpack.c.h.b16 %v316
        %v831 = vunpack.c.l.b16 %v317
        %v832 = vunpack.c.h.b16 %v317
        %v833 = vunpack.c.l.b16 %v318
        %v834 = vunpack.c.h.b16 %v318
        %v835 = vunpack.c.l.b16 %v319
        %v836 = vunpack.c.h.b16 %v319
        %v837 = vunpack.c.l.b16 %v320
        %v838 = vunpack.c.h.b16 %v320
        %v839 = vunpack.c.l.b16 %v321
        %v840 = vunpack.c.h.b16 %v321
        %v841 = vunpack.c.l.b16 %v322
        %v842 = vunpack.c.h.b16 %v322
        %v843 = vunpack.c.l.b16 %v323
        %v844 = vunpack.c.h.b16 %v323
        %v845 = vunpack.c.l.b16 %v324
        %v846 = vunpack.c.h.b16 %v324
        %v847 = vunpack.c.l.b16 %v325
        %v848 = vunpack.c.h.b16 %v325
        %v849 = vunpack.c.l.b16 %v326
        %v850 = vunpack.c.h.b16 %v326
        %v851 = vunpack.c.l.b16 %v327
        %v852 = vunpack.c.h.b16 %v327
        %v853 = vunpack.c.l.b16 %v328
        %v854 = vunpack.c.h.b16 %v328
        %v855 = vunpack.c.l.b16 %v329
        %v856 = vunpack.c.h.b16 %v329
        %v857 = vunpack.c.l.b16 %v330
        %v858 = vunpack.c.h.b16 %v330
        %v859 = vunpack.c.l.b16 %v331
        %v860 = vunpack.c.h.b16 %v331
        %v861 = vunpack.c.l.b16 %v332
        %v862 = vunpack.c.h.b16 %v332
        %v863 = vunpack.c.l.b16 %v333
        %v864 = vunpack.c.h.b16 %v333
        %v865 = vunpack.c.l.b16 %v334
        %v866 = vunpack.c.h.b16 %v334
        %v867 = vunpack.c.l.b16 %v335
        %v868 = vunpack.c.h.b16 %v335
        %v869 = vunpack.c.l.b16 %v336
        %v870 = vunpack.c.h.b16 %v336
        %v871 = vunpack.c.l.b16 %v337
        %v872 = vunpack.c.h.b16 %v337
        %v873 = vunpack.c.l.b16 %v338
        %v874 = vunpack.c.h.b16 %v338
        %v875 = vunpack.c.l.b16 %v339
        %v876 = vunpack.c.h.b16 %v339
        %v877 = vunpack.c.l.b16 %v340
        %v878 = vunpack.c.h.b16 %v340
        %v879 = vunpack.c.l.b16 %v341
        %v880 = vunpack.c.h.b16 %v341
        %v881 = vunpack.c.l.b16 %v342
        %v882 = vunpack.c.h.b16 %v342
        %v883 = vunpack.c.l.b16 %v343
        %v884 = vunpack.c.h.b16 %v343
        %v885 = vunpack.c.l.b16 %v344
        %v886 = vunpack.c.h.b16 %v344
        %v887 = vunpack.c.l.b16 %v345
        %v888 = vunpack.c.h.b16 %v345
        %v889 = vunpack.c.l.b16 %v346
        %v890 = vunpack.c.h.b16 %v346
        %v891 = vunpack.c.l.b16 %v347
        %v892 = vunpack.c.h.b16 %v347
        %v893 = vunpack.c.l.b16 %v348
        %v894 = vunpack.c.h.b16 %v348
        %v895 = vunpack.c.l.b16 %v349
        %v896 = vunpack.c.h.b16 %v349
        %v897 = vunpack.c.l.b16 %v350
        %v898 = vunpack.c.h.b16 %v350
        %v899 = vunpack.c.l.b16 %v351
        %v900 = vunpack.c.h.b16 %v351
        %v901 = vunpack.c.l.b16 %v352
        %v902 = vunpack.c.h.b16 %v352
        %v903 = vunpack.c.l.b16 %v353
        %v904 = vunpack.c.h.b16 %v353
        %v905 = vunpack.c.l.b16 %v354
        %v906 = vunpack.c.h.b16 %v354
        %v907 = vunpack.c.l.b16 %v355
        %v908 = vunpack.c.h.b16 %v355
        %v909 = vunpack.c.l.b16 %v356
        %v910 = vunpack.c.h.b16 %v356
        %v911 = vunpack.c.l.b16 %v357
        %v912 = vunpack.c.h.b16 %v357
        %v913 = vunpack.c.l.b16 %v358
        %v914 = vunpack.c.h.b16 %v358
        %v915 = vunpack.c.l.b16 %v359
        %v916 = vunpack.c.h.b16 %v359
        %v917 = vunpack.c.l.b16 %v360
        %v918 = vunpack.c.h.b16 %v360
        %v919 = vunpack.c.l.b16 %v361
        %v920 = vunpack.c.h.b16 %v361
        %v921 = vunpack.c.l.b16 %v362
        %v922 = vunpack.c.h.b16 %v362
        %v923 = vunpack.c.l.b16 %v363
        %v924 = vunpack.c.h.b16 %v363
        %v925 = vunpack.c.l.b16 %v364
        %v926 = vunpack.c.h.b16 %v364
        %v927 = vunpack.c.l.b16 %v365
        %v928 = vunpack.c.h.b16 %v365
        %v929 = vunpack.c.l.b16 %v366
        %v930 = vunpack.c.h.b16 %v366
        %v931 = vunpack.c.l.b16 %v367
        %v932 = vunpack.c.h.b16 %v367
        %v933 = vunpack.c.l.b16 %v368
        %v934 = vunpack.c.h.b16 %v368
        %v935 = vunpack.c.l.b16 %v369
        %v936 = vunpack.c.h.b16 %v369
        %v937 = vunpack.c.l.b16 %v370
        %v938 = vunpack.c.h.b16 %v370
        %v939 = vunpack.c.l.b16 %v371
        %v940 = vunpack.c.h.b16 %v371
        %v941 = vunpack.c.l.b16 %v372
        %v942 = vunpack.c.h.b16 %v372
        %v943 = vunpack.c.l.b16 %v373
        %v944 = vunpack.c.h.b16 %v373
        %v945 = vunpack.c.l.b16 %v374
        %v946 = vunpack.c.h.b16 %v374
        %v947 = vunpack.c.l.b16 %v375
        %v948 = vunpack.c.h.b16 %v375
        %v949 = vunpack.c.l.b16 %v376
        %v950 = vunpack.c.h.b16 %v376
        %v951 = vunpack.c.l.b16 %v377
        %v952 = vunpack.c.h.b16 %v377
        %v953 = vunpack.c.l.b16 %v378
        %v954 = vunpack.c.h.b16 %v378
        %v955 = vunpack.c.l.b16 %v379
        %v956 = vunpack.c.h.b16 %v379
        %v957 = vunpack.c.l.b16 %v380
        %v958 = vunpack.c.h.b16 %v380
        %v959 = vunpack.c.l.b16 %v381
        %v960 = vunpack.c.h.b16 %v381
        %v961 = vunpack.c.l.b16 %v382
        %v962 = vunpack.c.h.b16 %v382
        %v963 = vunpack.c.l.b16 %v383
        %v964 = vunpack.c.h.b16 %v383
        %v965 = vunpack.c.l.b16 %v384
        %v966 = vunpack.c.h.b16 %v384
        %v967 = vunpack.c.l.b16 %v385
        %v968 = vunpack.c.h.b16 %v385
        %v969 = vunpack.c.l.b16 %v386
        %v970 = vunpack.c.h.b16 %v386
        %v971 = vunpack.c.l.b16 %v387
        %v972 = vunpack.c.h.b16 %v387
        %v973 = vunpack.c.l.b16 %v388
        %v974 = vunpack.c.h.b16 %v388
        %v975 = vunpack.c.l.b16 %v389
        %v976 = vunpack.c.h.b16 %v389
        %v977 = vunpack.c.l.b16 %v390
        %v978 = vunpack.c.h.b16 %v390
        %v979 = vunpack.c.l.b16 %v391
        %v980 = vunpack.c.h.b16 %v391
        %v981 = vunpack.c.l.b16 %v392
        %v982 = vunpack.c.h.b16 %v392
        %v983 = vunpack.c.l.b16 %v393
        %v984 = vunpack.c.h.b16 %v393
        %v985 = vunpack.c.l.b16 %v394
        %v986 = vunpack.c.h.b16 %v394
        %v987 = vunpack.c.l.b16 %v395
        %v988 = vunpack.c.h.b16 %v395
        %v989 = vunpack.c.l.b16 %v396
        %v990 = vunpack.c.h.b16 %v396
        %v991 = vunpack.c.l.b16 %v397
        %v992 = vunpack.c.h.b16 %v397
        %v993 = vunpack.c.l.b16 %v398
        %v994 = vunpack.c.h.b16 %v398
        %v995 = vunpack.c.l.b16 %v399
        %v996 = vunpack.c.h.b16 %v399
        %v997 = vunpack.c.l.b16 %v400
        %v998 = vunpack.c.h.b16 %v400
        %v999 = vunpack.c.l.b16 %v401
        %v1000 = vunpack.c.h.b16 %v401
        %v1001 = vunpack.c.l.b16 %v402
        %v1002 = vunpack.c.h.b16 %v402
        %v1003 = vunpack.c.l.b16 %v403
        %v1004 = vunpack.c.h.b16 %v403
        %v1005 = vunpack.c.l.b16 %v404
        %v1006 = vunpack.c.h.b16 %v404
        %v1007 = vunpack.c.l.b16 %v405
        %v1008 = vunpack.c.h.b16 %v405
        %v1009 = vunpack.c.l.b16 %v406
        %v1010 = vunpack.c.h.b16 %v406
        %v1011 = vunpack.c.l.b16 %v407
        %v1012 = vunpack.c.h.b16 %v407
        %v1013 = vunpack.c.l.b16 %v408
        %v1014 = vunpack.c.h.b16 %v408
        %v1015 = vunpack.c.l.b16 %v409
        %v1016 = vunpack.c.h.b16 %v409
        %v1017 = vunpack.c.l.b16 %v410
        %v1018 = vunpack.c.h.b16 %v410
        %v1019 = vunpack.c.l.b16 %v411
        %v1020 = vunpack.c.h.b16 %v411
        %v1021 = vunpack.c.l.b16 %v412
        %v1022 = vunpack.c.h.b16 %v412
        %v1023 = vunpack.c.l.b16 %v413
        %v1024 = vunpack.c.h.b16 %v413
        %v1025 = vunpack.c.l.b16 %v414
        %v1026 = vunpack.c.h.b16 %v414
        %v1027 = vunpack.c.l.b16 %v415
        %v1028 = vunpack.c.h.b16 %v415
        %v1029 = vunpack.c.l.b16 %v416
        %v1030 = vunpack.c.h.b16 %v416
        %v1031 = vunpack.c.l.b16 %v417
        %v1032 = vunpack.c.h.b16 %v417
        %v1033 = vunpack.c.l.b16 %v418
        %v1034 = vunpack.c.h.b16 %v418
        %v1035 = vunpack.c.l.b16 %v419
        %v1036 = vunpack.c.h.b16 %v419
        %v1037 = vunpack.c.l.b16 %v420
        %v1038 = vunpack.c.h.b16 %v420
        %v1039 = vunpack.c.l.b16 %v421
        %v1040 = vunpack.c.h.b16 %v421
        %v1041 = vunpack.c.l.b16 %v422
        %v1042 = vunpack.c.h.b16 %v422
        %v1043 = vunpack.c.l.b16 %v423
        %v1044 = vunpack.c.h.b16 %v423
        %v1045 = vunpack.c.l.b16 %v424
        %v1046 = vunpack.c.h.b16 %v424
        %v1047 = vunpack.c.l.b16 %v425
        %v1048 = vunpack.c.h.b16 %v425
        %v1049 = vunpack.c.l.b16 %v426
        %v1050 = vunpack.c.h.b16 %v426
        %v1051 = vunpack.c.l.b16 %v427
        %v1052 = vunpack.c.h.b16 %v427
        %v1053 = vunpack.c.l.b16 %v428
        %v1054 = vunpack.c.h.b16 %v428
        %v1055 = vunpack.c.l.b16 %v429
        %v1056 = vunpack.c.h.b16 %v429
        %v1057 = vunpack.c.l.b16 %v430
        %v1058 = vunpack.c.h.b16 %v430
        %v1059 = vunpack.c.l.b16 %v431
        %v1060 = vunpack.c.h.b16 %v431
        %v1061 = vunpack.c.l.b16 %v432
        %v1062 = vunpack.c.h.b16 %v432
        %v1063 = vunpack.c.l.b16 %v433
        %v1064 = vunpack.c.h.b16 %v433
        %v1065 = vunpack.c.l.b16 %v434
        %v1066 = vunpack.c.h.b16 %v434
        %v1067 = vunpack.c.l.b16 %v435
        %v1068 = vunpack.c.h.b16 %v435
        %v1069 = vunpack.c.l.b16 %v436
        %v1070 = vunpack.c.h.b16 %v436
        %v1071 = vunpack.c.l.b16 %v437
        %v1072 = vunpack.c.h.b16 %v437
        %v1073 = vunpack.c.l.b16 %v438
        %v1074 = vunpack.c.h.b16 %v438
        %v1075 = vunpack.c.l.b16 %v439
        %v1076 = vunpack.c.h.b16 %v439
        %v1077 = vunpack.c.l.b16 %v440
        %v1078 = vunpack.c.h.b16 %v440
        %v1079 = vunpack.c.l.b16 %v441
        %v1080 = vunpack.c.h.b16 %v441
        %v1081 = vunpack.c.l.b16 %v442
        %v1082 = vunpack.c.h.b16 %v442
        %v1083 = vunpack.c.l.b16 %v443
        %v1084 = vunpack.c.h.b16 %v443
        %v1085 = vunpack.c.l.b16 %v444
        %v1086 = vunpack.c.h.b16 %v444
        %v1087 = vunpack.c.l.b16 %v445
        %v1088 = vunpack.c.h.b16 %v445
        %v1089 = vunpack.c.l.b16 %v446
        %v1090 = vunpack.c.h.b16 %v446
        %v1091 = vunpack.c.l.b16 %v447
        %v1092 = vunpack.c.h.b16 %v447
        %v1093 = vunpack.c.l.b16 %v448
        %v1094 = vunpack.c.h.b16 %v448
        %v1095 = vunpack.c.l.b16 %v449
        %v1096 = vunpack.c.h.b16 %v449
        %v1097 = vunpack.c.l.b16 %v450
        %v1098 = vunpack.c.h.b16 %v450
        %v1099 = vunpack.c.l.b16 %v451
        %v1100 = vunpack.c.h.b16 %v451
        %v1101 = vunpack.c.l.b16 %v452
        %v1102 = vunpack.c.h.b16 %v452
        %v1103 = vunpack.c.l.b16 %v453
        %v1104 = vunpack.c.h.b16 %v453
        %v1105 = vunpack.c.l.b16 %v454
        %v1106 = vunpack.c.h.b16 %v454
        %v1107 = vunpack.c.l.b16 %v455
        %v1108 = vunpack.c.h.b16 %v455
        %v1109 = vunpack.c.l.b16 %v456
        %v1110 = vunpack.c.h.b16 %v456
        %v1111 = vunpack.c.l.b16 %v457
        %v1112 = vunpack.c.h.b16 %v457
        %v1113 = vunpack.c.l.b16 %v458
        %v1114 = vunpack.c.h.b16 %v458
        %v1115 = vunpack.c.l.b16 %v459
        %v1116 = vunpack.c.h.b16 %v459
        %v1117 = vunpack.c.l.b16 %v460
        %v1118 = vunpack.c.h.b16 %v460
        %v1119 = vunpack.c.l.b16 %v461
        %v1120 = vunpack.c.h.b16 %v461
        %v1121 = vunpack.c.l.b16 %v462
        %v1122 = vunpack.c.h.b16 %v462
        %v1123 = vunpack.c.l.b16 %v463
        %v1124 = vunpack.c.h.b16 %v463
        %v1125 = vunpack.c.l.b16 %v464
        %v1126 = vunpack.c.h.b16 %v464
        %v1127 = vunpack.c.l.b16 %v465
        %v1128 = vunpack.c.h.b16 %v465
        %v1129 = vunpack.c.l.b16 %v466
        %v1130 = vunpack.c.h.b16 %v466
        %v1131 = vunpack.c.l.b16 %v467
        %v1132 = vunpack.c.h.b16 %v467
        %v1133 = vunpack.c.l.b16 %v468
        %v1134 = vunpack.c.h.b16 %v468
        %v1135 = vunpack.c.l.b16 %v469
        %v1136 = vunpack.c.h.b16 %v469
        %v1137 = vunpack.c.l.b16 %v470
        %v1138 = vunpack.c.h.b16 %v470
        %v1139 = vunpack.c.l.b16 %v471
        %v1140 = vunpack.c.h.b16 %v471
        %v1141 = vunpack.c.l.b16 %v472
        %v1142 = vunpack.c.h.b16 %v472
        %v1143 = vunpack.c.l.b16 %v473
        %v1144 = vunpack.c.h.b16 %v473
        %v1145 = vunpack.c.l.b16 %v474
        %v1146 = vunpack.c.h.b16 %v474
        %v1147 = vunpack.c.l.b16 %v475
        %v1148 = vunpack.c.h.b16 %v475
        %v1149 = vunpack.c.l.b16 %v476
        %v1150 = vunpack.c.h.b16 %v476
        %v1151 = vunpack.c.l.b16 %v477
        %v1152 = vunpack.c.h.b16 %v477
        %v1153 = vunpack.c.l.b16 %v478
        %v1154 = vunpack.c.h.b16 %v478
        %v1155 = vunpack.c.l.b16 %v479
        %v1156 = vunpack.c.h.b16 %v479
        %v1157 = vunpack.c.l.b16 %v480
        %v1158 = vunpack.c.h.b16 %v480
        %v1159 = vunpack.c.l.b16 %v481
        %v1160 = vunpack.c.h.b16 %v481
        %v1161 = vunpack.c.l.b16 %v482
        %v1162 = vunpack.c.h.b16 %v482
        %v1163 = vunpack.c.l.b16 %v483
        %v1164 = vunpack.c.h.b16 %v483
        %v1165 = vunpack.c.l.b16 %v484
        %v1166 = vunpack.c.h.b16 %v484
        %v1167 = vunpack.c.l.b16 %v485
        %v1168 = vunpack.c.h.b16 %v485
        %v1169 = vunpack.c.l.b16 %v486
        %v1170 = vunpack.c.h.b16 %v486
        %v1171 = vunpack.c.l.b16 %v487
        %v1172 = vunpack.c.h.b16 %v487
        %v1173 = vunpack.c.l.b16 %v488
        %v1174 = vunpack.c.h.b16 %v488
        %v1175 = vunpack.c.l.b16 %v489
        %v1176 = vunpack.c.h.b16 %v489
        %v1177 = vunpack.c.l.b16 %v490
        %v1178 = vunpack.c.h.b16 %v490
        %v1179 = vunpack.c.l.b16 %v491
        %v1180 = vunpack.c.h.b16 %v491
        %v1181 = vunpack.c.l.b16 %v492
        %v1182 = vunpack.c.h.b16 %v492
        %v1183 = vunpack.c.l.b16 %v493
        %v1184 = vunpack.c.h.b16 %v493
        %v1185 = vunpack.c.l.b16 %v494
        %v1186 = vunpack.c.h.b16 %v494
        %v1187 = vunpack.c.l.b16 %v495
        %v1188 = vunpack.c.h.b16 %v495
        %v1189 = vunpack.c.l.b16 %v496
        %v1190 = vunpack.c.h.b16 %v496
        %v1191 = vunpack.c.l.b16 %v497
        %v1192 = vunpack.c.h.b16 %v497
        %v1193 = vunpack.c.l.b16 %v498
        %v1194 = vunpack.c.h.b16 %v498
        %v1195 = vunpack.c.l.b16 %v499
        %v1196 = vunpack.c.h.b16 %v499
        %v1197 = vunpack.c.l.b16 %v500
        %v1198 = vunpack.c.h.b16 %v500
        %v1199 = vunpack.c.l.b16 %v501
        %v1200 = vunpack.c.h.b16 %v501
        %v1201 = vunpack.c.l.b16 %v502
        %v1202 = vunpack.c.h.b16 %v502
        %v1203 = vunpack.c.l.b16 %v503
        %v1204 = vunpack.c.h.b16 %v503
        %v1205 = vunpack.c.l.b16 %v504
        %v1206 = vunpack.c.h.b16 %v504
        %v1207 = vunpack.c.l.b16 %v505
        %v1208 = vunpack.c.h.b16 %v505
        %v1209 = vunpack.c.l.b16 %v506
        %v1210 = vunpack.c.h.b16 %v506
        %v1211 = vunpack.c.l.b16 %v507
        %v1212 = vunpack.c.h.b16 %v507
        %v1213 = vunpack.c.l.b16 %v508
        %v1214 = vunpack.c.h.b16 %v508
        %v1215 = vunpack.c.l.b16 %v509
        %v1216 = vunpack.c.h.b16 %v509
        %v1217 = vunpack.c.l.b16 %v510
        %v1218 = vunpack.c.h.b16 %v510
        %v1219 = vunpack.c.l.b16 %v511
        %v1220 = vunpack.c.h.b16 %v511
        %v1221 = vunpack.c.l.b16 %v512
        %v1222 = vunpack.c.h.b16 %v512
        %v1223 = vunpack.c.l.b16 %v513
        %v1224 = vunpack.c.h.b16 %v513
        %v1225 = vunpack.c.l.b16 %v514
        %v1226 = vunpack.c.h.b16 %v514
        %v1227 = vunpack.c.l.b16 %v515
        %v1228 = vunpack.c.h.b16 %v515
        %v1229 = vunpack.c.l.b16 %v516
        %v1230 = vunpack.c.h.b16 %v516
        %v1231 = vunpack.c.l.b16 %v517
        %v1232 = vunpack.c.h.b16 %v517
        %v1233 = vunpack.c.l.b16 %v518
        %v1234 = vunpack.c.h.b16 %v518
        %v1235 = vunpack.c.l.b16 %v519
        %v1236 = vunpack.c.h.b16 %v519
        %v1237 = vunpack.c.l.b16 %v520
        %v1238 = vunpack.c.h.b16 %v520
        %v1239 = vunpack.c.l.b16 %v521
        %v1240 = vunpack.c.h.b16 %v521
        %v1241 = vunpack.c.l.b16 %v522
        %v1242 = vunpack.c.h.b16 %v522
        %v1243 = vunpack.c.l.b16 %v523
        %v1244 = vunpack.c.h.b16 %v523
        %v1245 = vunpack.c.l.b16 %v524
        %v1246 = vunpack.c.h.b16 %v524
        %v1247 = vunpack.c.l.b16 %v525
        %v1248 = vunpack.c.h.b16 %v525
        %v1249 = vunpack.c.l.b16 %v526
        %v1250 = vunpack.c.h.b16 %v526
        %v1251 = vunpack.c.l.b16 %v527
        %v1252 = vunpack.c.h.b16 %v527
        %v1253 = vunpack.c.l.b16 %v528
        %v1254 = vunpack.c.h.b16 %v528
        %v1255 = vunpack.c.l.b16 %v529
        %v1256 = vunpack.c.h.b16 %v529
        %v1257 = vunpack.c.l.b16 %v530
        %v1258 = vunpack.c.h.b16 %v530
        %v1259 = vunpack.c.l.b16 %v531
        %v1260 = vunpack.c.h.b16 %v531
        %v1261 = vunpack.c.l.b16 %v532
        %v1262 = vunpack.c.h.b16 %v532
        %v1263 = vunpack.c.l.b16 %v533
        %v1264 = vunpack.c.h.b16 %v533
        %v1265 = vunpack.c.l.b16 %v534
        %v1266 = vunpack.c.h.b16 %v534
        %v1267 = vunpack.c.l.b16 %v535
        %v1268 = vunpack.c.h.b16 %v535
        %v1269 = vunpack.c.l.b16 %v536
        %v1270 = vunpack.c.h.b16 %v536
        %v1271 = vunpack.c.l.b16 %v537
        %v1272 = vunpack.c.h.b16 %v537
        %v1273 = vunpack.c.l.b16 %v538
        %v1274 = vunpack.c.h.b16 %v538
        %v1275 = vunpack.c.l.b16 %v539
        %v1276 = vunpack.c.h.b16 %v539
        %v1277 = vunpack.c.l.b16 %v540
        %v1278 = vunpack.c.h.b16 %v540
        %v1279 = vunpack.c.l.b16 %v541
        %v1280 = vunpack.c.h.b16 %v541
        %v1281 = vunpack.c.l.b16 %v542
        %v1282 = vunpack.c.h.b16 %v542
        %v1283 = vunpack.c.l.b16 %v543
        %v1284 = vunpack.c.h.b16 %v543
        %v1285 = vunpack.c.l.b16 %v544
        %v1286 = vunpack.c.h.b16 %v544
        %v1287 = vunpack.c.l.b16 %v545
        %v1288 = vunpack.c.h.b16 %v545
        %v1289 = vunpack.c.l.b16 %v546
        %v1290 = vunpack.c.h.b16 %v546
        %v1291 = vunpack.c.l.b16 %v547
        %v1292 = vunpack.c.h.b16 %v547
        %v1293 = vunpack.c.l.b16 %v548
        %v1294 = vunpack.c.h.b16 %v548
        %v1295 = vunpack.c.l.b16 %v549
        %v1296 = vunpack.c.h.b16 %v549
        %v1297 = vunpack.c.l.b16 %v550
        %v1298 = vunpack.c.h.b16 %v550
        %v1299 = vunpack.c.l.b16 %v551
        %v1300 = vunpack.c.h.b16 %v551
        %v1301 = vunpack.c.l.b16 %v552
        %v1302 = vunpack.c.h.b16 %v552
        %v1303 = vunpack.c.l.b16 %v553
        %v1304 = vunpack.c.h.b16 %v553
        %v1305 = vunpack.c.l.b16 %v554
        %v1306 = vunpack.c.h.b16 %v554
        %v1307 = vunpack.c.l.b16 %v555
        %v1308 = vunpack.c.h.b16 %v555
        %v1309 = vunpack.c.l.b16 %v556
        %v1310 = vunpack.c.h.b16 %v556
        %v1311 = vunpack.c.l.b16 %v557
        %v1312 = vunpack.c.h.b16 %v557
        %v1313 = vunpack.c.l.b16 %v558
        %v1314 = vunpack.c.h.b16 %v558
        %v1315 = vunpack.c.l.b16 %v559
        %v1316 = vunpack.c.h.b16 %v559
        %v1317 = vunpack.c.l.b16 %v560
        %v1318 = vunpack.c.h.b16 %v560
        %v1319 = vunpack.c.l.b16 %v561
        %v1320 = vunpack.c.h.b16 %v561
        %v1321 = vunpack.c.l.b16 %v562
        %v1322 = vunpack.c.h.b16 %v562
        %v1323 = vunpack.c.l.b16 %v563
        %v1324 = vunpack.c.h.b16 %v563
        %v1325 = vunpack.c.l.b16 %v564
        %v1326 = vunpack.c.h.b16 %v564
        %v1327 = vunpack.c.l.b16 %v565
        %v1328 = vunpack.c.h.b16 %v565
        %v1329 = vunpack.c.l.b16 %v566
        %v1330 = vunpack.c.h.b16 %v566
        %v1331 = vunpack.c.l.b16 %v567
        %v1332 = vunpack.c.h.b16 %v567
        %v1333 = vunpack.c.l.b16 %v568
        %v1334 = vunpack.c.h.b16 %v568
        %v1335 = vunpack.c.l.b16 %v569
        %v1336 = vunpack.c.h.b16 %v569
        %v1337 = vunpack.c.l.b16 %v570
        %v1338 = vunpack.c.h.b16 %v570
        %v1339 = vpack.c.b16 %v835, %v827
        %v1340 = vpack.c.b16 %v836, %v828
        %v1341 = vpack.c.b16 %v837, %v829
        %v1342 = vpack.c.b16 %v838, %v830
        %v1343 = vpack.c.b16 %v839, %v831
        %v1344 = vpack.c.b16 %v840, %v832
        %v1345 = vpack.c.b16 %v841, %v833
        %v1346 = vpack.c.b16 %v842, %v834
        %v1347 = vpack.c.b16 %v851, %v843
        %v1348 = vpack.c.b16 %v852, %v844
        %v1349 = vpack.c.b16 %v853, %v845
        %v1350 = vpack.c.b16 %v854, %v846
        %v1351 = vpack.c.b16 %v855, %v847
        %v1352 = vpack.c.b16 %v856, %v848
        %v1353 = vpack.c.b16 %v857, %v849
        %v1354 = vpack.c.b16 %v858, %v850
        %v1355 = vpack.c.b16 %v867, %v859
        %v1356 = vpack.c.b16 %v868, %v860
        %v1357 = vpack.c.b16 %v869, %v861
        %v1358 = vpack.c.b16 %v870, %v862
        %v1359 = vpack.c.b16 %v871, %v863
        %v1360 = vpack.c.b16 %v872, %v864
        %v1361 = vpack.c.b16 %v873, %v865
        %v1362 = vpack.c.b16 %v874, %v866
        %v1363 = vpack.c.b16 %v883, %v875
        %v1364 = vpack.c.b16 %v884, %v876
        %v1365 = vpack.c.b16 %v885, %v877
        %v1366 = vpack.c.b16 %v886, %v878
        %v1367 = vpack.c.b16 %v887, %v879
        %v1368 = vpack.c.b16 %v888, %v880
        %v1369 = vpack.c.b16 %v889, %v881
        %v1370 = vpack.c.b16 %v890, %v882
        %v1371 = vpack.c.b16 %v899, %v891
        %v1372 = vpack.c.b16 %v900, %v892
        %v1373 = vpack.c.b16 %v901, %v893
        %v1374 = vpack.c.b16 %v902, %v894
        %v1375 = vpack.c.b16 %v903, %v895
        %v1376 = vpack.c.b16 %v904, %v896
        %v1377 = vpack.c.b16 %v905, %v897
        %v1378 = vpack.c.b16 %v906, %v898
        %v1379 = vpack.c.b16 %v915, %v907
        %v1380 = vpack.c.b16 %v916, %v908
        %v1381 = vpack.c.b16 %v917, %v909
        %v1382 = vpack.c.b16 %v918, %v910
        %v1383 = vpack.c.b16 %v919, %v911
        %v1384 = vpack.c.b16 %v920, %v912
        %v1385 = vpack.c.b16 %v921, %v913
        %v1386 = vpack.c.b16 %v922, %v914
        %v1387 = vpack.c.b16 %v931, %v923
        %v1388 = vpack.c.b16 %v932, %v924
        %v1389 = vpack.c.b16 %v933, %v925
        %v1390 = vpack.c.b16 %v934, %v926
        %v1391 = vpack.c.b16 %v935, %v927
        %v1392 = vpack.c.b16 %v936, %v928
        %v1393 = vpack.c.b16 %v937, %v929
        %v1394 = vpack.c.b16 %v938, %v930
        %v1395 = vpack.c.b16 %v947, %v939
        %v1396 = vpack.c.b16 %v948, %v940
        %v1397 = vpack.c.b16 %v949, %v941
        %v1398 = vpack.c.b16 %v950, %v942
        %v1399 = vpack.c.b16 %v951, %v943
        %v1400 = vpack.c.b16 %v952, %v944
        %v1401 = vpack.c.b16 %v953, %v945
        %v1402 = vpack.c.b16 %v954, %v946
        %v1403 = vpack.c.b16 %v963, %v955
        %v1404 = vpack.c.b16 %v964, %v956
        %v1405 = vpack.c.b16 %v965, %v957
        %v1406 = vpack.c.b16 %v966, %v958
        %v1407 = vpack.c.b16 %v967, %v959
        %v1408 = vpack.c.b16 %v968, %v960
        %v1409 = vpack.c.b16 %v969, %v961
        %v1410 = vpack.c.b16 %v970, %v962
        %v1411 = vpack.c.b16 %v979, %v971
        %v1412 = vpack.c.b16 %v980, %v972
        %v1413 = vpack.c.b16 %v981, %v973
        %v1414 = vpack.c.b16 %v982, %v974
        %v1415 = vpack.c.b16 %v983, %v975
        %v1416 = vpack.c.b16 %v984, %v976
        %v1417 = vpack.c.b16 %v985, %v977
        %v1418 = vpack.c.b16 %v986, %v978
        %v1419 = vpack.c.b16 %v995, %v987
        %v1420 = vpack.c.b16 %v996, %v988
        %v1421 = vpack.c.b16 %v997, %v989
        %v1422 = vpack.c.b16 %v998, %v990
        %v1423 = vpack.c.b16 %v999, %v991
        %v1424 = vpack.c.b16 %v1000, %v992
        %v1425 = vpack.c.b16 %v1001, %v993
        %v1426 = vpack.c.b16 %v1002, %v994
        %v1427 = vpack.c.b16 %v1011, %v1003
        %v1428 = vpack.c.b16 %v1012, %v1004
        %v1429 = vpack.c.b16 %v1013, %v1005
        %v1430 = vpack.c.b16 %v1014, %v1006
        %v1431 = vpack.c.b16 %v1015, %v1007
        %v1432 = vpack.c.b16 %v1016, %v1008
        %v1433 = vpack.c.b16 %v1017, %v1009
        %v1434 = vpack.c.b16 %v1018, %v1010
        %v1435 = vpack.c.b16 %v1027, %v1019
        %v1436 = vpack.c.b16 %v1028, %v1020
        %v1437 = vpack.c.b16 %v1029, %v1021
        %v1438 = vpack.c.b16 %v1030, %v1022
        %v1439 = vpack.c.b16 %v1031, %v1023
        %v1440 = vpack.c.b16 %v1032, %v1024
        %v1441 = vpack.c.b16 %v1033, %v1025
        %v1442 = vpack.c.b16 %v1034, %v1026
        %v1443 = vpack.c.b16 %v1043, %v1035
        %v1444 = vpack.c.b16 %v1044, %v1036
        %v1445 = vpack.c.b16 %v1045, %v1037
        %v1446 = vpack.c.b16 %v1046, %v1038
        %v1447 = vpack.c.b16 %v1047, %v1039
        %v1448 = vpack.c.b16 %v1048, %v1040
        %v1449 = vpack.c.b16 %v1049, %v1041
        %v1450 = vpack.c.b16 %v1050, %v1042
        %v1451 = vpack.c.b16 %v1059, %v1051
        %v1452 = vpack.c.b16 %v1060, %v1052
        %v1453 = vpack.c.b16 %v1061, %v1053
        %v1454 = vpack.c.b16 %v1062, %v1054
        %v1455 = vpack.c.b16 %v1063, %v1055
        %v1456 = vpack.c.b16 %v1064, %v1056
        %v1457 = vpack.c.b16 %v1065, %v1057
        %v1458 = vpack.c.b16 %v1066, %v1058
        %v1459 = vpack.c.b16 %v1075, %v1067
        %v1460 = vpack.c.b16 %v1076, %v1068
        %v1461 = vpack.c.b16 %v1077, %v1069
        %v1462 = vpack.c.b16 %v1078, %v1070
        %v1463 = vpack.c.b16 %v1079, %v1071
        %v1464 = vpack.c.b16 %v1080, %v1072
        %v1465 = vpack.c.b16 %v1081, %v1073
        %v1466 = vpack.c.b16 %v1082, %v1074
        %v1467 = vpack.c.b16 %v1091, %v1083
        %v1468 = vpack.c.b16 %v1092, %v1084
        %v1469 = vpack.c.b16 %v1093, %v1085
        %v1470 = vpack.c.b16 %v1094, %v1086
        %v1471 = vpack.c.b16 %v1095, %v1087
        %v1472 = vpack.c.b16 %v1096, %v1088
        %v1473 = vpack.c.b16 %v1097, %v1089
        %v1474 = vpack.c.b16 %v1098, %v1090
        %v1475 = vpack.c.b16 %v1107, %v1099
        %v1476 = vpack.c.b16 %v1108, %v1100
        %v1477 = vpack.c.b16 %v1109, %v1101
        %v1478 = vpack.c.b16 %v1110, %v1102
        %v1479 = vpack.c.b16 %v1111, %v1103
        %v1480 = vpack.c.b16 %v1112, %v1104
        %v1481 = vpack.c.b16 %v1113, %v1105
        %v1482 = vpack.c.b16 %v1114, %v1106
        %v1483 = vpack.c.b16 %v1123, %v1115
        %v1484 = vpack.c.b16 %v1124, %v1116
        %v1485 = vpack.c.b16 %v1125, %v1117
        %v1486 = vpack.c.b16 %v1126, %v1118
        %v1487 = vpack.c.b16 %v1127, %v1119
        %v1488 = vpack.c.b16 %v1128, %v1120
        %v1489 = vpack.c.b16 %v1129, %v1121
        %v1490 = vpack.c.b16 %v1130, %v1122
        %v1491 = vpack.c.b16 %v1139, %v1131
        %v1492 = vpack.c.b16 %v1140, %v1132
        %v1493 = vpack.c.b16 %v1141, %v1133
        %v1494 = vpack.c.b16 %v1142, %v1134
        %v1495 = vpack.c.b16 %v1143, %v1135
        %v1496 = vpack.c.b16 %v1144, %v1136
        %v1497 = vpack.c.b16 %v1145, %v1137
        %v1498 = vpack.c.b16 %v1146, %v1138
        %v1499 = vpack.c.b16 %v1155, %v1147
        %v1500 = vpack.c.b16 %v1156, %v1148
        %v1501 = vpack.c.b16 %v1157, %v1149
        %v1502 = vpack.c.b16 %v1158, %v1150
        %v1503 = vpack.c.b16 %v1159, %v1151
        %v1504 = vpack.c.b16 %v1160, %v1152
        %v1505 = vpack.c.b16 %v1161, %v1153
        %v1506 = vpack.c.b16 %v1162, %v1154
        %v1507 = vpack.c.b16 %v1171, %v1163
        %v1508 = vpack.c.b16 %v1172, %v1164
        %v1509 = vpack.c.b16 %v1173, %v1165
        %v1510 = vpack.c.b16 %v1174, %v1166
        %v1511 = vpack.c.b16 %v1175, %v1167
        %v1512 = vpack.c.b16 %v1176, %v1168
        %v1513 = vpack.c.b16 %v1177, %v1169
        %v1514 = vpack.c.b16 %v1178, %v1170
        %v1515 = vpack.c.b16 %v1187, %v1179
        %v1516 = vpack.c.b16 %v1188, %v1180
        %v1517 = vpack.c.b16 %v1189, %v1181
        %v1518 = vpack.c.b16 %v1190, %v1182
        %v1519 = vpack.c.b16 %v1191, %v1183
        %v1520 = vpack.c.b16 %v1192, %v1184
        %v1521 = vpack.c.b16 %v1193, %v1185
        %v1522 = vpack.c.b16 %v1194, %v1186
        %v1523 = vpack.c.b16 %v1203, %v1195
        %v1524 = vpack.c.b16 %v1204, %v1196
        %v1525 = vpack.c.b16 %v1205, %v1197
        %v1526 = vpack.c.b16 %v1206, %v1198
        %v1527 = vpack.c.b16 %v1207, %v1199
        %v1528 = vpack.c.b16 %v1208, %v1200
        %v1529 = vpack.c.b16 %v1209, %v1201
        %v1530 = vpack.c.b16 %v1210, %v1202
        %v1531 = vpack.c.b16 %v1219, %v1211
        %v1532 = vpack.c.b16 %v1220, %v1212
        %v1533 = vpack.c.b16 %v1221, %v1213
        %v1534 = vpack.c.b16 %v1222, %v1214
        %v1535 = vpack.c.b16 %v1223, %v1215
        %v1536 = vpack.c.b16 %v1224, %v1216
        %v1537 = vpack.c.b16 %v1225, %v1217
        %v1538 = vpack.c.b16 %v1226, %v1218
        %v1539 = vpack.c.b16 %v1235, %v1227
        %v1540 = vpack.c.b16 %v1236, %v1228
        %v1541 = vpack.c.b16 %v1237, %v1229
        %v1542 = vpack.c.b16 %v1238, %v1230
        %v1543 = vpack.c.b16 %v1239, %v1231
        %v1544 = vpack.c.b16 %v1240, %v1232
        %v1545 = vpack.c.b16 %v1241, %v1233
        %v1546 = vpack.c.b16 %v1242, %v1234
        %v1547 = vpack.c.b16 %v1251, %v1243
        %v1548 = vpack.c.b16 %v1252, %v1244
        %v1549 = vpack.c.b16 %v1253, %v1245
        %v1550 = vpack.c.b16 %v1254, %v1246
        %v1551 = vpack.c.b16 %v1255, %v1247
        %v1552 = vpack.c.b16 %v1256, %v1248
        %v1553 = vpack.c.b16 %v1257, %v1249
        %v1554 = vpack.c.b16 %v1258, %v1250
        %v1555 = vpack.c.b16 %v1267, %v1259
        %v1556 = vpack.c.b16 %v1268, %v1260
        %v1557 = vpack.c.b16 %v1269, %v1261
        %v1558 = vpack.c.b16 %v1270, %v1262
        %v1559 = vpack.c.b16 %v1271, %v1263
        %v1560 = vpack.c.b16 %v1272, %v1264
        %v1561 = vpack.c.b16 %v1273, %v1265
        %v1562 = vpack.c.b16 %v1274, %v1266
        %v1563 = vpack.c.b16 %v1283, %v1275
        %v1564 = vpack.c.b16 %v1284, %v1276
        %v1565 = vpack.c.b16 %v1285, %v1277
        %v1566 = vpack.c.b16 %v1286, %v1278
        %v1567 = vpack.c.b16 %v1287, %v1279
        %v1568 = vpack.c.b16 %v1288, %v1280
        %v1569 = vpack.c.b16 %v1289, %v1281
        %v1570 = vpack.c.b16 %v1290, %v1282
        %v1571 = vpack.c.b16 %v1299, %v1291
        %v1572 = vpack.c.b16 %v1300, %v1292
        %v1573 = vpack.c.b16 %v1301, %v1293
        %v1574 = vpack.c.b16 %v1302, %v1294
        %v1575 = vpack.c.b16 %v1303, %v1295
        %v1576 = vpack.c.b16 %v1304, %v1296
        %v1577 = vpack.c.b16 %v1305, %v1297
        %v1578 = vpack.c.b16 %v1306, %v1298
        %v1579 = vpack.c.b16 %v1315, %v1307
        %v1580 = vpack.c.b16 %v1316, %v1308
        %v1581 = vpack.c.b16 %v1317, %v1309
        %v1582 = vpack.c.b16 %v1318, %v1310
        %v1583 = vpack.c.b16 %v1319, %v1311
        %v1584 = vpack.c.b16 %v1320, %v1312
        %v1585 = vpack.c.b16 %v1321, %v1313
        %v1586 = vpack.c.b16 %v1322, %v1314
        %v1587 = vpack.c.b16 %v1331, %v1323
        %v1588 = vpack.c.b16 %v1332, %v1324
        %v1589 = vpack.c.b16 %v1333, %v1325
        %v1590 = vpack.c.b16 %v1334, %v1326
        %v1591 = vpack.c.b16 %v1335, %v1327
        %v1592 = vpack.c.b16 %v1336, %v1328
        %v1593 = vpack.c.b16 %v1337, %v1329
        %v1594 = vpack.c.b16 %v1338, %v1330
        %1851 = vmatprep.subr.bf16.mxu0 %v1340
        %1852 = vmatpush1.bf16.msra.mxu0 %v1339
        %1853 = vmatprep.subr.bf16.mxu0 %v1348
        %1854 = vmatpush1.bf16.msra.mxu0 %v1347
        %1855 = vmatprep.subr.bf16.mxu0 %v1356
        %1856 = vmatpush1.bf16.msra.mxu0 %v1355
        %1857 = vmatprep.subr.bf16.mxu0 %v1364
        %1858 = vmatpush1.bf16.msra.mxu0 %v1363
        %1859 = vmatprep.subr.bf16.mxu0 %v1372
        %1860 = vmatpush1.bf16.msra.mxu0 %v1371
        %1861 = vmatprep.subr.bf16.mxu0 %v1380
        %1862 = vmatpush1.bf16.msra.mxu0 %v1379
        %1863 = vmatprep.subr.bf16.mxu0 %v1388
        %1864 = vmatpush1.bf16.msra.mxu0 %v1387
        %1865 = vmatprep.subr.bf16.mxu0 %v1396
        %1866 = vmatpush1.bf16.msra.mxu0 %v1395
        %1867 = vmatprep.subr.bf16.mxu0 %v1404
        %1868 = vmatpush1.bf16.msra.mxu0 %v1403
        %1869 = vmatprep.subr.bf16.mxu0 %v1412
        %1870 = vmatpush1.bf16.msra.mxu0 %v1411
        %1871 = vmatprep.subr.bf16.mxu0 %v1420
        %1872 = vmatpush1.bf16.msra.mxu0 %v1419
        %1873 = vmatprep.subr.bf16.mxu0 %v1428
        %1874 = vmatpush1.bf16.msra.mxu0 %v1427
        %1875 = vmatprep.subr.bf16.mxu0 %v1436
        %1876 = vmatpush1.bf16.msra.mxu0 %v1435
        %1877 = vmatprep.subr.bf16.mxu0 %v1444
        %1878 = vmatpush1.bf16.msra.mxu0 %v1443
        %1879 = vmatprep.subr.bf16.mxu0 %v1452
        %1880 = vmatpush1.bf16.msra.mxu0 %v1451
        %1881 = vmatprep.subr.bf16.mxu0 %v1460
        %1882 = vmatpush1.bf16.msra.mxu0 %v1459
        %1883 = vmatprep.mubr.bf16.mxu0 %v312
        %1884 = vmatmul.mubr.bf16.gmra.mrb[0].mxu0 %v311
        %v1885 = vpop.f32.mrb[0].mxu0
        %v1886 = vadd.f32 0.0, %v1885
        %v1887 = vpop.f32.mrb[0].mxu0
        %v1888 = vadd.f32 0.0, %v1887
        %v1889 = vpop.f32.mrb[0].mxu0
        %v1890 = vadd.f32 0.0, %v1889
        %v1891 = vpop.f32.mrb[0].mxu0
        %v1892 = vadd.f32 0.0, %v1891
        %1893 = vdwg.mxu0
        %1894 = vmatprep.subr.bf16.mxu0 %v1468
        %1895 = vmatpush1.bf16.msra.mxu0 %v1467
        %1896 = vmatprep.subr.bf16.mxu0 %v1476
        %1897 = vmatpush1.bf16.msra.mxu0 %v1475
        %1898 = vmatprep.subr.bf16.mxu0 %v1484
        %1899 = vmatpush1.bf16.msra.mxu0 %v1483
        %1900 = vmatprep.subr.bf16.mxu0 %v1492
        %1901 = vmatpush1.bf16.msra.mxu0 %v1491
        %1902 = vmatprep.subr.bf16.mxu0 %v1500
        %1903 = vmatpush1.bf16.msra.mxu0 %v1499
        %1904 = vmatprep.subr.bf16.mxu0 %v1508
        %1905 = vmatpush1.bf16.msra.mxu0 %v1507
        %1906 = vmatprep.subr.bf16.mxu0 %v1516
        %1907 = vmatpush1.bf16.msra.mxu0 %v1515
        %1908 = vmatprep.subr.bf16.mxu0 %v1524
        %1909 = vmatpush1.bf16.msra.mxu0 %v1523
        %1910 = vmatprep.subr.bf16.mxu0 %v1532
        %1911 = vmatpush1.bf16.msra.mxu0 %v1531
        %1912 = vmatprep.subr.bf16.mxu0 %v1540
        %1913 = vmatpush1.bf16.msra.mxu0 %v1539
        %1914 = vmatprep.subr.bf16.mxu0 %v1548
        %1915 = vmatpush1.bf16.msra.mxu0 %v1547
        %1916 = vmatprep.subr.bf16.mxu0 %v1556
        %1917 = vmatpush1.bf16.msra.mxu0 %v1555
        %1918 = vmatprep.subr.bf16.mxu0 %v1564
        %1919 = vmatpush1.bf16.msra.mxu0 %v1563
        %1920 = vmatprep.subr.bf16.mxu0 %v1572
        %1921 = vmatpush1.bf16.msra.mxu0 %v1571
        %1922 = vmatprep.subr.bf16.mxu0 %v1580
        %1923 = vmatpush1.bf16.msra.mxu0 %v1579
        %1924 = vmatprep.subr.bf16.mxu0 %v1588
        %1925 = vmatpush1.bf16.msra.mxu0 %v1587
        %1926 = vmatprep.mubr.bf16.mxu0 %v314
        %1927 = vmatmul.mubr.bf16.gmra.mrb[0].mxu0 %v313
        %v1928 = vpop.f32.mrb[0].mxu0
        %v1929 = vadd.f32 %v1886, %v1928
        %v1930 = vpop.f32.mrb[0].mxu0
        %v1931 = vadd.f32 %v1888, %v1930
        %v1932 = vpop.f32.mrb[0].mxu0
        %v1933 = vadd.f32 %v1890, %v1932
        %v1934 = vpop.f32.mrb[0].mxu0
        %v1935 = vadd.f32 %v1892, %v1934
        %1936 = vdwg.mxu0
        %1937 = vmatprep.subr.bf16.mxu0 %v1342
        %1938 = vmatpush1.bf16.msra.mxu0 %v1341
        %1939 = vmatprep.subr.bf16.mxu0 %v1350
        %1940 = vmatpush1.bf16.msra.mxu0 %v1349
        %1941 = vmatprep.subr.bf16.mxu0 %v1358
        %1942 = vmatpush1.bf16.msra.mxu0 %v1357
        %1943 = vmatprep.subr.bf16.mxu0 %v1366
        %1944 = vmatpush1.bf16.msra.mxu0 %v1365
        %1945 = vmatprep.subr.bf16.mxu0 %v1374
        %1946 = vmatpush1.bf16.msra.mxu0 %v1373
        %1947 = vmatprep.subr.bf16.mxu0 %v1382
        %1948 = vmatpush1.bf16.msra.mxu0 %v1381
        %1949 = vmatprep.subr.bf16.mxu0 %v1390
        %1950 = vmatpush1.bf16.msra.mxu0 %v1389
        %1951 = vmatprep.subr.bf16.mxu0 %v1398
        %1952 = vmatpush1.bf16.msra.mxu0 %v1397
        %1953 = vmatprep.subr.bf16.mxu0 %v1406
        %1954 = vmatpush1.bf16.msra.mxu0 %v1405
        %1955 = vmatprep.subr.bf16.mxu0 %v1414
        %1956 = vmatpush1.bf16.msra.mxu0 %v1413
        %1957 = vmatprep.subr.bf16.mxu0 %v1422
        %1958 = vmatpush1.bf16.msra.mxu0 %v1421
        %1959 = vmatprep.subr.bf16.mxu0 %v1430
        %1960 = vmatpush1.bf16.msra.mxu0 %v1429
        %1961 = vmatprep.subr.bf16.mxu0 %v1438
        %1962 = vmatpush1.bf16.msra.mxu0 %v1437
        %1963 = vmatprep.subr.bf16.mxu0 %v1446
        %1964 = vmatpush1.bf16.msra.mxu0 %v1445
        %1965 = vmatprep.subr.bf16.mxu0 %v1454
        %1966 = vmatpush1.bf16.msra.mxu0 %v1453
        %1967 = vmatprep.subr.bf16.mxu0 %v1462
        %1968 = vmatpush1.bf16.msra.mxu0 %v1461
        %1969 = vmatprep.mubr.bf16.mxu0 %v312
        %1970 = vmatmul.mubr.bf16.gmra.mrb[0].mxu0 %v311
        %v1971 = vpop.f32.mrb[0].mxu0
        %v1972 = vadd.f32 0.0, %v1971
        %v1973 = vpop.f32.mrb[0].mxu0
        %v1974 = vadd.f32 0.0, %v1973
        %v1975 = vpop.f32.mrb[0].mxu0
        %v1976 = vadd.f32 0.0, %v1975
        %v1977 = vpop.f32.mrb[0].mxu0
        %v1978 = vadd.f32 0.0, %v1977
        %1979 = vdwg.mxu0
        %1980 = vmatprep.subr.bf16.mxu0 %v1470
        %1981 = vmatpush1.bf16.msra.mxu0 %v1469
        %1982 = vmatprep.subr.bf16.mxu0 %v1478
        %1983 = vmatpush1.bf16.msra.mxu0 %v1477
        %1984 = vmatprep.subr.bf16.mxu0 %v1486
        %1985 = vmatpush1.bf16.msra.mxu0 %v1485
        %1986 = vmatprep.subr.bf16.mxu0 %v1494
        %1987 = vmatpush1.bf16.msra.mxu0 %v1493
        %1988 = vmatprep.subr.bf16.mxu0 %v1502
        %1989 = vmatpush1.bf16.msra.mxu0 %v1501
        %1990 = vmatprep.subr.bf16.mxu0 %v1510
        %1991 = vmatpush1.bf16.msra.mxu0 %v1509
        %1992 = vmatprep.subr.bf16.mxu0 %v1518
        %1993 = vmatpush1.bf16.msra.mxu0 %v1517
        %1994 = vmatprep.subr.bf16.mxu0 %v1526
        %1995 = vmatpush1.bf16.msra.mxu0 %v1525
        %1996 = vmatprep.subr.bf16.mxu0 %v1534
        %1997 = vmatpush1.bf16.msra.mxu0 %v1533
        %1998 = vmatprep.subr.bf16.mxu0 %v1542
        %1999 = vmatpush1.bf16.msra.mxu0 %v1541
        %2000 = vmatprep.subr.bf16.mxu0 %v1550
        %2001 = vmatpush1.bf16.msra.mxu0 %v1549
        %2002 = vmatprep.subr.bf16.mxu0 %v1558
        %2003 = vmatpush1.bf16.msra.mxu0 %v1557
        %2004 = vmatprep.subr.bf16.mxu0 %v1566
        %2005 = vmatpush1.bf16.msra.mxu0 %v1565
        %2006 = vmatprep.subr.bf16.mxu0 %v1574
        %2007 = vmatpush1.bf16.msra.mxu0 %v1573
        %2008 = vmatprep.subr.bf16.mxu0 %v1582
        %2009 = vmatpush1.bf16.msra.mxu0 %v1581
        %2010 = vmatprep.subr.bf16.mxu0 %v1590
        %2011 = vmatpush1.bf16.msra.mxu0 %v1589
        %2012 = vmatprep.mubr.bf16.mxu0 %v314
        %2013 = vmatmul.mubr.bf16.gmra.mrb[0].mxu0 %v313
        %v2014 = vpop.f32.mrb[0].mxu0
        %v2015 = vadd.f32 %v1972, %v2014
        %v2016 = vpop.f32.mrb[0].mxu0
        %v2017 = vadd.f32 %v1974, %v2016
        %v2018 = vpop.f32.mrb[0].mxu0
        %v2019 = vadd.f32 %v1976, %v2018
        %v2020 = vpop.f32.mrb[0].mxu0
        %v2021 = vadd.f32 %v1978, %v2020
        %2022 = vdwg.mxu0
        %2023 = vmatprep.subr.bf16.mxu0 %v1344
        %2024 = vmatpush1.bf16.msra.mxu0 %v1343
        %2025 = vmatprep.subr.bf16.mxu0 %v1352
        %2026 = vmatpush1.bf16.msra.mxu0 %v1351
        %2027 = vmatprep.subr.bf16.mxu0 %v1360
        %2028 = vmatpush1.bf16.msra.mxu0 %v1359
        %2029 = vmatprep.subr.bf16.mxu0 %v1368
        %2030 = vmatpush1.bf16.msra.mxu0 %v1367
        %2031 = vmatprep.subr.bf16.mxu0 %v1376
        %2032 = vmatpush1.bf16.msra.mxu0 %v1375
        %2033 = vmatprep.subr.bf16.mxu0 %v1384
        %2034 = vmatpush1.bf16.msra.mxu0 %v1383
        %2035 = vmatprep.subr.bf16.mxu0 %v1392
        %2036 = vmatpush1.bf16.msra.mxu0 %v1391
        %2037 = vmatprep.subr.bf16.mxu0 %v1400
        %2038 = vmatpush1.bf16.msra.mxu0 %v1399
        %2039 = vmatprep.subr.bf16.mxu0 %v1408
        %2040 = vmatpush1.bf16.msra.mxu0 %v1407
        %2041 = vmatprep.subr.bf16.mxu0 %v1416
        %2042 = vmatpush1.bf16.msra.mxu0 %v1415
        %2043 = vmatprep.subr.bf16.mxu0 %v1424
        %2044 = vmatpush1.bf16.msra.mxu0 %v1423
        %2045 = vmatprep.subr.bf16.mxu0 %v1432
        %2046 = vmatpush1.bf16.msra.mxu0 %v1431
        %2047 = vmatprep.subr.bf16.mxu0 %v1440
        %2048 = vmatpush1.bf16.msra.mxu0 %v1439
        %2049 = vmatprep.subr.bf16.mxu0 %v1448
        %2050 = vmatpush1.bf16.msra.mxu0 %v1447
        %2051 = vmatprep.subr.bf16.mxu0 %v1456
        %2052 = vmatpush1.bf16.msra.mxu0 %v1455
        %2053 = vmatprep.subr.bf16.mxu0 %v1464
        %2054 = vmatpush1.bf16.msra.mxu0 %v1463
        %2055 = vmatprep.mubr.bf16.mxu0 %v312
        %2056 = vmatmul.mubr.bf16.gmra.mrb[0].mxu0 %v311
        %v2057 = vpop.f32.mrb[0].mxu0
        %v2058 = vadd.f32 0.0, %v2057
        %v2059 = vpop.f32.mrb[0].mxu0
        %v2060 = vadd.f32 0.0, %v2059
        %v2061 = vpop.f32.mrb[0].mxu0
        %v2062 = vadd.f32 0.0, %v2061
        %v2063 = vpop.f32.mrb[0].mxu0
        %v2064 = vadd.f32 0.0, %v2063
        %2065 = vdwg.mxu0
        %2066 = vmatprep.subr.bf16.mxu0 %v1472
        %2067 = vmatpush1.bf16.msra.mxu0 %v1471
        %2068 = vmatprep.subr.bf16.mxu0 %v1480
        %2069 = vmatpush1.bf16.msra.mxu0 %v1479
        %2070 = vmatprep.subr.bf16.mxu0 %v1488
        %2071 = vmatpush1.bf16.msra.mxu0 %v1487
        %2072 = vmatprep.subr.bf16.mxu0 %v1496
        %2073 = vmatpush1.bf16.msra.mxu0 %v1495
        %2074 = vmatprep.subr.bf16.mxu0 %v1504
        %2075 = vmatpush1.bf16.msra.mxu0 %v1503
        %2076 = vmatprep.subr.bf16.mxu0 %v1512
        %2077 = vmatpush1.bf16.msra.mxu0 %v1511
        %2078 = vmatprep.subr.bf16.mxu0 %v1520
        %2079 = vmatpush1.bf16.msra.mxu0 %v1519
        %2080 = vmatprep.subr.bf16.mxu0 %v1528
        %2081 = vmatpush1.bf16.msra.mxu0 %v1527
        %2082 = vmatprep.subr.bf16.mxu0 %v1536
        %2083 = vmatpush1.bf16.msra.mxu0 %v1535
        %2084 = vmatprep.subr.bf16.mxu0 %v1544
        %2085 = vmatpush1.bf16.msra.mxu0 %v1543
        %2086 = vmatprep.subr.bf16.mxu0 %v1552
        %2087 = vmatpush1.bf16.msra.mxu0 %v1551
        %2088 = vmatprep.subr.bf16.mxu0 %v1560
        %2089 = vmatpush1.bf16.msra.mxu0 %v1559
        %2090 = vmatprep.subr.bf16.mxu0 %v1568
        %2091 = vmatpush1.bf16.msra.mxu0 %v1567
        %2092 = vmatprep.subr.bf16.mxu0 %v1576
        %2093 = vmatpush1.bf16.msra.mxu0 %v1575
        %2094 = vmatprep.subr.bf16.mxu0 %v1584
        %2095 = vmatpush1.bf16.msra.mxu0 %v1583
        %2096 = vmatprep.subr.bf16.mxu0 %v1592
        %2097 = vmatpush1.bf16.msra.mxu0 %v1591
        %2098 = vmatprep.mubr.bf16.mxu0 %v314
        %2099 = vmatmul.mubr.bf16.gmra.mrb[0].mxu0 %v313
        %v2100 = vpop.f32.mrb[0].mxu0
        %v2101 = vadd.f32 %v2058, %v2100
        %v2102 = vpop.f32.mrb[0].mxu0
        %v2103 = vadd.f32 %v2060, %v2102
        %v2104 = vpop.f32.mrb[0].mxu0
        %v2105 = vadd.f32 %v2062, %v2104
        %v2106 = vpop.f32.mrb[0].mxu0
        %v2107 = vadd.f32 %v2064, %v2106
        %2108 = vdwg.mxu0
        %2109 = vmatprep.subr.bf16.mxu0 %v1346
        %2110 = vmatpush1.bf16.msra.mxu0 %v1345
        %2111 = vmatprep.subr.bf16.mxu0 %v1354
        %2112 = vmatpush1.bf16.msra.mxu0 %v1353
        %2113 = vmatprep.subr.bf16.mxu0 %v1362
        %2114 = vmatpush1.bf16.msra.mxu0 %v1361
        %2115 = vmatprep.subr.bf16.mxu0 %v1370
        %2116 = vmatpush1.bf16.msra.mxu0 %v1369
        %2117 = vmatprep.subr.bf16.mxu0 %v1378
        %2118 = vmatpush1.bf16.msra.mxu0 %v1377
        %2119 = vmatprep.subr.bf16.mxu0 %v1386
        %2120 = vmatpush1.bf16.msra.mxu0 %v1385
        %2121 = vmatprep.subr.bf16.mxu0 %v1394
        %2122 = vmatpush1.bf16.msra.mxu0 %v1393
        %2123 = vmatprep.subr.bf16.mxu0 %v1402
        %2124 = vmatpush1.bf16.msra.mxu0 %v1401
        %2125 = vmatprep.subr.bf16.mxu0 %v1410
        %2126 = vmatpush1.bf16.msra.mxu0 %v1409
        %2127 = vmatprep.subr.bf16.mxu0 %v1418
        %2128 = vmatpush1.bf16.msra.mxu0 %v1417
        %2129 = vmatprep.subr.bf16.mxu0 %v1426
        %2130 = vmatpush1.bf16.msra.mxu0 %v1425
        %2131 = vmatprep.subr.bf16.mxu0 %v1434
        %2132 = vmatpush1.bf16.msra.mxu0 %v1433
        %2133 = vmatprep.subr.bf16.mxu0 %v1442
        %2134 = vmatpush1.bf16.msra.mxu0 %v1441
        %2135 = vmatprep.subr.bf16.mxu0 %v1450
        %2136 = vmatpush1.bf16.msra.mxu0 %v1449
        %2137 = vmatprep.subr.bf16.mxu0 %v1458
        %2138 = vmatpush1.bf16.msra.mxu0 %v1457
        %2139 = vmatprep.subr.bf16.mxu0 %v1466
        %2140 = vmatpush1.bf16.msra.mxu0 %v1465
        %2141 = vmatprep.mubr.bf16.mxu0 %v312
        %2142 = vmatmul.mubr.bf16.gmra.mrb[0].mxu0 %v311
        %v2143 = vpop.f32.mrb[0].mxu0
        %v2144 = vadd.f32 0.0, %v2143
        %v2145 = vpop.f32.mrb[0].mxu0
        %v2146 = vadd.f32 0.0, %v2145
        %v2147 = vpop.f32.mrb[0].mxu0
        %v2148 = vadd.f32 0.0, %v2147
        %v2149 = vpop.f32.mrb[0].mxu0
        %v2150 = vadd.f32 0.0, %v2149
        %2151 = vdwg.mxu0
        %2152 = vmatprep.subr.bf16.mxu0 %v1474
        %2153 = vmatpush1.bf16.msra.mxu0 %v1473
        %2154 = vmatprep.subr.bf16.mxu0 %v1482
        %2155 = vmatpush1.bf16.msra.mxu0 %v1481
        %2156 = vmatprep.subr.bf16.mxu0 %v1490
        %2157 = vmatpush1.bf16.msra.mxu0 %v1489
        %2158 = vmatprep.subr.bf16.mxu0 %v1498
        %2159 = vmatpush1.bf16.msra.mxu0 %v1497
        %2160 = vmatprep.subr.bf16.mxu0 %v1506
        %2161 = vmatpush1.bf16.msra.mxu0 %v1505
        %2162 = vmatprep.subr.bf16.mxu0 %v1514
        %2163 = vmatpush1.bf16.msra.mxu0 %v1513
        %2164 = vmatprep.subr.bf16.mxu0 %v1522
        %2165 = vmatpush1.bf16.msra.mxu0 %v1521
        %2166 = vmatprep.subr.bf16.mxu0 %v1530
        %2167 = vmatpush1.bf16.msra.mxu0 %v1529
        %2168 = vmatprep.subr.bf16.mxu0 %v1538
        %2169 = vmatpush1.bf16.msra.mxu0 %v1537
        %2170 = vmatprep.subr.bf16.mxu0 %v1546
        %2171 = vmatpush1.bf16.msra.mxu0 %v1545
        %2172 = vmatprep.subr.bf16.mxu0 %v1554
        %2173 = vmatpush1.bf16.msra.mxu0 %v1553
        %2174 = vmatprep.subr.bf16.mxu0 %v1562
        %2175 = vmatpush1.bf16.msra.mxu0 %v1561
        %2176 = vmatprep.subr.bf16.mxu0 %v1570
        %2177 = vmatpush1.bf16.msra.mxu0 %v1569
        %2178 = vmatprep.subr.bf16.mxu0 %v1578
        %2179 = vmatpush1.bf16.msra.mxu0 %v1577
        %2180 = vmatprep.subr.bf16.mxu0 %v1586
        %2181 = vmatpush1.bf16.msra.mxu0 %v1585
        %2182 = vmatprep.subr.bf16.mxu0 %v1594
        %2183 = vmatpush1.bf16.msra.mxu0 %v1593
        %2184 = vmatprep.mubr.bf16.mxu0 %v314
        %2185 = vmatmul.mubr.bf16.gmra.mrb[0].mxu0 %v313
        %v2186 = vpop.f32.mrb[0].mxu0
        %v2187 = vadd.f32 %v2144, %v2186
        %v2188 = vpop.f32.mrb[0].mxu0
        %v2189 = vadd.f32 %v2146, %v2188
        %v2190 = vpop.f32.mrb[0].mxu0
        %v2191 = vadd.f32 %v2148, %v2190
        %v2192 = vpop.f32.mrb[0].mxu0
        %v2193 = vadd.f32 %v2150, %v2192
        %2194 = vdwg.mxu0
        %v2195 = vadd.f32 %v287, %v1929
        %v2196 = vadd.f32 %v288, %v1931
        %v2197 = vadd.f32 %v289, %v2015
        %v2198 = vadd.f32 %v290, %v2017
        %v2199 = vadd.f32 %v291, %v2101
        %v2200 = vadd.f32 %v292, %v2103
        %v2201 = vadd.f32 %v293, %v2187
        %v2202 = vadd.f32 %v294, %v2189
        %v2203 = vadd.f32 %v295, %v1933
        %v2204 = vadd.f32 %v296, %v1935
        %v2205 = vadd.f32 %v297, %v2019
        %v2206 = vadd.f32 %v298, %v2021
        %v2207 = vadd.f32 %v299, %v2105
        %v2208 = vadd.f32 %v300, %v2107
        %v2209 = vadd.f32 %v301, %v2191
        %v2210 = vadd.f32 %v302, %v2193
        %2211 = vst [vmem:[%s265] sm:$0xff] %v2195
        %2212 = vst [vmem:[%s265 + $0x8] sm:$0xff] %v2196
        %2213 = vst [vmem:[%s265 + $0x10] sm:$0xff] %v2197
        %2214 = vst [vmem:[%s265 + $0x18] sm:$0xff] %v2198
        %2215 = vst [vmem:[%s265 + $0x20] sm:$0xff] %v2199
        %2216 = vst [vmem:[%s265 + $0x28] sm:$0xff] %v2200
        %2217 = vst [vmem:[%s265 + $0x30] sm:$0xff] %v2201
        %2218 = vst [vmem:[%s265 + $0x38] sm:$0xff] %v2202
        %2219 = vst [vmem:[%s265 + $0x40] sm:$0xff] %v2203
        %2220 = vst [vmem:[%s265 + $0x48] sm:$0xff] %v2204
        %2221 = vst [vmem:[%s265 + $0x50] sm:$0xff] %v2205
        %2222 = vst [vmem:[%s265 + $0x58] sm:$0xff] %v2206
        %2223 = vst [vmem:[%s265 + $0x60] sm:$0xff] %v2207
        %2224 = vst [vmem:[%s265 + $0x68] sm:$0xff] %v2208
        %2225 = vst [vmem:[%s265 + $0x70] sm:$0xff] %v2209
        %2226 = vst [vmem:[%s265 + $0x78] sm:$0xff] %v2210
        %p2227 = scmp.eq.s32.totalorder %s25, 7
        // Predicated region
        $region49: #{lstm_anno_forward.2} parent=31 // pred_check
          %p2228 = pneg %p2227
        $region50: #{lstm_anno_forward.2} parent=31 // pred_check_branch
          %2230 = sbr.rel (%p2228) target = $region52
        $region51: #{lstm_anno_forward.2} parent=31 // pred_region
          %v2231 = vld [vmem:[%s265] sm:$0xff]
          %v2232 = vld [vmem:[%s265 + $0x8] sm:$0xff]
          %v2233 = vld [vmem:[%s265 + $0x10] sm:$0xff]
          %v2234 = vld [vmem:[%s265 + $0x18] sm:$0xff]
          %v2235 = vld [vmem:[%s265 + $0x20] sm:$0xff]
          %v2236 = vld [vmem:[%s265 + $0x28] sm:$0xff]
          %v2237 = vld [vmem:[%s265 + $0x30] sm:$0xff]
          %v2238 = vld [vmem:[%s265 + $0x38] sm:$0xff]
          %v2239 = vld [vmem:[%s265 + $0x40] sm:$0xff]
          %v2240 = vld [vmem:[%s265 + $0x48] sm:$0xff]
          %v2241 = vld [vmem:[%s265 + $0x50] sm:$0xff]
          %v2242 = vld [vmem:[%s265 + $0x58] sm:$0xff]
          %v2243 = vld [vmem:[%s265 + $0x60] sm:$0xff]
          %v2244 = vld [vmem:[%s265 + $0x68] sm:$0xff]
          %v2245 = vld [vmem:[%s265 + $0x70] sm:$0xff]
          %v2246 = vld [vmem:[%s265 + $0x78] sm:$0xff]
          %v2247 = vld [vmem:[#allocation6] sm:$0xff]
          %v2249 = vlaneseq
          %v2250 = vshrl.u32 %v2249, 7
          %v2251 = vsub.s32 0, %v2250
          %v2252 = vrot.slane %v2247, %v2251
          %v2253 = vlaneseq
          %v2254 = vshrl.u32 %v2253, 7
          %v2255 = vsub.s32 1, %v2254
          %v2256 = vrot.slane %v2247, %v2255
          %v2257 = vlaneseq
          %v2258 = vshrl.u32 %v2257, 7
          %v2259 = vsub.s32 2, %v2258
          %v2260 = vrot.slane %v2247, %v2259
          %v2261 = vlaneseq
          %v2262 = vshrl.u32 %v2261, 7
          %v2263 = vsub.s32 3, %v2262
          %v2264 = vrot.slane %v2247, %v2263
          %v2265 = vlaneseq
          %v2266 = vshrl.u32 %v2265, 7
          %v2267 = vsub.s32 4, %v2266
          %v2268 = vrot.slane %v2247, %v2267
          %v2269 = vlaneseq
          %v2270 = vshrl.u32 %v2269, 7
          %v2271 = vsub.s32 5, %v2270
          %v2272 = vrot.slane %v2247, %v2271
          %v2273 = vlaneseq
          %v2274 = vshrl.u32 %v2273, 7
          %v2275 = vsub.s32 6, %v2274
          %v2276 = vrot.slane %v2247, %v2275
          %v2277 = vlaneseq
          %v2278 = vshrl.u32 %v2277, 7
          %v2279 = vsub.s32 7, %v2278
          %v2280 = vrot.slane %v2247, %v2279
          %v2289 = vadd.f32 %v2231, %v2252
          %v2290 = vadd.f32 %v2232, %v2256
          %v2291 = vadd.f32 %v2233, %v2260
          %v2292 = vadd.f32 %v2234, %v2264
          %v2293 = vadd.f32 %v2235, %v2268
          %v2294 = vadd.f32 %v2236, %v2272
          %v2295 = vadd.f32 %v2237, %v2276
          %v2296 = vadd.f32 %v2238, %v2280
          %v2297 = vadd.f32 %v2239, %v2252
          %v2298 = vadd.f32 %v2240, %v2256
          %v2299 = vadd.f32 %v2241, %v2260
          %v2300 = vadd.f32 %v2242, %v2264
          %v2301 = vadd.f32 %v2243, %v2268
          %v2302 = vadd.f32 %v2244, %v2272
          %v2303 = vadd.f32 %v2245, %v2276
          %v2304 = vadd.f32 %v2246, %v2280
          %2305 = vst [vmem:[%s265] sm:$0xff] %v2289
          %2306 = vst [vmem:[%s265 + $0x8] sm:$0xff] %v2290
          %2307 = vst [vmem:[%s265 + $0x10] sm:$0xff] %v2291
          %2308 = vst [vmem:[%s265 + $0x18] sm:$0xff] %v2292
          %2309 = vst [vmem:[%s265 + $0x20] sm:$0xff] %v2293
          %2310 = vst [vmem:[%s265 + $0x28] sm:$0xff] %v2294
          %2311 = vst [vmem:[%s265 + $0x30] sm:$0xff] %v2295
          %2312 = vst [vmem:[%s265 + $0x38] sm:$0xff] %v2296
          %2313 = vst [vmem:[%s265 + $0x40] sm:$0xff] %v2297
          %2314 = vst [vmem:[%s265 + $0x48] sm:$0xff] %v2298
          %2315 = vst [vmem:[%s265 + $0x50] sm:$0xff] %v2299
          %2316 = vst [vmem:[%s265 + $0x58] sm:$0xff] %v2300
          %2317 = vst [vmem:[%s265 + $0x60] sm:$0xff] %v2301
          %2318 = vst [vmem:[%s265 + $0x68] sm:$0xff] %v2302
          %2319 = vst [vmem:[%s265 + $0x70] sm:$0xff] %v2303
          %2320 = vst [vmem:[%s265 + $0x78] sm:$0xff] %v2304
        $region52: #{lstm_anno_forward.2} parent=31 // pred_fallthru
          _
        %s2321 = smul.u32 2, %s24
        %p2322 = scmp.lt.s32.totalorder %s2321, 1
        %s2323 = scalar_select %p2322, %s2321, 1
        %s2324 = smul.addr %s2323, 8
        %s2325 = smul.addr %s2324, 8
        %s2326 = scalar_lea.vmem %s3, %s2325
        // Predicated region
        $region53: #{lstm_anno_forward.2} parent=31 // pred_check
          %p2327 = pneg %p125
        $region54: #{lstm_anno_forward.2} parent=31 // pred_check_branch
          %2329 = sbr.rel (%p2327) target = $region56
        $region55: #{lstm_anno_forward.2} parent=31 // pred_region
          %s2330 = smul.u32 2, %s24
        $region56: #{lstm_anno_forward.2} parent=31 // pred_fallthru
          _
        // Predicated region
        $region57: #{lstm_anno_forward.2} parent=31 // pred_check
          %p2331 = pneg %p125
        $region58: #{lstm_anno_forward.2} parent=31 // pred_check_branch
          %2333 = sbr.rel (%p2331) target = $region60
        $region59: #{lstm_anno_forward.2} parent=31 // pred_region
          %s2334 = smul.u32 2, %s24
          %p2335 = scmp.lt.s32.totalorder %s2334, 1
          %s2336 = scalar_select %p2335, %s2334, 1
          %s2337 = smul.addr %s2336, 8
          %s2338 = smul.addr %s2337, 8
          %s2339 = scalar_lea.vmem %s3, %s2338
        $region60: #{lstm_anno_forward.2} parent=31 // pred_fallthru
          _
      $region32: #{lstm_anno_forward.2} parent=5 // pred_fallthru
        _
      %p2340 = scmp.le.s32.totalorder 2, %s15
      // Predicated region
      $region61: #{lstm_anno_forward.2} parent=5 // pred_check
        %p2341 = pneg %p2340
      $region62: #{lstm_anno_forward.2} parent=5 // pred_check_branch
        %2343 = sbr.rel (%p2341) target = $region64
      $region63: #{lstm_anno_forward.2} parent=5 // pred_region
        %s2344 = ssub.s32 %s15, 2
      $region64: #{lstm_anno_forward.2} parent=5 // pred_fallthru
        _
    $region6: #{lstm_anno_forward.2} parent=1 // loop_footer
      %s19 = sadd.s32 1, %s15
    $region7: #{lstm_anno_forward.2} parent=1 // loop_footer_branch
      %14 = sbr.rel target = $region3
    $region8: #{lstm_anno_forward.2} parent=1 // loop_exit
      _
    %2345 = vsyncpa [#allocation3], 1
    %s2346 = scalar_lea.sflag [#allocation3], 1
    %2347 = vsyncpa %s2346, 1
    %2348 = vsyncpa [#allocation5], 1
    %s2349 = scalar_lea.sflag [#allocation5], 1
    %2350 = vsyncpa %s2349, 1

// kernel: lstm_anno_forward.3
$region0: #{lstm_anno_forward.3}
  #allocation0 [shape = 'u32[]', space=smem, size = 0x4, offset = 0x4, fixed_abs, tag = 'smem constant byte address 0x4 - core index']
  #allocation1 [shape = 'u32[144,128]{1,0:T(1,128)}', space=vmem, size = 0x12000, scoped, tag = 'internal scratch']
  #allocation2 [shape = 'f32[2,256]{1,0:T(2,128)}', space=vmem, size = 0x800, scoped, tag = 'scratch operand']
  #allocation3 [shape = 'f32[2,256]{1,0:T(2,128)}', space=vmem, size = 0x800, scoped, tag = 'scratch operand']
  #allocation4 [shape = 'f32[1,1]{1,0:T(1,128)S(1)}', space=vmem, size = 0x200, scoped, tag = 'scoped memory for lstm_anno_forward.3']
  %s0 = inlined_call_operand.vmem [shape: f32[2,8,1024], index: 0, kind: input, shape index: {}]
  %s1 = inlined_call_operand.vmem [shape: f32[256,1024], index: 1, kind: input, shape index: {}]
  %s2 = inlined_call_operand.vmem [shape: f32[1,256], index: 2, kind: input, shape index: {}]
  %s3 = inlined_call_operand.<no memory space> [shape: f32[1,1], index: 3, kind: input, shape index: {}]
  %s4 = inlined_call_operand.vmem [shape: f32[2,1], index: 4, kind: output, shape index: {}]
  %s5 = sld [smem:[#allocation0]]
  $region34: #{lstm_anno_forward.3} parent=0
    _
  %s7 = ssub.s32 1, %s5
  %s8 = scalar_select 0, %s7, %s5
  %v9 = vstv %s3
  %10 = vst [vmem:[#allocation4] sm:$0x1] %v9
  // Predicated region
  $region2: #{lstm_anno_forward.3} parent=0 // pred_check
    _
  $region3: #{lstm_anno_forward.3} parent=0 // pred_check_branch
    %12 = sbr.rel (0) target = $region5
  $region4: #{lstm_anno_forward.3} parent=0 // pred_region
    _
  $region5: #{lstm_anno_forward.3} parent=0 // pred_fallthru
    _
  // Predicated region
  $region6: #{lstm_anno_forward.3} parent=0 // pred_check
    _
  $region7: #{lstm_anno_forward.3} parent=0 // pred_check_branch
    %14 = sbr.rel (0) target = $region9
  $region8: #{lstm_anno_forward.3} parent=0 // pred_region
    _
  $region9: #{lstm_anno_forward.3} parent=0 // pred_fallthru
    _
  // Predicated region
  $region10: #{lstm_anno_forward.3} parent=0 // pred_check
    _
  $region11: #{lstm_anno_forward.3} parent=0 // pred_check_branch
    %16 = sbr.rel (0) target = $region13
  $region12: #{lstm_anno_forward.3} parent=0 // pred_region
    _
  $region13: #{lstm_anno_forward.3} parent=0 // pred_fallthru
    _
  // Predicated region
  $region14: #{lstm_anno_forward.3} parent=0 // pred_check
    _
  $region15: #{lstm_anno_forward.3} parent=0 // pred_check_branch
    %18 = sbr.rel (0) target = $region17
  $region16: #{lstm_anno_forward.3} parent=0 // pred_region
    _
  $region17: #{lstm_anno_forward.3} parent=0 // pred_fallthru
    _
  %p19 = scmp.eq.s32.totalorder 0, 0
  // Predicated region
  $region18: #{lstm_anno_forward.3} parent=0 // pred_check
    %p20 = pneg %p19
  $region19: #{lstm_anno_forward.3} parent=0 // pred_check_branch
    %22 = sbr.rel (%p20) target = $region21
  $region20: #{lstm_anno_forward.3} parent=0 // pred_region
    %23 = vst [vmem:[#allocation2] sm:$0xf] 0.0
    %24 = vst [vmem:[#allocation3] sm:$0xf] 0.0
  $region21: #{lstm_anno_forward.3} parent=0 // pred_fallthru
    _
  %v25 = vld [vmem:[#allocation2] sm:$0xf]
  %v26 = vld [vmem:[#allocation3] sm:$0xf]
  %v27 = vld [vmem:[%s0] ss:$8 sm:$0xf]
  %v28 = vld [vmem:[%s0] ss:$8 sm:$0xf0]
  %v29 = vor.u32 %v27, %v28
  %s30 = scalar_lea.vmem %s0, 64
  %v31 = vld [vmem:[%s30] ss:$8 sm:$0xf]
  %v32 = vld [vmem:[%s30] ss:$8 sm:$0xf0]
  %v33 = vor.u32 %v31, %v32
  %v34 = vld [vmem:[%s1] sm:$0xff]
  %v35 = vld [vmem:[%s1 + $0x8] sm:$0xff]
  %v36 = vld [vmem:[%s1 + $0x10] sm:$0xff]
  %v37 = vld [vmem:[%s1 + $0x18] sm:$0xff]
  %v38 = vld [vmem:[%s1 + $0x20] sm:$0xff]
  %v39 = vld [vmem:[%s1 + $0x28] sm:$0xff]
  %v40 = vld [vmem:[%s1 + $0x30] sm:$0xff]
  %v41 = vld [vmem:[%s1 + $0x38] sm:$0xff]
  %v42 = vld [vmem:[%s1 + $0x40] sm:$0xff]
  %v43 = vld [vmem:[%s1 + $0x48] sm:$0xff]
  %v44 = vld [vmem:[%s1 + $0x50] sm:$0xff]
  %v45 = vld [vmem:[%s1 + $0x58] sm:$0xff]
  %v46 = vld [vmem:[%s1 + $0x60] sm:$0xff]
  %v47 = vld [vmem:[%s1 + $0x68] sm:$0xff]
  %v48 = vld [vmem:[%s1 + $0x70] sm:$0xff]
  %v49 = vld [vmem:[%s1 + $0x78] sm:$0xff]
  %v50 = vld [vmem:[%s1 + $0x80] sm:$0xff]
  %v51 = vld [vmem:[%s1 + $0x88] sm:$0xff]
  %v52 = vld [vmem:[%s1 + $0x90] sm:$0xff]
  %v53 = vld [vmem:[%s1 + $0x98] sm:$0xff]
  %v54 = vld [vmem:[%s1 + $0xa0] sm:$0xff]
  %v55 = vld [vmem:[%s1 + $0xa8] sm:$0xff]
  %v56 = vld [vmem:[%s1 + $0xb0] sm:$0xff]
  %v57 = vld [vmem:[%s1 + $0xb8] sm:$0xff]
  %v58 = vld [vmem:[%s1 + $0xc0] sm:$0xff]
  %v59 = vld [vmem:[%s1 + $0xc8] sm:$0xff]
  %v60 = vld [vmem:[%s1 + $0xd0] sm:$0xff]
  %v61 = vld [vmem:[%s1 + $0xd8] sm:$0xff]
  %v62 = vld [vmem:[%s1 + $0xe0] sm:$0xff]
  %v63 = vld [vmem:[%s1 + $0xe8] sm:$0xff]
  %v64 = vld [vmem:[%s1 + $0xf0] sm:$0xff]
  %v65 = vld [vmem:[%s1 + $0xf8] sm:$0xff]
  %v66 = vld [vmem:[%s1 + $0x100] sm:$0xff]
  %v67 = vld [vmem:[%s1 + $0x108] sm:$0xff]
  %v68 = vld [vmem:[%s1 + $0x110] sm:$0xff]
  %v69 = vld [vmem:[%s1 + $0x118] sm:$0xff]
  %v70 = vld [vmem:[%s1 + $0x120] sm:$0xff]
  %v71 = vld [vmem:[%s1 + $0x128] sm:$0xff]
  %v72 = vld [vmem:[%s1 + $0x130] sm:$0xff]
  %v73 = vld [vmem:[%s1 + $0x138] sm:$0xff]
  %v74 = vld [vmem:[%s1 + $0x140] sm:$0xff]
  %v75 = vld [vmem:[%s1 + $0x148] sm:$0xff]
  %v76 = vld [vmem:[%s1 + $0x150] sm:$0xff]
  %v77 = vld [vmem:[%s1 + $0x158] sm:$0xff]
  %v78 = vld [vmem:[%s1 + $0x160] sm:$0xff]
  %v79 = vld [vmem:[%s1 + $0x168] sm:$0xff]
  %v80 = vld [vmem:[%s1 + $0x170] sm:$0xff]
  %v81 = vld [vmem:[%s1 + $0x178] sm:$0xff]
  %v82 = vld [vmem:[%s1 + $0x180] sm:$0xff]
  %v83 = vld [vmem:[%s1 + $0x188] sm:$0xff]
  %v84 = vld [vmem:[%s1 + $0x190] sm:$0xff]
  %v85 = vld [vmem:[%s1 + $0x198] sm:$0xff]
  %v86 = vld [vmem:[%s1 + $0x1a0] sm:$0xff]
  %v87 = vld [vmem:[%s1 + $0x1a8] sm:$0xff]
  %v88 = vld [vmem:[%s1 + $0x1b0] sm:$0xff]
  %v89 = vld [vmem:[%s1 + $0x1b8] sm:$0xff]
  %v90 = vld [vmem:[%s1 + $0x1c0] sm:$0xff]
  %v91 = vld [vmem:[%s1 + $0x1c8] sm:$0xff]
  %v92 = vld [vmem:[%s1 + $0x1d0] sm:$0xff]
  %v93 = vld [vmem:[%s1 + $0x1d8] sm:$0xff]
  %v94 = vld [vmem:[%s1 + $0x1e0] sm:$0xff]
  %v95 = vld [vmem:[%s1 + $0x1e8] sm:$0xff]
  %v96 = vld [vmem:[%s1 + $0x1f0] sm:$0xff]
  %v97 = vld [vmem:[%s1 + $0x1f8] sm:$0xff]
  %v98 = vld [vmem:[%s1 + $0x200] sm:$0xff]
  %v99 = vld [vmem:[%s1 + $0x208] sm:$0xff]
  %v100 = vld [vmem:[%s1 + $0x210] sm:$0xff]
  %v101 = vld [vmem:[%s1 + $0x218] sm:$0xff]
  %v102 = vld [vmem:[%s1 + $0x220] sm:$0xff]
  %v103 = vld [vmem:[%s1 + $0x228] sm:$0xff]
  %v104 = vld [vmem:[%s1 + $0x230] sm:$0xff]
  %v105 = vld [vmem:[%s1 + $0x238] sm:$0xff]
  %v106 = vld [vmem:[%s1 + $0x240] sm:$0xff]
  %v107 = vld [vmem:[%s1 + $0x248] sm:$0xff]
  %v108 = vld [vmem:[%s1 + $0x250] sm:$0xff]
  %v109 = vld [vmem:[%s1 + $0x258] sm:$0xff]
  %v110 = vld [vmem:[%s1 + $0x260] sm:$0xff]
  %v111 = vld [vmem:[%s1 + $0x268] sm:$0xff]
  %v112 = vld [vmem:[%s1 + $0x270] sm:$0xff]
  %v113 = vld [vmem:[%s1 + $0x278] sm:$0xff]
  %v114 = vld [vmem:[%s1 + $0x280] sm:$0xff]
  %v115 = vld [vmem:[%s1 + $0x288] sm:$0xff]
  %v116 = vld [vmem:[%s1 + $0x290] sm:$0xff]
  %v117 = vld [vmem:[%s1 + $0x298] sm:$0xff]
  %v118 = vld [vmem:[%s1 + $0x2a0] sm:$0xff]
  %v119 = vld [vmem:[%s1 + $0x2a8] sm:$0xff]
  %v120 = vld [vmem:[%s1 + $0x2b0] sm:$0xff]
  %v121 = vld [vmem:[%s1 + $0x2b8] sm:$0xff]
  %v122 = vld [vmem:[%s1 + $0x2c0] sm:$0xff]
  %v123 = vld [vmem:[%s1 + $0x2c8] sm:$0xff]
  %v124 = vld [vmem:[%s1 + $0x2d0] sm:$0xff]
  %v125 = vld [vmem:[%s1 + $0x2d8] sm:$0xff]
  %v126 = vld [vmem:[%s1 + $0x2e0] sm:$0xff]
  %v127 = vld [vmem:[%s1 + $0x2e8] sm:$0xff]
  %v128 = vld [vmem:[%s1 + $0x2f0] sm:$0xff]
  %v129 = vld [vmem:[%s1 + $0x2f8] sm:$0xff]
  %v130 = vld [vmem:[%s1 + $0x300] sm:$0xff]
  %v131 = vld [vmem:[%s1 + $0x308] sm:$0xff]
  %v132 = vld [vmem:[%s1 + $0x310] sm:$0xff]
  %v133 = vld [vmem:[%s1 + $0x318] sm:$0xff]
  %v134 = vld [vmem:[%s1 + $0x320] sm:$0xff]
  %v135 = vld [vmem:[%s1 + $0x328] sm:$0xff]
  %v136 = vld [vmem:[%s1 + $0x330] sm:$0xff]
  %v137 = vld [vmem:[%s1 + $0x338] sm:$0xff]
  %v138 = vld [vmem:[%s1 + $0x340] sm:$0xff]
  %v139 = vld [vmem:[%s1 + $0x348] sm:$0xff]
  %v140 = vld [vmem:[%s1 + $0x350] sm:$0xff]
  %v141 = vld [vmem:[%s1 + $0x358] sm:$0xff]
  %v142 = vld [vmem:[%s1 + $0x360] sm:$0xff]
  %v143 = vld [vmem:[%s1 + $0x368] sm:$0xff]
  %v144 = vld [vmem:[%s1 + $0x370] sm:$0xff]
  %v145 = vld [vmem:[%s1 + $0x378] sm:$0xff]
  %v146 = vld [vmem:[%s1 + $0x380] sm:$0xff]
  %v147 = vld [vmem:[%s1 + $0x388] sm:$0xff]
  %v148 = vld [vmem:[%s1 + $0x390] sm:$0xff]
  %v149 = vld [vmem:[%s1 + $0x398] sm:$0xff]
  %v150 = vld [vmem:[%s1 + $0x3a0] sm:$0xff]
  %v151 = vld [vmem:[%s1 + $0x3a8] sm:$0xff]
  %v152 = vld [vmem:[%s1 + $0x3b0] sm:$0xff]
  %v153 = vld [vmem:[%s1 + $0x3b8] sm:$0xff]
  %v154 = vld [vmem:[%s1 + $0x3c0] sm:$0xff]
  %v155 = vld [vmem:[%s1 + $0x3c8] sm:$0xff]
  %v156 = vld [vmem:[%s1 + $0x3d0] sm:$0xff]
  %v157 = vld [vmem:[%s1 + $0x3d8] sm:$0xff]
  %v158 = vld [vmem:[%s1 + $0x3e0] sm:$0xff]
  %v159 = vld [vmem:[%s1 + $0x3e8] sm:$0xff]
  %v160 = vld [vmem:[%s1 + $0x3f0] sm:$0xff]
  %v161 = vld [vmem:[%s1 + $0x3f8] sm:$0xff]
  %v162 = vld [vmem:[%s1 + $0x400] sm:$0xff]
  %v163 = vld [vmem:[%s1 + $0x408] sm:$0xff]
  %v164 = vld [vmem:[%s1 + $0x410] sm:$0xff]
  %v165 = vld [vmem:[%s1 + $0x418] sm:$0xff]
  %v166 = vld [vmem:[%s1 + $0x420] sm:$0xff]
  %v167 = vld [vmem:[%s1 + $0x428] sm:$0xff]
  %v168 = vld [vmem:[%s1 + $0x430] sm:$0xff]
  %v169 = vld [vmem:[%s1 + $0x438] sm:$0xff]
  %v170 = vld [vmem:[%s1 + $0x440] sm:$0xff]
  %v171 = vld [vmem:[%s1 + $0x448] sm:$0xff]
  %v172 = vld [vmem:[%s1 + $0x450] sm:$0xff]
  %v173 = vld [vmem:[%s1 + $0x458] sm:$0xff]
  %v174 = vld [vmem:[%s1 + $0x460] sm:$0xff]
  %v175 = vld [vmem:[%s1 + $0x468] sm:$0xff]
  %v176 = vld [vmem:[%s1 + $0x470] sm:$0xff]
  %v177 = vld [vmem:[%s1 + $0x478] sm:$0xff]
  %v178 = vld [vmem:[%s1 + $0x480] sm:$0xff]
  %v179 = vld [vmem:[%s1 + $0x488] sm:$0xff]
  %v180 = vld [vmem:[%s1 + $0x490] sm:$0xff]
  %v181 = vld [vmem:[%s1 + $0x498] sm:$0xff]
  %v182 = vld [vmem:[%s1 + $0x4a0] sm:$0xff]
  %v183 = vld [vmem:[%s1 + $0x4a8] sm:$0xff]
  %v184 = vld [vmem:[%s1 + $0x4b0] sm:$0xff]
  %v185 = vld [vmem:[%s1 + $0x4b8] sm:$0xff]
  %v186 = vld [vmem:[%s1 + $0x4c0] sm:$0xff]
  %v187 = vld [vmem:[%s1 + $0x4c8] sm:$0xff]
  %v188 = vld [vmem:[%s1 + $0x4d0] sm:$0xff]
  %v189 = vld [vmem:[%s1 + $0x4d8] sm:$0xff]
  %v190 = vld [vmem:[%s1 + $0x4e0] sm:$0xff]
  %v191 = vld [vmem:[%s1 + $0x4e8] sm:$0xff]
  %v192 = vld [vmem:[%s1 + $0x4f0] sm:$0xff]
  %v193 = vld [vmem:[%s1 + $0x4f8] sm:$0xff]
  %v194 = vld [vmem:[%s1 + $0x500] sm:$0xff]
  %v195 = vld [vmem:[%s1 + $0x508] sm:$0xff]
  %v196 = vld [vmem:[%s1 + $0x510] sm:$0xff]
  %v197 = vld [vmem:[%s1 + $0x518] sm:$0xff]
  %v198 = vld [vmem:[%s1 + $0x520] sm:$0xff]
  %v199 = vld [vmem:[%s1 + $0x528] sm:$0xff]
  %v200 = vld [vmem:[%s1 + $0x530] sm:$0xff]
  %v201 = vld [vmem:[%s1 + $0x538] sm:$0xff]
  %v202 = vld [vmem:[%s1 + $0x540] sm:$0xff]
  %v203 = vld [vmem:[%s1 + $0x548] sm:$0xff]
  %v204 = vld [vmem:[%s1 + $0x550] sm:$0xff]
  %v205 = vld [vmem:[%s1 + $0x558] sm:$0xff]
  %v206 = vld [vmem:[%s1 + $0x560] sm:$0xff]
  %v207 = vld [vmem:[%s1 + $0x568] sm:$0xff]
  %v208 = vld [vmem:[%s1 + $0x570] sm:$0xff]
  %v209 = vld [vmem:[%s1 + $0x578] sm:$0xff]
  %v210 = vld [vmem:[%s1 + $0x580] sm:$0xff]
  %v211 = vld [vmem:[%s1 + $0x588] sm:$0xff]
  %v212 = vld [vmem:[%s1 + $0x590] sm:$0xff]
  %v213 = vld [vmem:[%s1 + $0x598] sm:$0xff]
  %v214 = vld [vmem:[%s1 + $0x5a0] sm:$0xff]
  %v215 = vld [vmem:[%s1 + $0x5a8] sm:$0xff]
  %v216 = vld [vmem:[%s1 + $0x5b0] sm:$0xff]
  %v217 = vld [vmem:[%s1 + $0x5b8] sm:$0xff]
  %v218 = vld [vmem:[%s1 + $0x5c0] sm:$0xff]
  %v219 = vld [vmem:[%s1 + $0x5c8] sm:$0xff]
  %v220 = vld [vmem:[%s1 + $0x5d0] sm:$0xff]
  %v221 = vld [vmem:[%s1 + $0x5d8] sm:$0xff]
  %v222 = vld [vmem:[%s1 + $0x5e0] sm:$0xff]
  %v223 = vld [vmem:[%s1 + $0x5e8] sm:$0xff]
  %v224 = vld [vmem:[%s1 + $0x5f0] sm:$0xff]
  %v225 = vld [vmem:[%s1 + $0x5f8] sm:$0xff]
  %v226 = vld [vmem:[%s1 + $0x600] sm:$0xff]
  %v227 = vld [vmem:[%s1 + $0x608] sm:$0xff]
  %v228 = vld [vmem:[%s1 + $0x610] sm:$0xff]
  %v229 = vld [vmem:[%s1 + $0x618] sm:$0xff]
  %v230 = vld [vmem:[%s1 + $0x620] sm:$0xff]
  %v231 = vld [vmem:[%s1 + $0x628] sm:$0xff]
  %v232 = vld [vmem:[%s1 + $0x630] sm:$0xff]
  %v233 = vld [vmem:[%s1 + $0x638] sm:$0xff]
  %v234 = vld [vmem:[%s1 + $0x640] sm:$0xff]
  %v235 = vld [vmem:[%s1 + $0x648] sm:$0xff]
  %v236 = vld [vmem:[%s1 + $0x650] sm:$0xff]
  %v237 = vld [vmem:[%s1 + $0x658] sm:$0xff]
  %v238 = vld [vmem:[%s1 + $0x660] sm:$0xff]
  %v239 = vld [vmem:[%s1 + $0x668] sm:$0xff]
  %v240 = vld [vmem:[%s1 + $0x670] sm:$0xff]
  %v241 = vld [vmem:[%s1 + $0x678] sm:$0xff]
  %v242 = vld [vmem:[%s1 + $0x680] sm:$0xff]
  %v243 = vld [vmem:[%s1 + $0x688] sm:$0xff]
  %v244 = vld [vmem:[%s1 + $0x690] sm:$0xff]
  %v245 = vld [vmem:[%s1 + $0x698] sm:$0xff]
  %v246 = vld [vmem:[%s1 + $0x6a0] sm:$0xff]
  %v247 = vld [vmem:[%s1 + $0x6a8] sm:$0xff]
  %v248 = vld [vmem:[%s1 + $0x6b0] sm:$0xff]
  %v249 = vld [vmem:[%s1 + $0x6b8] sm:$0xff]
  %v250 = vld [vmem:[%s1 + $0x6c0] sm:$0xff]
  %v251 = vld [vmem:[%s1 + $0x6c8] sm:$0xff]
  %v252 = vld [vmem:[%s1 + $0x6d0] sm:$0xff]
  %v253 = vld [vmem:[%s1 + $0x6d8] sm:$0xff]
  %v254 = vld [vmem:[%s1 + $0x6e0] sm:$0xff]
  %v255 = vld [vmem:[%s1 + $0x6e8] sm:$0xff]
  %v256 = vld [vmem:[%s1 + $0x6f0] sm:$0xff]
  %v257 = vld [vmem:[%s1 + $0x6f8] sm:$0xff]
  %v258 = vld [vmem:[%s1 + $0x700] sm:$0xff]
  %v259 = vld [vmem:[%s1 + $0x708] sm:$0xff]
  %v260 = vld [vmem:[%s1 + $0x710] sm:$0xff]
  %v261 = vld [vmem:[%s1 + $0x718] sm:$0xff]
  %v262 = vld [vmem:[%s1 + $0x720] sm:$0xff]
  %v263 = vld [vmem:[%s1 + $0x728] sm:$0xff]
  %v264 = vld [vmem:[%s1 + $0x730] sm:$0xff]
  %v265 = vld [vmem:[%s1 + $0x738] sm:$0xff]
  %v266 = vld [vmem:[%s1 + $0x740] sm:$0xff]
  %v267 = vld [vmem:[%s1 + $0x748] sm:$0xff]
  %v268 = vld [vmem:[%s1 + $0x750] sm:$0xff]
  %v269 = vld [vmem:[%s1 + $0x758] sm:$0xff]
  %v270 = vld [vmem:[%s1 + $0x760] sm:$0xff]
  %v271 = vld [vmem:[%s1 + $0x768] sm:$0xff]
  %v272 = vld [vmem:[%s1 + $0x770] sm:$0xff]
  %v273 = vld [vmem:[%s1 + $0x778] sm:$0xff]
  %v274 = vld [vmem:[%s1 + $0x780] sm:$0xff]
  %v275 = vld [vmem:[%s1 + $0x788] sm:$0xff]
  %v276 = vld [vmem:[%s1 + $0x790] sm:$0xff]
  %v277 = vld [vmem:[%s1 + $0x798] sm:$0xff]
  %v278 = vld [vmem:[%s1 + $0x7a0] sm:$0xff]
  %v279 = vld [vmem:[%s1 + $0x7a8] sm:$0xff]
  %v280 = vld [vmem:[%s1 + $0x7b0] sm:$0xff]
  %v281 = vld [vmem:[%s1 + $0x7b8] sm:$0xff]
  %v282 = vld [vmem:[%s1 + $0x7c0] sm:$0xff]
  %v283 = vld [vmem:[%s1 + $0x7c8] sm:$0xff]
  %v284 = vld [vmem:[%s1 + $0x7d0] sm:$0xff]
  %v285 = vld [vmem:[%s1 + $0x7d8] sm:$0xff]
  %v286 = vld [vmem:[%s1 + $0x7e0] sm:$0xff]
  %v287 = vld [vmem:[%s1 + $0x7e8] sm:$0xff]
  %v288 = vld [vmem:[%s1 + $0x7f0] sm:$0xff]
  %v289 = vld [vmem:[%s1 + $0x7f8] sm:$0xff]
  %v292 = vunpack.c.l.s4 1983009808
  %v293 = vunpack.c.0.s8 %v292
  %v294 = vlaneseq
  %v295 = vshrl.u32 %v294, 7
  %v296 = vsub.s32 %v293, %v295
  %v297 = vrot.slane %v25, %v296
  %v298 = vcombine.high %v297, %v297
  %301 = vmatprep.subr.mxu0 %v35
  %302 = vmatpush1.msra.mxu0 %v34
  %303 = vmatprep.subr.mxu0 %v43
  %304 = vmatpush1.msra.mxu0 %v42
  %305 = vmatprep.subr.mxu0 %v51
  %306 = vmatpush1.msra.mxu0 %v50
  %307 = vmatprep.subr.mxu0 %v59
  %308 = vmatpush1.msra.mxu0 %v58
  %309 = vmatprep.subr.mxu0 %v67
  %310 = vmatpush1.msra.mxu0 %v66
  %311 = vmatprep.subr.mxu0 %v75
  %312 = vmatpush1.msra.mxu0 %v74
  %313 = vmatprep.subr.mxu0 %v83
  %314 = vmatpush1.msra.mxu0 %v82
  %315 = vmatprep.subr.mxu0 %v91
  %316 = vmatpush1.msra.mxu0 %v90
  %317 = vmatprep.subr.mxu0 %v99
  %318 = vmatpush1.msra.mxu0 %v98
  %319 = vmatprep.subr.mxu0 %v107
  %320 = vmatpush1.msra.mxu0 %v106
  %321 = vmatprep.subr.mxu0 %v115
  %322 = vmatpush1.msra.mxu0 %v114
  %323 = vmatprep.subr.mxu0 %v123
  %324 = vmatpush1.msra.mxu0 %v122
  %325 = vmatprep.subr.mxu0 %v131
  %326 = vmatpush1.msra.mxu0 %v130
  %327 = vmatprep.subr.mxu0 %v139
  %328 = vmatpush1.msra.mxu0 %v138
  %329 = vmatprep.subr.mxu0 %v147
  %330 = vmatpush1.msra.mxu0 %v146
  %331 = vmatprep.subr.mxu0 %v155
  %332 = vmatpush1.msra.mxu0 %v154
  %333 = vmatprep.subr.mxu0 %v163
  %334 = vmatpush1.msra.mxu0 %v162
  %335 = vmatprep.subr.mxu0 %v171
  %336 = vmatpush1.msra.mxu0 %v170
  %337 = vmatprep.subr.mxu0 %v179
  %338 = vmatpush1.msra.mxu0 %v178
  %339 = vmatprep.subr.mxu0 %v187
  %340 = vmatpush1.msra.mxu0 %v186
  %341 = vmatprep.subr.mxu0 %v195
  %342 = vmatpush1.msra.mxu0 %v194
  %343 = vmatprep.subr.mxu0 %v203
  %344 = vmatpush1.msra.mxu0 %v202
  %345 = vmatprep.subr.mxu0 %v211
  %346 = vmatpush1.msra.mxu0 %v210
  %347 = vmatprep.subr.mxu0 %v219
  %348 = vmatpush1.msra.mxu0 %v218
  %349 = vmatprep.subr.mxu0 %v227
  %350 = vmatpush1.msra.mxu0 %v226
  %351 = vmatprep.subr.mxu0 %v235
  %352 = vmatpush1.msra.mxu0 %v234
  %353 = vmatprep.subr.mxu0 %v243
  %354 = vmatpush1.msra.mxu0 %v242
  %355 = vmatprep.subr.mxu0 %v251
  %356 = vmatpush1.msra.mxu0 %v250
  %357 = vmatprep.subr.mxu0 %v259
  %358 = vmatpush1.msra.mxu0 %v258
  %359 = vmatprep.subr.mxu0 %v267
  %360 = vmatpush1.msra.mxu0 %v266
  %361 = vmatprep.subr.mxu0 %v275
  %362 = vmatpush1.msra.mxu0 %v274
  %363 = vmatprep.subr.mxu0 %v283
  %364 = vmatpush1.msra.mxu0 %v282
  %365 = vmatprep.mubr.f32.mxu0 %v298
  %366 = vmatmul.mubr.f32.gmra.mrb[0].mxu0 %v297
  %v367 = vpop.f32.mrb[0].mxu0
  %v368 = vadd.f32 0.0, %v367
  %v369 = vpop.f32.mrb[0].mxu0
  %v370 = vadd.f32 0.0, %v369
  %371 = vdwg.mxu0
  %372 = vmatprep.subr.mxu0 %v37
  %373 = vmatpush1.msra.mxu0 %v36
  %374 = vmatprep.subr.mxu0 %v45
  %375 = vmatpush1.msra.mxu0 %v44
  %376 = vmatprep.subr.mxu0 %v53
  %377 = vmatpush1.msra.mxu0 %v52
  %378 = vmatprep.subr.mxu0 %v61
  %379 = vmatpush1.msra.mxu0 %v60
  %380 = vmatprep.subr.mxu0 %v69
  %381 = vmatpush1.msra.mxu0 %v68
  %382 = vmatprep.subr.mxu0 %v77
  %383 = vmatpush1.msra.mxu0 %v76
  %384 = vmatprep.subr.mxu0 %v85
  %385 = vmatpush1.msra.mxu0 %v84
  %386 = vmatprep.subr.mxu0 %v93
  %387 = vmatpush1.msra.mxu0 %v92
  %388 = vmatprep.subr.mxu0 %v101
  %389 = vmatpush1.msra.mxu0 %v100
  %390 = vmatprep.subr.mxu0 %v109
  %391 = vmatpush1.msra.mxu0 %v108
  %392 = vmatprep.subr.mxu0 %v117
  %393 = vmatpush1.msra.mxu0 %v116
  %394 = vmatprep.subr.mxu0 %v125
  %395 = vmatpush1.msra.mxu0 %v124
  %396 = vmatprep.subr.mxu0 %v133
  %397 = vmatpush1.msra.mxu0 %v132
  %398 = vmatprep.subr.mxu0 %v141
  %399 = vmatpush1.msra.mxu0 %v140
  %400 = vmatprep.subr.mxu0 %v149
  %401 = vmatpush1.msra.mxu0 %v148
  %402 = vmatprep.subr.mxu0 %v157
  %403 = vmatpush1.msra.mxu0 %v156
  %404 = vmatprep.subr.mxu0 %v165
  %405 = vmatpush1.msra.mxu0 %v164
  %406 = vmatprep.subr.mxu0 %v173
  %407 = vmatpush1.msra.mxu0 %v172
  %408 = vmatprep.subr.mxu0 %v181
  %409 = vmatpush1.msra.mxu0 %v180
  %410 = vmatprep.subr.mxu0 %v189
  %411 = vmatpush1.msra.mxu0 %v188
  %412 = vmatprep.subr.mxu0 %v197
  %413 = vmatpush1.msra.mxu0 %v196
  %414 = vmatprep.subr.mxu0 %v205
  %415 = vmatpush1.msra.mxu0 %v204
  %416 = vmatprep.subr.mxu0 %v213
  %417 = vmatpush1.msra.mxu0 %v212
  %418 = vmatprep.subr.mxu0 %v221
  %419 = vmatpush1.msra.mxu0 %v220
  %420 = vmatprep.subr.mxu0 %v229
  %421 = vmatpush1.msra.mxu0 %v228
  %422 = vmatprep.subr.mxu0 %v237
  %423 = vmatpush1.msra.mxu0 %v236
  %424 = vmatprep.subr.mxu0 %v245
  %425 = vmatpush1.msra.mxu0 %v244
  %426 = vmatprep.subr.mxu0 %v253
  %427 = vmatpush1.msra.mxu0 %v252
  %428 = vmatprep.subr.mxu0 %v261
  %429 = vmatpush1.msra.mxu0 %v260
  %430 = vmatprep.subr.mxu0 %v269
  %431 = vmatpush1.msra.mxu0 %v268
  %432 = vmatprep.subr.mxu0 %v277
  %433 = vmatpush1.msra.mxu0 %v276
  %434 = vmatprep.subr.mxu0 %v285
  %435 = vmatpush1.msra.mxu0 %v284
  %436 = vmatprep.mubr.f32.mxu0 %v298
  %437 = vmatmul.mubr.f32.gmra.mrb[0].mxu0 %v297
  %v438 = vpop.f32.mrb[0].mxu0
  %v439 = vadd.f32 0.0, %v438
  %v440 = vpop.f32.mrb[0].mxu0
  %v441 = vadd.f32 0.0, %v440
  %442 = vdwg.mxu0
  %443 = vmatprep.subr.mxu0 %v39
  %444 = vmatpush1.msra.mxu0 %v38
  %445 = vmatprep.subr.mxu0 %v47
  %446 = vmatpush1.msra.mxu0 %v46
  %447 = vmatprep.subr.mxu0 %v55
  %448 = vmatpush1.msra.mxu0 %v54
  %449 = vmatprep.subr.mxu0 %v63
  %450 = vmatpush1.msra.mxu0 %v62
  %451 = vmatprep.subr.mxu0 %v71
  %452 = vmatpush1.msra.mxu0 %v70
  %453 = vmatprep.subr.mxu0 %v79
  %454 = vmatpush1.msra.mxu0 %v78
  %455 = vmatprep.subr.mxu0 %v87
  %456 = vmatpush1.msra.mxu0 %v86
  %457 = vmatprep.subr.mxu0 %v95
  %458 = vmatpush1.msra.mxu0 %v94
  %459 = vmatprep.subr.mxu0 %v103
  %460 = vmatpush1.msra.mxu0 %v102
  %461 = vmatprep.subr.mxu0 %v111
  %462 = vmatpush1.msra.mxu0 %v110
  %463 = vmatprep.subr.mxu0 %v119
  %464 = vmatpush1.msra.mxu0 %v118
  %465 = vmatprep.subr.mxu0 %v127
  %466 = vmatpush1.msra.mxu0 %v126
  %467 = vmatprep.subr.mxu0 %v135
  %468 = vmatpush1.msra.mxu0 %v134
  %469 = vmatprep.subr.mxu0 %v143
  %470 = vmatpush1.msra.mxu0 %v142
  %471 = vmatprep.subr.mxu0 %v151
  %472 = vmatpush1.msra.mxu0 %v150
  %473 = vmatprep.subr.mxu0 %v159
  %474 = vmatpush1.msra.mxu0 %v158
  %475 = vmatprep.subr.mxu0 %v167
  %476 = vmatpush1.msra.mxu0 %v166
  %477 = vmatprep.subr.mxu0 %v175
  %478 = vmatpush1.msra.mxu0 %v174
  %479 = vmatprep.subr.mxu0 %v183
  %480 = vmatpush1.msra.mxu0 %v182
  %481 = vmatprep.subr.mxu0 %v191
  %482 = vmatpush1.msra.mxu0 %v190
  %483 = vmatprep.subr.mxu0 %v199
  %484 = vmatpush1.msra.mxu0 %v198
  %485 = vmatprep.subr.mxu0 %v207
  %486 = vmatpush1.msra.mxu0 %v206
  %487 = vmatprep.subr.mxu0 %v215
  %488 = vmatpush1.msra.mxu0 %v214
  %489 = vmatprep.subr.mxu0 %v223
  %490 = vmatpush1.msra.mxu0 %v222
  %491 = vmatprep.subr.mxu0 %v231
  %492 = vmatpush1.msra.mxu0 %v230
  %493 = vmatprep.subr.mxu0 %v239
  %494 = vmatpush1.msra.mxu0 %v238
  %495 = vmatprep.subr.mxu0 %v247
  %496 = vmatpush1.msra.mxu0 %v246
  %497 = vmatprep.subr.mxu0 %v255
  %498 = vmatpush1.msra.mxu0 %v254
  %499 = vmatprep.subr.mxu0 %v263
  %500 = vmatpush1.msra.mxu0 %v262
  %501 = vmatprep.subr.mxu0 %v271
  %502 = vmatpush1.msra.mxu0 %v270
  %503 = vmatprep.subr.mxu0 %v279
  %504 = vmatpush1.msra.mxu0 %v278
  %505 = vmatprep.subr.mxu0 %v287
  %506 = vmatpush1.msra.mxu0 %v286
  %507 = vmatprep.mubr.f32.mxu0 %v298
  %508 = vmatmul.mubr.f32.gmra.mrb[0].mxu0 %v297
  %v509 = vpop.f32.mrb[0].mxu0
  %v510 = vadd.f32 0.0, %v509
  %v511 = vpop.f32.mrb[0].mxu0
  %v512 = vadd.f32 0.0, %v511
  %513 = vdwg.mxu0
  %514 = vmatprep.subr.mxu0 %v41
  %515 = vmatpush1.msra.mxu0 %v40
  %516 = vmatprep.subr.mxu0 %v49
  %517 = vmatpush1.msra.mxu0 %v48
  %518 = vmatprep.subr.mxu0 %v57
  %519 = vmatpush1.msra.mxu0 %v56
  %520 = vmatprep.subr.mxu0 %v65
  %521 = vmatpush1.msra.mxu0 %v64
  %522 = vmatprep.subr.mxu0 %v73
  %523 = vmatpush1.msra.mxu0 %v72
  %524 = vmatprep.subr.mxu0 %v81
  %525 = vmatpush1.msra.mxu0 %v80
  %526 = vmatprep.subr.mxu0 %v89
  %527 = vmatpush1.msra.mxu0 %v88
  %528 = vmatprep.subr.mxu0 %v97
  %529 = vmatpush1.msra.mxu0 %v96
  %530 = vmatprep.subr.mxu0 %v105
  %531 = vmatpush1.msra.mxu0 %v104
  %532 = vmatprep.subr.mxu0 %v113
  %533 = vmatpush1.msra.mxu0 %v112
  %534 = vmatprep.subr.mxu0 %v121
  %535 = vmatpush1.msra.mxu0 %v120
  %536 = vmatprep.subr.mxu0 %v129
  %537 = vmatpush1.msra.mxu0 %v128
  %538 = vmatprep.subr.mxu0 %v137
  %539 = vmatpush1.msra.mxu0 %v136
  %540 = vmatprep.subr.mxu0 %v145
  %541 = vmatpush1.msra.mxu0 %v144
  %542 = vmatprep.subr.mxu0 %v153
  %543 = vmatpush1.msra.mxu0 %v152
  %544 = vmatprep.subr.mxu0 %v161
  %545 = vmatpush1.msra.mxu0 %v160
  %546 = vmatprep.subr.mxu0 %v169
  %547 = vmatpush1.msra.mxu0 %v168
  %548 = vmatprep.subr.mxu0 %v177
  %549 = vmatpush1.msra.mxu0 %v176
  %550 = vmatprep.subr.mxu0 %v185
  %551 = vmatpush1.msra.mxu0 %v184
  %552 = vmatprep.subr.mxu0 %v193
  %553 = vmatpush1.msra.mxu0 %v192
  %554 = vmatprep.subr.mxu0 %v201
  %555 = vmatpush1.msra.mxu0 %v200
  %556 = vmatprep.subr.mxu0 %v209
  %557 = vmatpush1.msra.mxu0 %v208
  %558 = vmatprep.subr.mxu0 %v217
  %559 = vmatpush1.msra.mxu0 %v216
  %560 = vmatprep.subr.mxu0 %v225
  %561 = vmatpush1.msra.mxu0 %v224
  %562 = vmatprep.subr.mxu0 %v233
  %563 = vmatpush1.msra.mxu0 %v232
  %564 = vmatprep.subr.mxu0 %v241
  %565 = vmatpush1.msra.mxu0 %v240
  %566 = vmatprep.subr.mxu0 %v249
  %567 = vmatpush1.msra.mxu0 %v248
  %568 = vmatprep.subr.mxu0 %v257
  %569 = vmatpush1.msra.mxu0 %v256
  %570 = vmatprep.subr.mxu0 %v265
  %571 = vmatpush1.msra.mxu0 %v264
  %572 = vmatprep.subr.mxu0 %v273
  %573 = vmatpush1.msra.mxu0 %v272
  %574 = vmatprep.subr.mxu0 %v281
  %575 = vmatpush1.msra.mxu0 %v280
  %576 = vmatprep.subr.mxu0 %v289
  %577 = vmatpush1.msra.mxu0 %v288
  %578 = vmatprep.mubr.f32.mxu0 %v298
  %579 = vmatmul.mubr.f32.gmra.mrb[0].mxu0 %v297
  %v580 = vpop.f32.mrb[0].mxu0
  %v581 = vadd.f32 0.0, %v580
  %v582 = vpop.f32.mrb[0].mxu0
  %v583 = vadd.f32 0.0, %v582
  %584 = vdwg.mxu0
  %v593 = vcombine.low %v368, %v370
  %v594 = vcombine.low %v439, %v441
  %v595 = vcombine.low %v510, %v512
  %v596 = vcombine.low %v581, %v583
  %v598 = vunpack.c.l.s4 1966171168
  %v599 = vunpack.c.0.s8 %v598
  %v600 = vlaneseq
  %v601 = vshrl.u32 %v600, 7
  %v602 = vsub.s32 %v599, %v601
  %v603 = vrot.slane %v593, %v602
  %v605 = vunpack.c.l.s4 1966171168
  %v606 = vunpack.c.0.s8 %v605
  %v607 = vlaneseq
  %v608 = vshrl.u32 %v607, 7
  %v609 = vsub.s32 %v606, %v608
  %v610 = vrot.slane %v594, %v609
  %v612 = vunpack.c.l.s4 1966171168
  %v613 = vunpack.c.0.s8 %v612
  %v614 = vlaneseq
  %v615 = vshrl.u32 %v614, 7
  %v616 = vsub.s32 %v613, %v615
  %v617 = vrot.slane %v595, %v616
  %v619 = vunpack.c.l.s4 1966171168
  %v620 = vunpack.c.0.s8 %v619
  %v621 = vlaneseq
  %v622 = vshrl.u32 %v621, 7
  %v623 = vsub.s32 %v620, %v622
  %v624 = vrot.slane %v596, %v623
  %v625 = vcombine.low %v603, %v610
  %v626 = vcombine.high %v603, %v610
  %v627 = vcombine.low %v617, %v624
  %v628 = vcombine.high %v617, %v624
  %v630 = vunpack.c.l.s4 1966171168
  %v631 = vunpack.c.0.s8 %v630
  %v632 = vlaneseq
  %v633 = vshrl.u32 %v632, 7
  %v634 = vsub.s32 %v631, %v633
  %v635 = vrot.slane %v625, %v634
  %v637 = vunpack.c.l.s4 1966171168
  %v638 = vunpack.c.0.s8 %v637
  %v639 = vlaneseq
  %v640 = vshrl.u32 %v639, 7
  %v641 = vsub.s32 %v638, %v640
  %v642 = vrot.slane %v626, %v641
  %v644 = vunpack.c.l.s4 1966171168
  %v645 = vunpack.c.0.s8 %v644
  %v646 = vlaneseq
  %v647 = vshrl.u32 %v646, 7
  %v648 = vsub.s32 %v645, %v647
  %v649 = vrot.slane %v627, %v648
  %v651 = vunpack.c.l.s4 1966171168
  %v652 = vunpack.c.0.s8 %v651
  %v653 = vlaneseq
  %v654 = vshrl.u32 %v653, 7
  %v655 = vsub.s32 %v652, %v654
  %v656 = vrot.slane %v628, %v655
  %v657 = vcombine.low %v635, %v649
  %v658 = vcombine.low %v642, %v656
  %v661 = vadd.f32 %v29, %v657
  %v662 = vadd.f32 %v33, %v658
  %v663 = vxor.u32 %v661, 2147483648
  %v664 = vxor.u32 %v662, 2147483648
  %v665 = vmul.f32 %v663, 1.442695
  %v666 = vpow.pop %v665
  %v667 = vmul.f32 %v664, 1.442695
  %v668 = vpow.pop %v667
  %v669 = vadd.f32 %v666, 1.0
  %v670 = vadd.f32 %v668, 1.0
  %v671 = vrcp.pop %v669
  %v672 = vmul.f32 1.0, %v671
  %v673 = vrcp.pop %v670
  %v674 = vmul.f32 1.0, %v673
  %v677 = vrot.slane %v661, 2
  %v678 = vrot.slane %v662, 2
  %v681 = vxor.u32 %v677, 2147483648
  %v682 = vxor.u32 %v678, 2147483648
  %v683 = vmul.f32 %v681, 1.442695
  %v684 = vpow.pop %v683
  %v685 = vmul.f32 %v682, 1.442695
  %v686 = vpow.pop %v685
  %v687 = vadd.f32 %v684, 1.0
  %v688 = vadd.f32 %v686, 1.0
  %v689 = vrcp.pop %v687
  %v690 = vmul.f32 1.0, %v689
  %v691 = vrcp.pop %v688
  %v692 = vmul.f32 1.0, %v691
  %v693 = vrot.slane %v661, 4
  %v694 = vrot.slane %v662, 4
  %v697 = vtanh.pop %v693
  %v698 = vtanh.pop %v694
  %v699 = vrot.slane %v661, 6
  %v700 = vrot.slane %v662, 6
  %v703 = vxor.u32 %v699, 2147483648
  %v704 = vxor.u32 %v700, 2147483648
  %v705 = vmul.f32 %v703, 1.442695
  %v706 = vpow.pop %v705
  %v707 = vmul.f32 %v704, 1.442695
  %v708 = vpow.pop %v707
  %v709 = vadd.f32 %v706, 1.0
  %v710 = vadd.f32 %v708, 1.0
  %v711 = vrcp.pop %v709
  %v712 = vmul.f32 1.0, %v711
  %v713 = vrcp.pop %v710
  %v714 = vmul.f32 1.0, %v713
  %v717 = vunpack.c.l.s4 1966171168
  %v718 = vunpack.c.0.s8 %v717
  %v719 = vlaneseq
  %v720 = vshrl.u32 %v719, 7
  %v721 = vsub.s32 %v718, %v720
  %v722 = vrot.slane %v26, %v721
  %v723 = vcombine.high %v722, %v722
  %v726 = vmul.f32 %v690, %v722
  %v727 = vmul.f32 %v692, %v723
  %v728 = vmul.f32 %v672, %v697
  %v729 = vmul.f32 %v674, %v698
  %v730 = vadd.f32 %v726, %v728
  %v731 = vadd.f32 %v727, %v729
  %v732 = vtanh.pop %v730
  %v733 = vtanh.pop %v731
  %v734 = vmul.f32 %v712, %v732
  %v735 = vmul.f32 %v714, %v733
  %s736 = scalar_lea.vmem %s0, 1
  %v737 = vld [vmem:[%s736] ss:$8 sm:$0xf]
  %v738 = vld [vmem:[%s736] ss:$8 sm:$0xf0]
  %v739 = vor.u32 %v737, %v738
  %s740 = scalar_lea.vmem %s0, 65
  %v741 = vld [vmem:[%s740] ss:$8 sm:$0xf]
  %v742 = vld [vmem:[%s740] ss:$8 sm:$0xf0]
  %v743 = vor.u32 %v741, %v742
  %v746 = vcombine.low %v734, %v735
  %v748 = vunpack.c.l.s4 1966171168
  %v749 = vunpack.c.0.s8 %v748
  %v750 = vlaneseq
  %v751 = vshrl.u32 %v750, 7
  %v752 = vsub.s32 %v749, %v751
  %v753 = vrot.slane %v746, %v752
  %v754 = vcombine.high %v753, %v753
  %v756 = vunpack.c.l.s4 1966171168
  %v757 = vunpack.c.0.s8 %v756
  %v758 = vlaneseq
  %v759 = vshrl.u32 %v758, 7
  %v760 = vsub.s32 %v757, %v759
  %v761 = vrot.slane %v753, %v760
  %v763 = vunpack.c.l.s4 1966171168
  %v764 = vunpack.c.0.s8 %v763
  %v765 = vlaneseq
  %v766 = vshrl.u32 %v765, 7
  %v767 = vsub.s32 %v764, %v766
  %v768 = vrot.slane %v754, %v767
  %771 = vmatprep.subr.mxu0 %v35
  %772 = vmatpush1.msra.mxu0 %v34
  %773 = vmatprep.subr.mxu0 %v43
  %774 = vmatpush1.msra.mxu0 %v42
  %775 = vmatprep.subr.mxu0 %v51
  %776 = vmatpush1.msra.mxu0 %v50
  %777 = vmatprep.subr.mxu0 %v59
  %778 = vmatpush1.msra.mxu0 %v58
  %779 = vmatprep.subr.mxu0 %v67
  %780 = vmatpush1.msra.mxu0 %v66
  %781 = vmatprep.subr.mxu0 %v75
  %782 = vmatpush1.msra.mxu0 %v74
  %783 = vmatprep.subr.mxu0 %v83
  %784 = vmatpush1.msra.mxu0 %v82
  %785 = vmatprep.subr.mxu0 %v91
  %786 = vmatpush1.msra.mxu0 %v90
  %787 = vmatprep.subr.mxu0 %v99
  %788 = vmatpush1.msra.mxu0 %v98
  %789 = vmatprep.subr.mxu0 %v107
  %790 = vmatpush1.msra.mxu0 %v106
  %791 = vmatprep.subr.mxu0 %v115
  %792 = vmatpush1.msra.mxu0 %v114
  %793 = vmatprep.subr.mxu0 %v123
  %794 = vmatpush1.msra.mxu0 %v122
  %795 = vmatprep.subr.mxu0 %v131
  %796 = vmatpush1.msra.mxu0 %v130
  %797 = vmatprep.subr.mxu0 %v139
  %798 = vmatpush1.msra.mxu0 %v138
  %799 = vmatprep.subr.mxu0 %v147
  %800 = vmatpush1.msra.mxu0 %v146
  %801 = vmatprep.subr.mxu0 %v155
  %802 = vmatpush1.msra.mxu0 %v154
  %803 = vmatprep.subr.mxu0 %v163
  %804 = vmatpush1.msra.mxu0 %v162
  %805 = vmatprep.subr.mxu0 %v171
  %806 = vmatpush1.msra.mxu0 %v170
  %807 = vmatprep.subr.mxu0 %v179
  %808 = vmatpush1.msra.mxu0 %v178
  %809 = vmatprep.subr.mxu0 %v187
  %810 = vmatpush1.msra.mxu0 %v186
  %811 = vmatprep.subr.mxu0 %v195
  %812 = vmatpush1.msra.mxu0 %v194
  %813 = vmatprep.subr.mxu0 %v203
  %814 = vmatpush1.msra.mxu0 %v202
  %815 = vmatprep.subr.mxu0 %v211
  %816 = vmatpush1.msra.mxu0 %v210
  %817 = vmatprep.subr.mxu0 %v219
  %818 = vmatpush1.msra.mxu0 %v218
  %819 = vmatprep.subr.mxu0 %v227
  %820 = vmatpush1.msra.mxu0 %v226
  %821 = vmatprep.subr.mxu0 %v235
  %822 = vmatpush1.msra.mxu0 %v234
  %823 = vmatprep.subr.mxu0 %v243
  %824 = vmatpush1.msra.mxu0 %v242
  %825 = vmatprep.subr.mxu0 %v251
  %826 = vmatpush1.msra.mxu0 %v250
  %827 = vmatprep.subr.mxu0 %v259
  %828 = vmatpush1.msra.mxu0 %v258
  %829 = vmatprep.subr.mxu0 %v267
  %830 = vmatpush1.msra.mxu0 %v266
  %831 = vmatprep.subr.mxu0 %v275
  %832 = vmatpush1.msra.mxu0 %v274
  %833 = vmatprep.subr.mxu0 %v283
  %834 = vmatpush1.msra.mxu0 %v282
  %835 = vmatprep.mubr.f32.mxu0 %v768
  %836 = vmatmul.mubr.f32.gmra.mrb[0].mxu0 %v761
  %v837 = vpop.f32.mrb[0].mxu0
  %v838 = vadd.f32 0.0, %v837
  %v839 = vpop.f32.mrb[0].mxu0
  %v840 = vadd.f32 0.0, %v839
  %841 = vdwg.mxu0
  %842 = vmatprep.subr.mxu0 %v37
  %843 = vmatpush1.msra.mxu0 %v36
  %844 = vmatprep.subr.mxu0 %v45
  %845 = vmatpush1.msra.mxu0 %v44
  %846 = vmatprep.subr.mxu0 %v53
  %847 = vmatpush1.msra.mxu0 %v52
  %848 = vmatprep.subr.mxu0 %v61
  %849 = vmatpush1.msra.mxu0 %v60
  %850 = vmatprep.subr.mxu0 %v69
  %851 = vmatpush1.msra.mxu0 %v68
  %852 = vmatprep.subr.mxu0 %v77
  %853 = vmatpush1.msra.mxu0 %v76
  %854 = vmatprep.subr.mxu0 %v85
  %855 = vmatpush1.msra.mxu0 %v84
  %856 = vmatprep.subr.mxu0 %v93
  %857 = vmatpush1.msra.mxu0 %v92
  %858 = vmatprep.subr.mxu0 %v101
  %859 = vmatpush1.msra.mxu0 %v100
  %860 = vmatprep.subr.mxu0 %v109
  %861 = vmatpush1.msra.mxu0 %v108
  %862 = vmatprep.subr.mxu0 %v117
  %863 = vmatpush1.msra.mxu0 %v116
  %864 = vmatprep.subr.mxu0 %v125
  %865 = vmatpush1.msra.mxu0 %v124
  %866 = vmatprep.subr.mxu0 %v133
  %867 = vmatpush1.msra.mxu0 %v132
  %868 = vmatprep.subr.mxu0 %v141
  %869 = vmatpush1.msra.mxu0 %v140
  %870 = vmatprep.subr.mxu0 %v149
  %871 = vmatpush1.msra.mxu0 %v148
  %872 = vmatprep.subr.mxu0 %v157
  %873 = vmatpush1.msra.mxu0 %v156
  %874 = vmatprep.subr.mxu0 %v165
  %875 = vmatpush1.msra.mxu0 %v164
  %876 = vmatprep.subr.mxu0 %v173
  %877 = vmatpush1.msra.mxu0 %v172
  %878 = vmatprep.subr.mxu0 %v181
  %879 = vmatpush1.msra.mxu0 %v180
  %880 = vmatprep.subr.mxu0 %v189
  %881 = vmatpush1.msra.mxu0 %v188
  %882 = vmatprep.subr.mxu0 %v197
  %883 = vmatpush1.msra.mxu0 %v196
  %884 = vmatprep.subr.mxu0 %v205
  %885 = vmatpush1.msra.mxu0 %v204
  %886 = vmatprep.subr.mxu0 %v213
  %887 = vmatpush1.msra.mxu0 %v212
  %888 = vmatprep.subr.mxu0 %v221
  %889 = vmatpush1.msra.mxu0 %v220
  %890 = vmatprep.subr.mxu0 %v229
  %891 = vmatpush1.msra.mxu0 %v228
  %892 = vmatprep.subr.mxu0 %v237
  %893 = vmatpush1.msra.mxu0 %v236
  %894 = vmatprep.subr.mxu0 %v245
  %895 = vmatpush1.msra.mxu0 %v244
  %896 = vmatprep.subr.mxu0 %v253
  %897 = vmatpush1.msra.mxu0 %v252
  %898 = vmatprep.subr.mxu0 %v261
  %899 = vmatpush1.msra.mxu0 %v260
  %900 = vmatprep.subr.mxu0 %v269
  %901 = vmatpush1.msra.mxu0 %v268
  %902 = vmatprep.subr.mxu0 %v277
  %903 = vmatpush1.msra.mxu0 %v276
  %904 = vmatprep.subr.mxu0 %v285
  %905 = vmatpush1.msra.mxu0 %v284
  %906 = vmatprep.mubr.f32.mxu0 %v768
  %907 = vmatmul.mubr.f32.gmra.mrb[0].mxu0 %v761
  %v908 = vpop.f32.mrb[0].mxu0
  %v909 = vadd.f32 0.0, %v908
  %v910 = vpop.f32.mrb[0].mxu0
  %v911 = vadd.f32 0.0, %v910
  %912 = vdwg.mxu0
  %913 = vmatprep.subr.mxu0 %v39
  %914 = vmatpush1.msra.mxu0 %v38
  %915 = vmatprep.subr.mxu0 %v47
  %916 = vmatpush1.msra.mxu0 %v46
  %917 = vmatprep.subr.mxu0 %v55
  %918 = vmatpush1.msra.mxu0 %v54
  %919 = vmatprep.subr.mxu0 %v63
  %920 = vmatpush1.msra.mxu0 %v62
  %921 = vmatprep.subr.mxu0 %v71
  %922 = vmatpush1.msra.mxu0 %v70
  %923 = vmatprep.subr.mxu0 %v79
  %924 = vmatpush1.msra.mxu0 %v78
  %925 = vmatprep.subr.mxu0 %v87
  %926 = vmatpush1.msra.mxu0 %v86
  %927 = vmatprep.subr.mxu0 %v95
  %928 = vmatpush1.msra.mxu0 %v94
  %929 = vmatprep.subr.mxu0 %v103
  %930 = vmatpush1.msra.mxu0 %v102
  %931 = vmatprep.subr.mxu0 %v111
  %932 = vmatpush1.msra.mxu0 %v110
  %933 = vmatprep.subr.mxu0 %v119
  %934 = vmatpush1.msra.mxu0 %v118
  %935 = vmatprep.subr.mxu0 %v127
  %936 = vmatpush1.msra.mxu0 %v126
  %937 = vmatprep.subr.mxu0 %v135
  %938 = vmatpush1.msra.mxu0 %v134
  %939 = vmatprep.subr.mxu0 %v143
  %940 = vmatpush1.msra.mxu0 %v142
  %941 = vmatprep.subr.mxu0 %v151
  %942 = vmatpush1.msra.mxu0 %v150
  %943 = vmatprep.subr.mxu0 %v159
  %944 = vmatpush1.msra.mxu0 %v158
  %945 = vmatprep.subr.mxu0 %v167
  %946 = vmatpush1.msra.mxu0 %v166
  %947 = vmatprep.subr.mxu0 %v175
  %948 = vmatpush1.msra.mxu0 %v174
  %949 = vmatprep.subr.mxu0 %v183
  %950 = vmatpush1.msra.mxu0 %v182
  %951 = vmatprep.subr.mxu0 %v191
  %952 = vmatpush1.msra.mxu0 %v190
  %953 = vmatprep.subr.mxu0 %v199
  %954 = vmatpush1.msra.mxu0 %v198
  %955 = vmatprep.subr.mxu0 %v207
  %956 = vmatpush1.msra.mxu0 %v206
  %957 = vmatprep.subr.mxu0 %v215
  %958 = vmatpush1.msra.mxu0 %v214
  %959 = vmatprep.subr.mxu0 %v223
  %960 = vmatpush1.msra.mxu0 %v222
  %961 = vmatprep.subr.mxu0 %v231
  %962 = vmatpush1.msra.mxu0 %v230
  %963 = vmatprep.subr.mxu0 %v239
  %964 = vmatpush1.msra.mxu0 %v238
  %965 = vmatprep.subr.mxu0 %v247
  %966 = vmatpush1.msra.mxu0 %v246
  %967 = vmatprep.subr.mxu0 %v255
  %968 = vmatpush1.msra.mxu0 %v254
  %969 = vmatprep.subr.mxu0 %v263
  %970 = vmatpush1.msra.mxu0 %v262
  %971 = vmatprep.subr.mxu0 %v271
  %972 = vmatpush1.msra.mxu0 %v270
  %973 = vmatprep.subr.mxu0 %v279
  %974 = vmatpush1.msra.mxu0 %v278
  %975 = vmatprep.subr.mxu0 %v287
  %976 = vmatpush1.msra.mxu0 %v286
  %977 = vmatprep.mubr.f32.mxu0 %v768
  %978 = vmatmul.mubr.f32.gmra.mrb[0].mxu0 %v761
  %v979 = vpop.f32.mrb[0].mxu0
  %v980 = vadd.f32 0.0, %v979
  %v981 = vpop.f32.mrb[0].mxu0
  %v982 = vadd.f32 0.0, %v981
  %983 = vdwg.mxu0
  %984 = vmatprep.subr.mxu0 %v41
  %985 = vmatpush1.msra.mxu0 %v40
  %986 = vmatprep.subr.mxu0 %v49
  %987 = vmatpush1.msra.mxu0 %v48
  %988 = vmatprep.subr.mxu0 %v57
  %989 = vmatpush1.msra.mxu0 %v56
  %990 = vmatprep.subr.mxu0 %v65
  %991 = vmatpush1.msra.mxu0 %v64
  %992 = vmatprep.subr.mxu0 %v73
  %993 = vmatpush1.msra.mxu0 %v72
  %994 = vmatprep.subr.mxu0 %v81
  %995 = vmatpush1.msra.mxu0 %v80
  %996 = vmatprep.subr.mxu0 %v89
  %997 = vmatpush1.msra.mxu0 %v88
  %998 = vmatprep.subr.mxu0 %v97
  %999 = vmatpush1.msra.mxu0 %v96
  %1000 = vmatprep.subr.mxu0 %v105
  %1001 = vmatpush1.msra.mxu0 %v104
  %1002 = vmatprep.subr.mxu0 %v113
  %1003 = vmatpush1.msra.mxu0 %v112
  %1004 = vmatprep.subr.mxu0 %v121
  %1005 = vmatpush1.msra.mxu0 %v120
  %1006 = vmatprep.subr.mxu0 %v129
  %1007 = vmatpush1.msra.mxu0 %v128
  %1008 = vmatprep.subr.mxu0 %v137
  %1009 = vmatpush1.msra.mxu0 %v136
  %1010 = vmatprep.subr.mxu0 %v145
  %1011 = vmatpush1.msra.mxu0 %v144
  %1012 = vmatprep.subr.mxu0 %v153
  %1013 = vmatpush1.msra.mxu0 %v152
  %1014 = vmatprep.subr.mxu0 %v161
  %1015 = vmatpush1.msra.mxu0 %v160
  %1016 = vmatprep.subr.mxu0 %v169
  %1017 = vmatpush1.msra.mxu0 %v168
  %1018 = vmatprep.subr.mxu0 %v177
  %1019 = vmatpush1.msra.mxu0 %v176
  %1020 = vmatprep.subr.mxu0 %v185
  %1021 = vmatpush1.msra.mxu0 %v184
  %1022 = vmatprep.subr.mxu0 %v193
  %1023 = vmatpush1.msra.mxu0 %v192
  %1024 = vmatprep.subr.mxu0 %v201
  %1025 = vmatpush1.msra.mxu0 %v200
  %1026 = vmatprep.subr.mxu0 %v209
  %1027 = vmatpush1.msra.mxu0 %v208
  %1028 = vmatprep.subr.mxu0 %v217
  %1029 = vmatpush1.msra.mxu0 %v216
  %1030 = vmatprep.subr.mxu0 %v225
  %1031 = vmatpush1.msra.mxu0 %v224
  %1032 = vmatprep.subr.mxu0 %v233
  %1033 = vmatpush1.msra.mxu0 %v232
  %1034 = vmatprep.subr.mxu0 %v241
  %1035 = vmatpush1.msra.mxu0 %v240
  %1036 = vmatprep.subr.mxu0 %v249
  %1037 = vmatpush1.msra.mxu0 %v248
  %1038 = vmatprep.subr.mxu0 %v257
  %1039 = vmatpush1.msra.mxu0 %v256
  %1040 = vmatprep.subr.mxu0 %v265
  %1041 = vmatpush1.msra.mxu0 %v264
  %1042 = vmatprep.subr.mxu0 %v273
  %1043 = vmatpush1.msra.mxu0 %v272
  %1044 = vmatprep.subr.mxu0 %v281
  %1045 = vmatpush1.msra.mxu0 %v280
  %1046 = vmatprep.subr.mxu0 %v289
  %1047 = vmatpush1.msra.mxu0 %v288
  %1048 = vmatprep.mubr.f32.mxu0 %v768
  %1049 = vmatmul.mubr.f32.gmra.mrb[0].mxu0 %v761
  %v1050 = vpop.f32.mrb[0].mxu0
  %v1051 = vadd.f32 0.0, %v1050
  %v1052 = vpop.f32.mrb[0].mxu0
  %v1053 = vadd.f32 0.0, %v1052
  %1054 = vdwg.mxu0
  %v1063 = vcombine.low %v838, %v840
  %v1064 = vcombine.low %v909, %v911
  %v1065 = vcombine.low %v980, %v982
  %v1066 = vcombine.low %v1051, %v1053
  %v1068 = vunpack.c.l.s4 1966171168
  %v1069 = vunpack.c.0.s8 %v1068
  %v1070 = vlaneseq
  %v1071 = vshrl.u32 %v1070, 7
  %v1072 = vsub.s32 %v1069, %v1071
  %v1073 = vrot.slane %v1063, %v1072
  %v1075 = vunpack.c.l.s4 1966171168
  %v1076 = vunpack.c.0.s8 %v1075
  %v1077 = vlaneseq
  %v1078 = vshrl.u32 %v1077, 7
  %v1079 = vsub.s32 %v1076, %v1078
  %v1080 = vrot.slane %v1064, %v1079
  %v1082 = vunpack.c.l.s4 1966171168
  %v1083 = vunpack.c.0.s8 %v1082
  %v1084 = vlaneseq
  %v1085 = vshrl.u32 %v1084, 7
  %v1086 = vsub.s32 %v1083, %v1085
  %v1087 = vrot.slane %v1065, %v1086
  %v1089 = vunpack.c.l.s4 1966171168
  %v1090 = vunpack.c.0.s8 %v1089
  %v1091 = vlaneseq
  %v1092 = vshrl.u32 %v1091, 7
  %v1093 = vsub.s32 %v1090, %v1092
  %v1094 = vrot.slane %v1066, %v1093
  %v1095 = vcombine.low %v1073, %v1080
  %v1096 = vcombine.high %v1073, %v1080
  %v1097 = vcombine.low %v1087, %v1094
  %v1098 = vcombine.high %v1087, %v1094
  %v1100 = vunpack.c.l.s4 1966171168
  %v1101 = vunpack.c.0.s8 %v1100
  %v1102 = vlaneseq
  %v1103 = vshrl.u32 %v1102, 7
  %v1104 = vsub.s32 %v1101, %v1103
  %v1105 = vrot.slane %v1095, %v1104
  %v1107 = vunpack.c.l.s4 1966171168
  %v1108 = vunpack.c.0.s8 %v1107
  %v1109 = vlaneseq
  %v1110 = vshrl.u32 %v1109, 7
  %v1111 = vsub.s32 %v1108, %v1110
  %v1112 = vrot.slane %v1096, %v1111
  %v1114 = vunpack.c.l.s4 1966171168
  %v1115 = vunpack.c.0.s8 %v1114
  %v1116 = vlaneseq
  %v1117 = vshrl.u32 %v1116, 7
  %v1118 = vsub.s32 %v1115, %v1117
  %v1119 = vrot.slane %v1097, %v1118
  %v1121 = vunpack.c.l.s4 1966171168
  %v1122 = vunpack.c.0.s8 %v1121
  %v1123 = vlaneseq
  %v1124 = vshrl.u32 %v1123, 7
  %v1125 = vsub.s32 %v1122, %v1124
  %v1126 = vrot.slane %v1098, %v1125
  %v1127 = vcombine.low %v1105, %v1119
  %v1128 = vcombine.low %v1112, %v1126
  %v1131 = vadd.f32 %v739, %v1127
  %v1132 = vadd.f32 %v743, %v1128
  %v1133 = vxor.u32 %v1131, 2147483648
  %v1134 = vxor.u32 %v1132, 2147483648
  %v1135 = vmul.f32 %v1133, 1.442695
  %v1136 = vpow.pop %v1135
  %v1137 = vmul.f32 %v1134, 1.442695
  %v1138 = vpow.pop %v1137
  %v1139 = vadd.f32 %v1136, 1.0
  %v1140 = vadd.f32 %v1138, 1.0
  %v1141 = vrcp.pop %v1139
  %v1142 = vmul.f32 1.0, %v1141
  %v1143 = vrcp.pop %v1140
  %v1144 = vmul.f32 1.0, %v1143
  %v1147 = vrot.slane %v1131, 2
  %v1148 = vrot.slane %v1132, 2
  %v1151 = vxor.u32 %v1147, 2147483648
  %v1152 = vxor.u32 %v1148, 2147483648
  %v1153 = vmul.f32 %v1151, 1.442695
  %v1154 = vpow.pop %v1153
  %v1155 = vmul.f32 %v1152, 1.442695
  %v1156 = vpow.pop %v1155
  %v1157 = vadd.f32 %v1154, 1.0
  %v1158 = vadd.f32 %v1156, 1.0
  %v1159 = vrcp.pop %v1157
  %v1160 = vmul.f32 1.0, %v1159
  %v1161 = vrcp.pop %v1158
  %v1162 = vmul.f32 1.0, %v1161
  %v1163 = vrot.slane %v1131, 4
  %v1164 = vrot.slane %v1132, 4
  %v1167 = vtanh.pop %v1163
  %v1168 = vtanh.pop %v1164
  %v1169 = vrot.slane %v1131, 6
  %v1170 = vrot.slane %v1132, 6
  %v1173 = vxor.u32 %v1169, 2147483648
  %v1174 = vxor.u32 %v1170, 2147483648
  %v1175 = vmul.f32 %v1173, 1.442695
  %v1176 = vpow.pop %v1175
  %v1177 = vmul.f32 %v1174, 1.442695
  %v1178 = vpow.pop %v1177
  %v1179 = vadd.f32 %v1176, 1.0
  %v1180 = vadd.f32 %v1178, 1.0
  %v1181 = vrcp.pop %v1179
  %v1182 = vmul.f32 1.0, %v1181
  %v1183 = vrcp.pop %v1180
  %v1184 = vmul.f32 1.0, %v1183
  %v1185 = vmul.f32 %v1160, %v730
  %v1186 = vmul.f32 %v1162, %v731
  %v1187 = vmul.f32 %v1142, %v1167
  %v1188 = vmul.f32 %v1144, %v1168
  %v1189 = vadd.f32 %v1185, %v1187
  %v1190 = vadd.f32 %v1186, %v1188
  %v1191 = vtanh.pop %v1189
  %v1192 = vtanh.pop %v1190
  %v1193 = vmul.f32 %v1182, %v1191
  %v1194 = vmul.f32 %v1184, %v1192
  %s1195 = scalar_lea.vmem %s0, 2
  %v1196 = vld [vmem:[%s1195] ss:$8 sm:$0xf]
  %v1197 = vld [vmem:[%s1195] ss:$8 sm:$0xf0]
  %v1198 = vor.u32 %v1196, %v1197
  %s1199 = scalar_lea.vmem %s0, 66
  %v1200 = vld [vmem:[%s1199] ss:$8 sm:$0xf]
  %v1201 = vld [vmem:[%s1199] ss:$8 sm:$0xf0]
  %v1202 = vor.u32 %v1200, %v1201
  %v1205 = vcombine.low %v1193, %v1194
  %v1207 = vunpack.c.l.s4 1966171168
  %v1208 = vunpack.c.0.s8 %v1207
  %v1209 = vlaneseq
  %v1210 = vshrl.u32 %v1209, 7
  %v1211 = vsub.s32 %v1208, %v1210
  %v1212 = vrot.slane %v1205, %v1211
  %v1213 = vcombine.high %v1212, %v1212
  %v1215 = vunpack.c.l.s4 1966171168
  %v1216 = vunpack.c.0.s8 %v1215
  %v1217 = vlaneseq
  %v1218 = vshrl.u32 %v1217, 7
  %v1219 = vsub.s32 %v1216, %v1218
  %v1220 = vrot.slane %v1212, %v1219
  %v1222 = vunpack.c.l.s4 1966171168
  %v1223 = vunpack.c.0.s8 %v1222
  %v1224 = vlaneseq
  %v1225 = vshrl.u32 %v1224, 7
  %v1226 = vsub.s32 %v1223, %v1225
  %v1227 = vrot.slane %v1213, %v1226
  %1230 = vmatprep.subr.mxu0 %v35
  %1231 = vmatpush1.msra.mxu0 %v34
  %1232 = vmatprep.subr.mxu0 %v43
  %1233 = vmatpush1.msra.mxu0 %v42
  %1234 = vmatprep.subr.mxu0 %v51
  %1235 = vmatpush1.msra.mxu0 %v50
  %1236 = vmatprep.subr.mxu0 %v59
  %1237 = vmatpush1.msra.mxu0 %v58
  %1238 = vmatprep.subr.mxu0 %v67
  %1239 = vmatpush1.msra.mxu0 %v66
  %1240 = vmatprep.subr.mxu0 %v75
  %1241 = vmatpush1.msra.mxu0 %v74
  %1242 = vmatprep.subr.mxu0 %v83
  %1243 = vmatpush1.msra.mxu0 %v82
  %1244 = vmatprep.subr.mxu0 %v91
  %1245 = vmatpush1.msra.mxu0 %v90
  %1246 = vmatprep.subr.mxu0 %v99
  %1247 = vmatpush1.msra.mxu0 %v98
  %1248 = vmatprep.subr.mxu0 %v107
  %1249 = vmatpush1.msra.mxu0 %v106
  %1250 = vmatprep.subr.mxu0 %v115
  %1251 = vmatpush1.msra.mxu0 %v114
  %1252 = vmatprep.subr.mxu0 %v123
  %1253 = vmatpush1.msra.mxu0 %v122
  %1254 = vmatprep.subr.mxu0 %v131
  %1255 = vmatpush1.msra.mxu0 %v130
  %1256 = vmatprep.subr.mxu0 %v139
  %1257 = vmatpush1.msra.mxu0 %v138
  %1258 = vmatprep.subr.mxu0 %v147
  %1259 = vmatpush1.msra.mxu0 %v146
  %1260 = vmatprep.subr.mxu0 %v155
  %1261 = vmatpush1.msra.mxu0 %v154
  %1262 = vmatprep.subr.mxu0 %v163
  %1263 = vmatpush1.msra.mxu0 %v162
  %1264 = vmatprep.subr.mxu0 %v171
  %1265 = vmatpush1.msra.mxu0 %v170
  %1266 = vmatprep.subr.mxu0 %v179
  %1267 = vmatpush1.msra.mxu0 %v178
  %1268 = vmatprep.subr.mxu0 %v187
  %1269 = vmatpush1.msra.mxu0 %v186
  %1270 = vmatprep.subr.mxu0 %v195
  %1271 = vmatpush1.msra.mxu0 %v194
  %1272 = vmatprep.subr.mxu0 %v203
  %1273 = vmatpush1.msra.mxu0 %v202
  %1274 = vmatprep.subr.mxu0 %v211
  %1275 = vmatpush1.msra.mxu0 %v210
  %1276 = vmatprep.subr.mxu0 %v219
  %1277 = vmatpush1.msra.mxu0 %v218
  %1278 = vmatprep.subr.mxu0 %v227
  %1279 = vmatpush1.msra.mxu0 %v226
  %1280 = vmatprep.subr.mxu0 %v235
  %1281 = vmatpush1.msra.mxu0 %v234
  %1282 = vmatprep.subr.mxu0 %v243
  %1283 = vmatpush1.msra.mxu0 %v242
  %1284 = vmatprep.subr.mxu0 %v251
  %1285 = vmatpush1.msra.mxu0 %v250
  %1286 = vmatprep.subr.mxu0 %v259
  %1287 = vmatpush1.msra.mxu0 %v258
  %1288 = vmatprep.subr.mxu0 %v267
  %1289 = vmatpush1.msra.mxu0 %v266
  %1290 = vmatprep.subr.mxu0 %v275
  %1291 = vmatpush1.msra.mxu0 %v274
  %1292 = vmatprep.subr.mxu0 %v283
  %1293 = vmatpush1.msra.mxu0 %v282
  %1294 = vmatprep.mubr.f32.mxu0 %v1227
  %1295 = vmatmul.mubr.f32.gmra.mrb[0].mxu0 %v1220
  %v1296 = vpop.f32.mrb[0].mxu0
  %v1297 = vadd.f32 0.0, %v1296
  %v1298 = vpop.f32.mrb[0].mxu0
  %v1299 = vadd.f32 0.0, %v1298
  %1300 = vdwg.mxu0
  %1301 = vmatprep.subr.mxu0 %v37
  %1302 = vmatpush1.msra.mxu0 %v36
  %1303 = vmatprep.subr.mxu0 %v45
  %1304 = vmatpush1.msra.mxu0 %v44
  %1305 = vmatprep.subr.mxu0 %v53
  %1306 = vmatpush1.msra.mxu0 %v52
  %1307 = vmatprep.subr.mxu0 %v61
  %1308 = vmatpush1.msra.mxu0 %v60
  %1309 = vmatprep.subr.mxu0 %v69
  %1310 = vmatpush1.msra.mxu0 %v68
  %1311 = vmatprep.subr.mxu0 %v77
  %1312 = vmatpush1.msra.mxu0 %v76
  %1313 = vmatprep.subr.mxu0 %v85
  %1314 = vmatpush1.msra.mxu0 %v84
  %1315 = vmatprep.subr.mxu0 %v93
  %1316 = vmatpush1.msra.mxu0 %v92
  %1317 = vmatprep.subr.mxu0 %v101
  %1318 = vmatpush1.msra.mxu0 %v100
  %1319 = vmatprep.subr.mxu0 %v109
  %1320 = vmatpush1.msra.mxu0 %v108
  %1321 = vmatprep.subr.mxu0 %v117
  %1322 = vmatpush1.msra.mxu0 %v116
  %1323 = vmatprep.subr.mxu0 %v125
  %1324 = vmatpush1.msra.mxu0 %v124
  %1325 = vmatprep.subr.mxu0 %v133
  %1326 = vmatpush1.msra.mxu0 %v132
  %1327 = vmatprep.subr.mxu0 %v141
  %1328 = vmatpush1.msra.mxu0 %v140
  %1329 = vmatprep.subr.mxu0 %v149
  %1330 = vmatpush1.msra.mxu0 %v148
  %1331 = vmatprep.subr.mxu0 %v157
  %1332 = vmatpush1.msra.mxu0 %v156
  %1333 = vmatprep.subr.mxu0 %v165
  %1334 = vmatpush1.msra.mxu0 %v164
  %1335 = vmatprep.subr.mxu0 %v173
  %1336 = vmatpush1.msra.mxu0 %v172
  %1337 = vmatprep.subr.mxu0 %v181
  %1338 = vmatpush1.msra.mxu0 %v180
  %1339 = vmatprep.subr.mxu0 %v189
  %1340 = vmatpush1.msra.mxu0 %v188
  %1341 = vmatprep.subr.mxu0 %v197
  %1342 = vmatpush1.msra.mxu0 %v196
  %1343 = vmatprep.subr.mxu0 %v205
  %1344 = vmatpush1.msra.mxu0 %v204
  %1345 = vmatprep.subr.mxu0 %v213
  %1346 = vmatpush1.msra.mxu0 %v212
  %1347 = vmatprep.subr.mxu0 %v221
  %1348 = vmatpush1.msra.mxu0 %v220
  %1349 = vmatprep.subr.mxu0 %v229
  %1350 = vmatpush1.msra.mxu0 %v228
  %1351 = vmatprep.subr.mxu0 %v237
  %1352 = vmatpush1.msra.mxu0 %v236
  %1353 = vmatprep.subr.mxu0 %v245
  %1354 = vmatpush1.msra.mxu0 %v244
  %1355 = vmatprep.subr.mxu0 %v253
  %1356 = vmatpush1.msra.mxu0 %v252
  %1357 = vmatprep.subr.mxu0 %v261
  %1358 = vmatpush1.msra.mxu0 %v260
  %1359 = vmatprep.subr.mxu0 %v269
  %1360 = vmatpush1.msra.mxu0 %v268
  %1361 = vmatprep.subr.mxu0 %v277
  %1362 = vmatpush1.msra.mxu0 %v276
  %1363 = vmatprep.subr.mxu0 %v285
  %1364 = vmatpush1.msra.mxu0 %v284
  %1365 = vmatprep.mubr.f32.mxu0 %v1227
  %1366 = vmatmul.mubr.f32.gmra.mrb[0].mxu0 %v1220
  %v1367 = vpop.f32.mrb[0].mxu0
  %v1368 = vadd.f32 0.0, %v1367
  %v1369 = vpop.f32.mrb[0].mxu0
  %v1370 = vadd.f32 0.0, %v1369
  %1371 = vdwg.mxu0
  %1372 = vmatprep.subr.mxu0 %v39
  %1373 = vmatpush1.msra.mxu0 %v38
  %1374 = vmatprep.subr.mxu0 %v47
  %1375 = vmatpush1.msra.mxu0 %v46
  %1376 = vmatprep.subr.mxu0 %v55
  %1377 = vmatpush1.msra.mxu0 %v54
  %1378 = vmatprep.subr.mxu0 %v63
  %1379 = vmatpush1.msra.mxu0 %v62
  %1380 = vmatprep.subr.mxu0 %v71
  %1381 = vmatpush1.msra.mxu0 %v70
  %1382 = vmatprep.subr.mxu0 %v79
  %1383 = vmatpush1.msra.mxu0 %v78
  %1384 = vmatprep.subr.mxu0 %v87
  %1385 = vmatpush1.msra.mxu0 %v86
  %1386 = vmatprep.subr.mxu0 %v95
  %1387 = vmatpush1.msra.mxu0 %v94
  %1388 = vmatprep.subr.mxu0 %v103
  %1389 = vmatpush1.msra.mxu0 %v102
  %1390 = vmatprep.subr.mxu0 %v111
  %1391 = vmatpush1.msra.mxu0 %v110
  %1392 = vmatprep.subr.mxu0 %v119
  %1393 = vmatpush1.msra.mxu0 %v118
  %1394 = vmatprep.subr.mxu0 %v127
  %1395 = vmatpush1.msra.mxu0 %v126
  %1396 = vmatprep.subr.mxu0 %v135
  %1397 = vmatpush1.msra.mxu0 %v134
  %1398 = vmatprep.subr.mxu0 %v143
  %1399 = vmatpush1.msra.mxu0 %v142
  %1400 = vmatprep.subr.mxu0 %v151
  %1401 = vmatpush1.msra.mxu0 %v150
  %1402 = vmatprep.subr.mxu0 %v159
  %1403 = vmatpush1.msra.mxu0 %v158
  %1404 = vmatprep.subr.mxu0 %v167
  %1405 = vmatpush1.msra.mxu0 %v166
  %1406 = vmatprep.subr.mxu0 %v175
  %1407 = vmatpush1.msra.mxu0 %v174
  %1408 = vmatprep.subr.mxu0 %v183
  %1409 = vmatpush1.msra.mxu0 %v182
  %1410 = vmatprep.subr.mxu0 %v191
  %1411 = vmatpush1.msra.mxu0 %v190
  %1412 = vmatprep.subr.mxu0 %v199
  %1413 = vmatpush1.msra.mxu0 %v198
  %1414 = vmatprep.subr.mxu0 %v207
  %1415 = vmatpush1.msra.mxu0 %v206
  %1416 = vmatprep.subr.mxu0 %v215
  %1417 = vmatpush1.msra.mxu0 %v214
  %1418 = vmatprep.subr.mxu0 %v223
  %1419 = vmatpush1.msra.mxu0 %v222
  %1420 = vmatprep.subr.mxu0 %v231
  %1421 = vmatpush1.msra.mxu0 %v230
  %1422 = vmatprep.subr.mxu0 %v239
  %1423 = vmatpush1.msra.mxu0 %v238
  %1424 = vmatprep.subr.mxu0 %v247
  %1425 = vmatpush1.msra.mxu0 %v246
  %1426 = vmatprep.subr.mxu0 %v255
  %1427 = vmatpush1.msra.mxu0 %v254
  %1428 = vmatprep.subr.mxu0 %v263
  %1429 = vmatpush1.msra.mxu0 %v262
  %1430 = vmatprep.subr.mxu0 %v271
  %1431 = vmatpush1.msra.mxu0 %v270
  %1432 = vmatprep.subr.mxu0 %v279
  %1433 = vmatpush1.msra.mxu0 %v278
  %1434 = vmatprep.subr.mxu0 %v287
  %1435 = vmatpush1.msra.mxu0 %v286
  %1436 = vmatprep.mubr.f32.mxu0 %v1227
  %1437 = vmatmul.mubr.f32.gmra.mrb[0].mxu0 %v1220
  %v1438 = vpop.f32.mrb[0].mxu0
  %v1439 = vadd.f32 0.0, %v1438
  %v1440 = vpop.f32.mrb[0].mxu0
  %v1441 = vadd.f32 0.0, %v1440
  %1442 = vdwg.mxu0
  %1443 = vmatprep.subr.mxu0 %v41
  %1444 = vmatpush1.msra.mxu0 %v40
  %1445 = vmatprep.subr.mxu0 %v49
  %1446 = vmatpush1.msra.mxu0 %v48
  %1447 = vmatprep.subr.mxu0 %v57
  %1448 = vmatpush1.msra.mxu0 %v56
  %1449 = vmatprep.subr.mxu0 %v65
  %1450 = vmatpush1.msra.mxu0 %v64
  %1451 = vmatprep.subr.mxu0 %v73
  %1452 = vmatpush1.msra.mxu0 %v72
  %1453 = vmatprep.subr.mxu0 %v81
  %1454 = vmatpush1.msra.mxu0 %v80
  %1455 = vmatprep.subr.mxu0 %v89
  %1456 = vmatpush1.msra.mxu0 %v88
  %1457 = vmatprep.subr.mxu0 %v97
  %1458 = vmatpush1.msra.mxu0 %v96
  %1459 = vmatprep.subr.mxu0 %v105
  %1460 = vmatpush1.msra.mxu0 %v104
  %1461 = vmatprep.subr.mxu0 %v113
  %1462 = vmatpush1.msra.mxu0 %v112
  %1463 = vmatprep.subr.mxu0 %v121
  %1464 = vmatpush1.msra.mxu0 %v120
  %1465 = vmatprep.subr.mxu0 %v129
  %1466 = vmatpush1.msra.mxu0 %v128
  %1467 = vmatprep.subr.mxu0 %v137
  %1468 = vmatpush1.msra.mxu0 %v136
  %1469 = vmatprep.subr.mxu0 %v145
  %1470 = vmatpush1.msra.mxu0 %v144
  %1471 = vmatprep.subr.mxu0 %v153
  %1472 = vmatpush1.msra.mxu0 %v152
  %1473 = vmatprep.subr.mxu0 %v161
  %1474 = vmatpush1.msra.mxu0 %v160
  %1475 = vmatprep.subr.mxu0 %v169
  %1476 = vmatpush1.msra.mxu0 %v168
  %1477 = vmatprep.subr.mxu0 %v177
  %1478 = vmatpush1.msra.mxu0 %v176
  %1479 = vmatprep.subr.mxu0 %v185
  %1480 = vmatpush1.msra.mxu0 %v184
  %1481 = vmatprep.subr.mxu0 %v193
  %1482 = vmatpush1.msra.mxu0 %v192
  %1483 = vmatprep.subr.mxu0 %v201
  %1484 = vmatpush1.msra.mxu0 %v200
  %1485 = vmatprep.subr.mxu0 %v209
  %1486 = vmatpush1.msra.mxu0 %v208
  %1487 = vmatprep.subr.mxu0 %v217
  %1488 = vmatpush1.msra.mxu0 %v216
  %1489 = vmatprep.subr.mxu0 %v225
  %1490 = vmatpush1.msra.mxu0 %v224
  %1491 = vmatprep.subr.mxu0 %v233
  %1492 = vmatpush1.msra.mxu0 %v232
  %1493 = vmatprep.subr.mxu0 %v241
  %1494 = vmatpush1.msra.mxu0 %v240
  %1495 = vmatprep.subr.mxu0 %v249
  %1496 = vmatpush1.msra.mxu0 %v248
  %1497 = vmatprep.subr.mxu0 %v257
  %1498 = vmatpush1.msra.mxu0 %v256
  %1499 = vmatprep.subr.mxu0 %v265
  %1500 = vmatpush1.msra.mxu0 %v264
  %1501 = vmatprep.subr.mxu0 %v273
  %1502 = vmatpush1.msra.mxu0 %v272
  %1503 = vmatprep.subr.mxu0 %v281
  %1504 = vmatpush1.msra.mxu0 %v280
  %1505 = vmatprep.subr.mxu0 %v289
  %1506 = vmatpush1.msra.mxu0 %v288
  %1507 = vmatprep.mubr.f32.mxu0 %v1227
  %1508 = vmatmul.mubr.f32.gmra.mrb[0].mxu0 %v1220
  %v1509 = vpop.f32.mrb[0].mxu0
  %v1510 = vadd.f32 0.0, %v1509
  %v1511 = vpop.f32.mrb[0].mxu0
  %v1512 = vadd.f32 0.0, %v1511
  %1513 = vdwg.mxu0
  %v1522 = vcombine.low %v1297, %v1299
  %v1523 = vcombine.low %v1368, %v1370
  %v1524 = vcombine.low %v1439, %v1441
  %v1525 = vcombine.low %v1510, %v1512
  %v1527 = vunpack.c.l.s4 1966171168
  %v1528 = vunpack.c.0.s8 %v1527
  %v1529 = vlaneseq
  %v1530 = vshrl.u32 %v1529, 7
  %v1531 = vsub.s32 %v1528, %v1530
  %v1532 = vrot.slane %v1522, %v1531
  %v1534 = vunpack.c.l.s4 1966171168
  %v1535 = vunpack.c.0.s8 %v1534
  %v1536 = vlaneseq
  %v1537 = vshrl.u32 %v1536, 7
  %v1538 = vsub.s32 %v1535, %v1537
  %v1539 = vrot.slane %v1523, %v1538
  %v1541 = vunpack.c.l.s4 1966171168
  %v1542 = vunpack.c.0.s8 %v1541
  %v1543 = vlaneseq
  %v1544 = vshrl.u32 %v1543, 7
  %v1545 = vsub.s32 %v1542, %v1544
  %v1546 = vrot.slane %v1524, %v1545
  %v1548 = vunpack.c.l.s4 1966171168
  %v1549 = vunpack.c.0.s8 %v1548
  %v1550 = vlaneseq
  %v1551 = vshrl.u32 %v1550, 7
  %v1552 = vsub.s32 %v1549, %v1551
  %v1553 = vrot.slane %v1525, %v1552
  %v1554 = vcombine.low %v1532, %v1539
  %v1555 = vcombine.high %v1532, %v1539
  %v1556 = vcombine.low %v1546, %v1553
  %v1557 = vcombine.high %v1546, %v1553
  %v1559 = vunpack.c.l.s4 1966171168
  %v1560 = vunpack.c.0.s8 %v1559
  %v1561 = vlaneseq
  %v1562 = vshrl.u32 %v1561, 7
  %v1563 = vsub.s32 %v1560, %v1562
  %v1564 = vrot.slane %v1554, %v1563
  %v1566 = vunpack.c.l.s4 1966171168
  %v1567 = vunpack.c.0.s8 %v1566
  %v1568 = vlaneseq
  %v1569 = vshrl.u32 %v1568, 7
  %v1570 = vsub.s32 %v1567, %v1569
  %v1571 = vrot.slane %v1555, %v1570
  %v1573 = vunpack.c.l.s4 1966171168
  %v1574 = vunpack.c.0.s8 %v1573
  %v1575 = vlaneseq
  %v1576 = vshrl.u32 %v1575, 7
  %v1577 = vsub.s32 %v1574, %v1576
  %v1578 = vrot.slane %v1556, %v1577
  %v1580 = vunpack.c.l.s4 1966171168
  %v1581 = vunpack.c.0.s8 %v1580
  %v1582 = vlaneseq
  %v1583 = vshrl.u32 %v1582, 7
  %v1584 = vsub.s32 %v1581, %v1583
  %v1585 = vrot.slane %v1557, %v1584
  %v1586 = vcombine.low %v1564, %v1578
  %v1587 = vcombine.low %v1571, %v1585
  %v1590 = vadd.f32 %v1198, %v1586
  %v1591 = vadd.f32 %v1202, %v1587
  %v1592 = vxor.u32 %v1590, 2147483648
  %v1593 = vxor.u32 %v1591, 2147483648
  %v1594 = vmul.f32 %v1592, 1.442695
  %v1595 = vpow.pop %v1594
  %v1596 = vmul.f32 %v1593, 1.442695
  %v1597 = vpow.pop %v1596
  %v1598 = vadd.f32 %v1595, 1.0
  %v1599 = vadd.f32 %v1597, 1.0
  %v1600 = vrcp.pop %v1598
  %v1601 = vmul.f32 1.0, %v1600
  %v1602 = vrcp.pop %v1599
  %v1603 = vmul.f32 1.0, %v1602
  %v1606 = vrot.slane %v1590, 2
  %v1607 = vrot.slane %v1591, 2
  %v1610 = vxor.u32 %v1606, 2147483648
  %v1611 = vxor.u32 %v1607, 2147483648
  %v1612 = vmul.f32 %v1610, 1.442695
  %v1613 = vpow.pop %v1612
  %v1614 = vmul.f32 %v1611, 1.442695
  %v1615 = vpow.pop %v1614
  %v1616 = vadd.f32 %v1613, 1.0
  %v1617 = vadd.f32 %v1615, 1.0
  %v1618 = vrcp.pop %v1616
  %v1619 = vmul.f32 1.0, %v1618
  %v1620 = vrcp.pop %v1617
  %v1621 = vmul.f32 1.0, %v1620
  %v1622 = vrot.slane %v1590, 4
  %v1623 = vrot.slane %v1591, 4
  %v1626 = vtanh.pop %v1622
  %v1627 = vtanh.pop %v1623
  %v1628 = vrot.slane %v1590, 6
  %v1629 = vrot.slane %v1591, 6
  %v1632 = vxor.u32 %v1628, 2147483648
  %v1633 = vxor.u32 %v1629, 2147483648
  %v1634 = vmul.f32 %v1632, 1.442695
  %v1635 = vpow.pop %v1634
  %v1636 = vmul.f32 %v1633, 1.442695
  %v1637 = vpow.pop %v1636
  %v1638 = vadd.f32 %v1635, 1.0
  %v1639 = vadd.f32 %v1637, 1.0
  %v1640 = vrcp.pop %v1638
  %v1641 = vmul.f32 1.0, %v1640
  %v1642 = vrcp.pop %v1639
  %v1643 = vmul.f32 1.0, %v1642
  %v1644 = vmul.f32 %v1619, %v1189
  %v1645 = vmul.f32 %v1621, %v1190
  %v1646 = vmul.f32 %v1601, %v1626
  %v1647 = vmul.f32 %v1603, %v1627
  %v1648 = vadd.f32 %v1644, %v1646
  %v1649 = vadd.f32 %v1645, %v1647
  %v1650 = vtanh.pop %v1648
  %v1651 = vtanh.pop %v1649
  %v1652 = vmul.f32 %v1641, %v1650
  %v1653 = vmul.f32 %v1643, %v1651
  %s1654 = scalar_lea.vmem %s0, 3
  %v1655 = vld [vmem:[%s1654] ss:$8 sm:$0xf]
  %v1656 = vld [vmem:[%s1654] ss:$8 sm:$0xf0]
  %v1657 = vor.u32 %v1655, %v1656
  %s1658 = scalar_lea.vmem %s0, 67
  %v1659 = vld [vmem:[%s1658] ss:$8 sm:$0xf]
  %v1660 = vld [vmem:[%s1658] ss:$8 sm:$0xf0]
  %v1661 = vor.u32 %v1659, %v1660
  %v1664 = vcombine.low %v1652, %v1653
  %v1666 = vunpack.c.l.s4 1966171168
  %v1667 = vunpack.c.0.s8 %v1666
  %v1668 = vlaneseq
  %v1669 = vshrl.u32 %v1668, 7
  %v1670 = vsub.s32 %v1667, %v1669
  %v1671 = vrot.slane %v1664, %v1670
  %v1672 = vcombine.high %v1671, %v1671
  %v1674 = vunpack.c.l.s4 1966171168
  %v1675 = vunpack.c.0.s8 %v1674
  %v1676 = vlaneseq
  %v1677 = vshrl.u32 %v1676, 7
  %v1678 = vsub.s32 %v1675, %v1677
  %v1679 = vrot.slane %v1671, %v1678
  %v1681 = vunpack.c.l.s4 1966171168
  %v1682 = vunpack.c.0.s8 %v1681
  %v1683 = vlaneseq
  %v1684 = vshrl.u32 %v1683, 7
  %v1685 = vsub.s32 %v1682, %v1684
  %v1686 = vrot.slane %v1672, %v1685
  %1689 = vmatprep.subr.mxu0 %v35
  %1690 = vmatpush1.msra.mxu0 %v34
  %1691 = vmatprep.subr.mxu0 %v43
  %1692 = vmatpush1.msra.mxu0 %v42
  %1693 = vmatprep.subr.mxu0 %v51
  %1694 = vmatpush1.msra.mxu0 %v50
  %1695 = vmatprep.subr.mxu0 %v59
  %1696 = vmatpush1.msra.mxu0 %v58
  %1697 = vmatprep.subr.mxu0 %v67
  %1698 = vmatpush1.msra.mxu0 %v66
  %1699 = vmatprep.subr.mxu0 %v75
  %1700 = vmatpush1.msra.mxu0 %v74
  %1701 = vmatprep.subr.mxu0 %v83
  %1702 = vmatpush1.msra.mxu0 %v82
  %1703 = vmatprep.subr.mxu0 %v91
  %1704 = vmatpush1.msra.mxu0 %v90
  %1705 = vmatprep.subr.mxu0 %v99
  %1706 = vmatpush1.msra.mxu0 %v98
  %1707 = vmatprep.subr.mxu0 %v107
  %1708 = vmatpush1.msra.mxu0 %v106
  %1709 = vmatprep.subr.mxu0 %v115
  %1710 = vmatpush1.msra.mxu0 %v114
  %1711 = vmatprep.subr.mxu0 %v123
  %1712 = vmatpush1.msra.mxu0 %v122
  %1713 = vmatprep.subr.mxu0 %v131
  %1714 = vmatpush1.msra.mxu0 %v130
  %1715 = vmatprep.subr.mxu0 %v139
  %1716 = vmatpush1.msra.mxu0 %v138
  %1717 = vmatprep.subr.mxu0 %v147
  %1718 = vmatpush1.msra.mxu0 %v146
  %1719 = vmatprep.subr.mxu0 %v155
  %1720 = vmatpush1.msra.mxu0 %v154
  %1721 = vmatprep.subr.mxu0 %v163
  %1722 = vmatpush1.msra.mxu0 %v162
  %1723 = vmatprep.subr.mxu0 %v171
  %1724 = vmatpush1.msra.mxu0 %v170
  %1725 = vmatprep.subr.mxu0 %v179
  %1726 = vmatpush1.msra.mxu0 %v178
  %1727 = vmatprep.subr.mxu0 %v187
  %1728 = vmatpush1.msra.mxu0 %v186
  %1729 = vmatprep.subr.mxu0 %v195
  %1730 = vmatpush1.msra.mxu0 %v194
  %1731 = vmatprep.subr.mxu0 %v203
  %1732 = vmatpush1.msra.mxu0 %v202
  %1733 = vmatprep.subr.mxu0 %v211
  %1734 = vmatpush1.msra.mxu0 %v210
  %1735 = vmatprep.subr.mxu0 %v219
  %1736 = vmatpush1.msra.mxu0 %v218
  %1737 = vmatprep.subr.mxu0 %v227
  %1738 = vmatpush1.msra.mxu0 %v226
  %1739 = vmatprep.subr.mxu0 %v235
  %1740 = vmatpush1.msra.mxu0 %v234
  %1741 = vmatprep.subr.mxu0 %v243
  %1742 = vmatpush1.msra.mxu0 %v242
  %1743 = vmatprep.subr.mxu0 %v251
  %1744 = vmatpush1.msra.mxu0 %v250
  %1745 = vmatprep.subr.mxu0 %v259
  %1746 = vmatpush1.msra.mxu0 %v258
  %1747 = vmatprep.subr.mxu0 %v267
  %1748 = vmatpush1.msra.mxu0 %v266
  %1749 = vmatprep.subr.mxu0 %v275
  %1750 = vmatpush1.msra.mxu0 %v274
  %1751 = vmatprep.subr.mxu0 %v283
  %1752 = vmatpush1.msra.mxu0 %v282
  %1753 = vmatprep.mubr.f32.mxu0 %v1686
  %1754 = vmatmul.mubr.f32.gmra.mrb[0].mxu0 %v1679
  %v1755 = vpop.f32.mrb[0].mxu0
  %v1756 = vadd.f32 0.0, %v1755
  %v1757 = vpop.f32.mrb[0].mxu0
  %v1758 = vadd.f32 0.0, %v1757
  %1759 = vdwg.mxu0
  %1760 = vmatprep.subr.mxu0 %v37
  %1761 = vmatpush1.msra.mxu0 %v36
  %1762 = vmatprep.subr.mxu0 %v45
  %1763 = vmatpush1.msra.mxu0 %v44
  %1764 = vmatprep.subr.mxu0 %v53
  %1765 = vmatpush1.msra.mxu0 %v52
  %1766 = vmatprep.subr.mxu0 %v61
  %1767 = vmatpush1.msra.mxu0 %v60
  %1768 = vmatprep.subr.mxu0 %v69
  %1769 = vmatpush1.msra.mxu0 %v68
  %1770 = vmatprep.subr.mxu0 %v77
  %1771 = vmatpush1.msra.mxu0 %v76
  %1772 = vmatprep.subr.mxu0 %v85
  %1773 = vmatpush1.msra.mxu0 %v84
  %1774 = vmatprep.subr.mxu0 %v93
  %1775 = vmatpush1.msra.mxu0 %v92
  %1776 = vmatprep.subr.mxu0 %v101
  %1777 = vmatpush1.msra.mxu0 %v100
  %1778 = vmatprep.subr.mxu0 %v109
  %1779 = vmatpush1.msra.mxu0 %v108
  %1780 = vmatprep.subr.mxu0 %v117
  %1781 = vmatpush1.msra.mxu0 %v116
  %1782 = vmatprep.subr.mxu0 %v125
  %1783 = vmatpush1.msra.mxu0 %v124
  %1784 = vmatprep.subr.mxu0 %v133
  %1785 = vmatpush1.msra.mxu0 %v132
  %1786 = vmatprep.subr.mxu0 %v141
  %1787 = vmatpush1.msra.mxu0 %v140
  %1788 = vmatprep.subr.mxu0 %v149
  %1789 = vmatpush1.msra.mxu0 %v148
  %1790 = vmatprep.subr.mxu0 %v157
  %1791 = vmatpush1.msra.mxu0 %v156
  %1792 = vmatprep.subr.mxu0 %v165
  %1793 = vmatpush1.msra.mxu0 %v164
  %1794 = vmatprep.subr.mxu0 %v173
  %1795 = vmatpush1.msra.mxu0 %v172
  %1796 = vmatprep.subr.mxu0 %v181
  %1797 = vmatpush1.msra.mxu0 %v180
  %1798 = vmatprep.subr.mxu0 %v189
  %1799 = vmatpush1.msra.mxu0 %v188
  %1800 = vmatprep.subr.mxu0 %v197
  %1801 = vmatpush1.msra.mxu0 %v196
  %1802 = vmatprep.subr.mxu0 %v205
  %1803 = vmatpush1.msra.mxu0 %v204
  %1804 = vmatprep.subr.mxu0 %v213
  %1805 = vmatpush1.msra.mxu0 %v212
  %1806 = vmatprep.subr.mxu0 %v221
  %1807 = vmatpush1.msra.mxu0 %v220
  %1808 = vmatprep.subr.mxu0 %v229
  %1809 = vmatpush1.msra.mxu0 %v228
  %1810 = vmatprep.subr.mxu0 %v237
  %1811 = vmatpush1.msra.mxu0 %v236
  %1812 = vmatprep.subr.mxu0 %v245
  %1813 = vmatpush1.msra.mxu0 %v244
  %1814 = vmatprep.subr.mxu0 %v253
  %1815 = vmatpush1.msra.mxu0 %v252
  %1816 = vmatprep.subr.mxu0 %v261
  %1817 = vmatpush1.msra.mxu0 %v260
  %1818 = vmatprep.subr.mxu0 %v269
  %1819 = vmatpush1.msra.mxu0 %v268
  %1820 = vmatprep.subr.mxu0 %v277
  %1821 = vmatpush1.msra.mxu0 %v276
  %1822 = vmatprep.subr.mxu0 %v285
  %1823 = vmatpush1.msra.mxu0 %v284
  %1824 = vmatprep.mubr.f32.mxu0 %v1686
  %1825 = vmatmul.mubr.f32.gmra.mrb[0].mxu0 %v1679
  %v1826 = vpop.f32.mrb[0].mxu0
  %v1827 = vadd.f32 0.0, %v1826
  %v1828 = vpop.f32.mrb[0].mxu0
  %v1829 = vadd.f32 0.0, %v1828
  %1830 = vdwg.mxu0
  %1831 = vmatprep.subr.mxu0 %v39
  %1832 = vmatpush1.msra.mxu0 %v38
  %1833 = vmatprep.subr.mxu0 %v47
  %1834 = vmatpush1.msra.mxu0 %v46
  %1835 = vmatprep.subr.mxu0 %v55
  %1836 = vmatpush1.msra.mxu0 %v54
  %1837 = vmatprep.subr.mxu0 %v63
  %1838 = vmatpush1.msra.mxu0 %v62
  %1839 = vmatprep.subr.mxu0 %v71
  %1840 = vmatpush1.msra.mxu0 %v70
  %1841 = vmatprep.subr.mxu0 %v79
  %1842 = vmatpush1.msra.mxu0 %v78
  %1843 = vmatprep.subr.mxu0 %v87
  %1844 = vmatpush1.msra.mxu0 %v86
  %1845 = vmatprep.subr.mxu0 %v95
  %1846 = vmatpush1.msra.mxu0 %v94
  %1847 = vmatprep.subr.mxu0 %v103
  %1848 = vmatpush1.msra.mxu0 %v102
  %1849 = vmatprep.subr.mxu0 %v111
  %1850 = vmatpush1.msra.mxu0 %v110
  %1851 = vmatprep.subr.mxu0 %v119
  %1852 = vmatpush1.msra.mxu0 %v118
  %1853 = vmatprep.subr.mxu0 %v127
  %1854 = vmatpush1.msra.mxu0 %v126
  %1855 = vmatprep.subr.mxu0 %v135
  %1856 = vmatpush1.msra.mxu0 %v134
  %1857 = vmatprep.subr.mxu0 %v143
  %1858 = vmatpush1.msra.mxu0 %v142
  %1859 = vmatprep.subr.mxu0 %v151
  %1860 = vmatpush1.msra.mxu0 %v150
  %1861 = vmatprep.subr.mxu0 %v159
  %1862 = vmatpush1.msra.mxu0 %v158
  %1863 = vmatprep.subr.mxu0 %v167
  %1864 = vmatpush1.msra.mxu0 %v166
  %1865 = vmatprep.subr.mxu0 %v175
  %1866 = vmatpush1.msra.mxu0 %v174
  %1867 = vmatprep.subr.mxu0 %v183
  %1868 = vmatpush1.msra.mxu0 %v182
  %1869 = vmatprep.subr.mxu0 %v191
  %1870 = vmatpush1.msra.mxu0 %v190
  %1871 = vmatprep.subr.mxu0 %v199
  %1872 = vmatpush1.msra.mxu0 %v198
  %1873 = vmatprep.subr.mxu0 %v207
  %1874 = vmatpush1.msra.mxu0 %v206
  %1875 = vmatprep.subr.mxu0 %v215
  %1876 = vmatpush1.msra.mxu0 %v214
  %1877 = vmatprep.subr.mxu0 %v223
  %1878 = vmatpush1.msra.mxu0 %v222
  %1879 = vmatprep.subr.mxu0 %v231
  %1880 = vmatpush1.msra.mxu0 %v230
  %1881 = vmatprep.subr.mxu0 %v239
  %1882 = vmatpush1.msra.mxu0 %v238
  %1883 = vmatprep.subr.mxu0 %v247
  %1884 = vmatpush1.msra.mxu0 %v246
  %1885 = vmatprep.subr.mxu0 %v255
  %1886 = vmatpush1.msra.mxu0 %v254
  %1887 = vmatprep.subr.mxu0 %v263
  %1888 = vmatpush1.msra.mxu0 %v262
  %1889 = vmatprep.subr.mxu0 %v271
  %1890 = vmatpush1.msra.mxu0 %v270
  %1891 = vmatprep.subr.mxu0 %v279
  %1892 = vmatpush1.msra.mxu0 %v278
  %1893 = vmatprep.subr.mxu0 %v287
  %1894 = vmatpush1.msra.mxu0 %v286
  %1895 = vmatprep.mubr.f32.mxu0 %v1686
  %1896 = vmatmul.mubr.f32.gmra.mrb[0].mxu0 %v1679
  %v1897 = vpop.f32.mrb[0].mxu0
  %v1898 = vadd.f32 0.0, %v1897
  %v1899 = vpop.f32.mrb[0].mxu0
  %v1900 = vadd.f32 0.0, %v1899
  %1901 = vdwg.mxu0
  %1902 = vmatprep.subr.mxu0 %v41
  %1903 = vmatpush1.msra.mxu0 %v40
  %1904 = vmatprep.subr.mxu0 %v49
  %1905 = vmatpush1.msra.mxu0 %v48
  %1906 = vmatprep.subr.mxu0 %v57
  %1907 = vmatpush1.msra.mxu0 %v56
  %1908 = vmatprep.subr.mxu0 %v65
  %1909 = vmatpush1.msra.mxu0 %v64
  %1910 = vmatprep.subr.mxu0 %v73
  %1911 = vmatpush1.msra.mxu0 %v72
  %1912 = vmatprep.subr.mxu0 %v81
  %1913 = vmatpush1.msra.mxu0 %v80
  %1914 = vmatprep.subr.mxu0 %v89
  %1915 = vmatpush1.msra.mxu0 %v88
  %1916 = vmatprep.subr.mxu0 %v97
  %1917 = vmatpush1.msra.mxu0 %v96
  %1918 = vmatprep.subr.mxu0 %v105
  %1919 = vmatpush1.msra.mxu0 %v104
  %1920 = vmatprep.subr.mxu0 %v113
  %1921 = vmatpush1.msra.mxu0 %v112
  %1922 = vmatprep.subr.mxu0 %v121
  %1923 = vmatpush1.msra.mxu0 %v120
  %1924 = vmatprep.subr.mxu0 %v129
  %1925 = vmatpush1.msra.mxu0 %v128
  %1926 = vmatprep.subr.mxu0 %v137
  %1927 = vmatpush1.msra.mxu0 %v136
  %1928 = vmatprep.subr.mxu0 %v145
  %1929 = vmatpush1.msra.mxu0 %v144
  %1930 = vmatprep.subr.mxu0 %v153
  %1931 = vmatpush1.msra.mxu0 %v152
  %1932 = vmatprep.subr.mxu0 %v161
  %1933 = vmatpush1.msra.mxu0 %v160
  %1934 = vmatprep.subr.mxu0 %v169
  %1935 = vmatpush1.msra.mxu0 %v168
  %1936 = vmatprep.subr.mxu0 %v177
  %1937 = vmatpush1.msra.mxu0 %v176
  %1938 = vmatprep.subr.mxu0 %v185
  %1939 = vmatpush1.msra.mxu0 %v184
  %1940 = vmatprep.subr.mxu0 %v193
  %1941 = vmatpush1.msra.mxu0 %v192
  %1942 = vmatprep.subr.mxu0 %v201
  %1943 = vmatpush1.msra.mxu0 %v200
  %1944 = vmatprep.subr.mxu0 %v209
  %1945 = vmatpush1.msra.mxu0 %v208
  %1946 = vmatprep.subr.mxu0 %v217
  %1947 = vmatpush1.msra.mxu0 %v216
  %1948 = vmatprep.subr.mxu0 %v225
  %1949 = vmatpush1.msra.mxu0 %v224
  %1950 = vmatprep.subr.mxu0 %v233
  %1951 = vmatpush1.msra.mxu0 %v232
  %1952 = vmatprep.subr.mxu0 %v241
  %1953 = vmatpush1.msra.mxu0 %v240
  %1954 = vmatprep.subr.mxu0 %v249
  %1955 = vmatpush1.msra.mxu0 %v248
  %1956 = vmatprep.subr.mxu0 %v257
  %1957 = vmatpush1.msra.mxu0 %v256
  %1958 = vmatprep.subr.mxu0 %v265
  %1959 = vmatpush1.msra.mxu0 %v264
  %1960 = vmatprep.subr.mxu0 %v273
  %1961 = vmatpush1.msra.mxu0 %v272
  %1962 = vmatprep.subr.mxu0 %v281
  %1963 = vmatpush1.msra.mxu0 %v280
  %1964 = vmatprep.subr.mxu0 %v289
  %1965 = vmatpush1.msra.mxu0 %v288
  %1966 = vmatprep.mubr.f32.mxu0 %v1686
  %1967 = vmatmul.mubr.f32.gmra.mrb[0].mxu0 %v1679
  %v1968 = vpop.f32.mrb[0].mxu0
  %v1969 = vadd.f32 0.0, %v1968
  %v1970 = vpop.f32.mrb[0].mxu0
  %v1971 = vadd.f32 0.0, %v1970
  %1972 = vdwg.mxu0
  %v1981 = vcombine.low %v1756, %v1758
  %v1982 = vcombine.low %v1827, %v1829
  %v1983 = vcombine.low %v1898, %v1900
  %v1984 = vcombine.low %v1969, %v1971
  %v1986 = vunpack.c.l.s4 1966171168
  %v1987 = vunpack.c.0.s8 %v1986
  %v1988 = vlaneseq
  %v1989 = vshrl.u32 %v1988, 7
  %v1990 = vsub.s32 %v1987, %v1989
  %v1991 = vrot.slane %v1981, %v1990
  %v1993 = vunpack.c.l.s4 1966171168
  %v1994 = vunpack.c.0.s8 %v1993
  %v1995 = vlaneseq
  %v1996 = vshrl.u32 %v1995, 7
  %v1997 = vsub.s32 %v1994, %v1996
  %v1998 = vrot.slane %v1982, %v1997
  %v2000 = vunpack.c.l.s4 1966171168
  %v2001 = vunpack.c.0.s8 %v2000
  %v2002 = vlaneseq
  %v2003 = vshrl.u32 %v2002, 7
  %v2004 = vsub.s32 %v2001, %v2003
  %v2005 = vrot.slane %v1983, %v2004
  %v2007 = vunpack.c.l.s4 1966171168
  %v2008 = vunpack.c.0.s8 %v2007
  %v2009 = vlaneseq
  %v2010 = vshrl.u32 %v2009, 7
  %v2011 = vsub.s32 %v2008, %v2010
  %v2012 = vrot.slane %v1984, %v2011
  %v2013 = vcombine.low %v1991, %v1998
  %v2014 = vcombine.high %v1991, %v1998
  %v2015 = vcombine.low %v2005, %v2012
  %v2016 = vcombine.high %v2005, %v2012
  %v2018 = vunpack.c.l.s4 1966171168
  %v2019 = vunpack.c.0.s8 %v2018
  %v2020 = vlaneseq
  %v2021 = vshrl.u32 %v2020, 7
  %v2022 = vsub.s32 %v2019, %v2021
  %v2023 = vrot.slane %v2013, %v2022
  %v2025 = vunpack.c.l.s4 1966171168
  %v2026 = vunpack.c.0.s8 %v2025
  %v2027 = vlaneseq
  %v2028 = vshrl.u32 %v2027, 7
  %v2029 = vsub.s32 %v2026, %v2028
  %v2030 = vrot.slane %v2014, %v2029
  %v2032 = vunpack.c.l.s4 1966171168
  %v2033 = vunpack.c.0.s8 %v2032
  %v2034 = vlaneseq
  %v2035 = vshrl.u32 %v2034, 7
  %v2036 = vsub.s32 %v2033, %v2035
  %v2037 = vrot.slane %v2015, %v2036
  %v2039 = vunpack.c.l.s4 1966171168
  %v2040 = vunpack.c.0.s8 %v2039
  %v2041 = vlaneseq
  %v2042 = vshrl.u32 %v2041, 7
  %v2043 = vsub.s32 %v2040, %v2042
  %v2044 = vrot.slane %v2016, %v2043
  %v2045 = vcombine.low %v2023, %v2037
  %v2046 = vcombine.low %v2030, %v2044
  %v2049 = vadd.f32 %v1657, %v2045
  %v2050 = vadd.f32 %v1661, %v2046
  %v2051 = vxor.u32 %v2049, 2147483648
  %v2052 = vxor.u32 %v2050, 2147483648
  %v2053 = vmul.f32 %v2051, 1.442695
  %v2054 = vpow.pop %v2053
  %v2055 = vmul.f32 %v2052, 1.442695
  %v2056 = vpow.pop %v2055
  %v2057 = vadd.f32 %v2054, 1.0
  %v2058 = vadd.f32 %v2056, 1.0
  %v2059 = vrcp.pop %v2057
  %v2060 = vmul.f32 1.0, %v2059
  %v2061 = vrcp.pop %v2058
  %v2062 = vmul.f32 1.0, %v2061
  %v2065 = vrot.slane %v2049, 2
  %v2066 = vrot.slane %v2050, 2
  %v2069 = vxor.u32 %v2065, 2147483648
  %v2070 = vxor.u32 %v2066, 2147483648
  %v2071 = vmul.f32 %v2069, 1.442695
  %v2072 = vpow.pop %v2071
  %v2073 = vmul.f32 %v2070, 1.442695
  %v2074 = vpow.pop %v2073
  %v2075 = vadd.f32 %v2072, 1.0
  %v2076 = vadd.f32 %v2074, 1.0
  %v2077 = vrcp.pop %v2075
  %v2078 = vmul.f32 1.0, %v2077
  %v2079 = vrcp.pop %v2076
  %v2080 = vmul.f32 1.0, %v2079
  %v2081 = vrot.slane %v2049, 4
  %v2082 = vrot.slane %v2050, 4
  %v2085 = vtanh.pop %v2081
  %v2086 = vtanh.pop %v2082
  %v2087 = vrot.slane %v2049, 6
  %v2088 = vrot.slane %v2050, 6
  %v2091 = vxor.u32 %v2087, 2147483648
  %v2092 = vxor.u32 %v2088, 2147483648
  %v2093 = vmul.f32 %v2091, 1.442695
  %v2094 = vpow.pop %v2093
  %v2095 = vmul.f32 %v2092, 1.442695
  %v2096 = vpow.pop %v2095
  %v2097 = vadd.f32 %v2094, 1.0
  %v2098 = vadd.f32 %v2096, 1.0
  %v2099 = vrcp.pop %v2097
  %v2100 = vmul.f32 1.0, %v2099
  %v2101 = vrcp.pop %v2098
  %v2102 = vmul.f32 1.0, %v2101
  %v2103 = vmul.f32 %v2078, %v1648
  %v2104 = vmul.f32 %v2080, %v1649
  %v2105 = vmul.f32 %v2060, %v2085
  %v2106 = vmul.f32 %v2062, %v2086
  %v2107 = vadd.f32 %v2103, %v2105
  %v2108 = vadd.f32 %v2104, %v2106
  %v2109 = vtanh.pop %v2107
  %v2110 = vtanh.pop %v2108
  %v2111 = vmul.f32 %v2100, %v2109
  %v2112 = vmul.f32 %v2102, %v2110
  %s2113 = scalar_lea.vmem %s0, 4
  %v2114 = vld [vmem:[%s2113] ss:$8 sm:$0xf]
  %v2115 = vld [vmem:[%s2113] ss:$8 sm:$0xf0]
  %v2116 = vor.u32 %v2114, %v2115
  %s2117 = scalar_lea.vmem %s0, 68
  %v2118 = vld [vmem:[%s2117] ss:$8 sm:$0xf]
  %v2119 = vld [vmem:[%s2117] ss:$8 sm:$0xf0]
  %v2120 = vor.u32 %v2118, %v2119
  %v2123 = vcombine.low %v2111, %v2112
  %v2125 = vunpack.c.l.s4 1966171168
  %v2126 = vunpack.c.0.s8 %v2125
  %v2127 = vlaneseq
  %v2128 = vshrl.u32 %v2127, 7
  %v2129 = vsub.s32 %v2126, %v2128
  %v2130 = vrot.slane %v2123, %v2129
  %v2131 = vcombine.high %v2130, %v2130
  %v2133 = vunpack.c.l.s4 1966171168
  %v2134 = vunpack.c.0.s8 %v2133
  %v2135 = vlaneseq
  %v2136 = vshrl.u32 %v2135, 7
  %v2137 = vsub.s32 %v2134, %v2136
  %v2138 = vrot.slane %v2130, %v2137
  %v2140 = vunpack.c.l.s4 1966171168
  %v2141 = vunpack.c.0.s8 %v2140
  %v2142 = vlaneseq
  %v2143 = vshrl.u32 %v2142, 7
  %v2144 = vsub.s32 %v2141, %v2143
  %v2145 = vrot.slane %v2131, %v2144
  %2148 = vmatprep.subr.mxu0 %v35
  %2149 = vmatpush1.msra.mxu0 %v34
  %2150 = vmatprep.subr.mxu0 %v43
  %2151 = vmatpush1.msra.mxu0 %v42
  %2152 = vmatprep.subr.mxu0 %v51
  %2153 = vmatpush1.msra.mxu0 %v50
  %2154 = vmatprep.subr.mxu0 %v59
  %2155 = vmatpush1.msra.mxu0 %v58
  %2156 = vmatprep.subr.mxu0 %v67
  %2157 = vmatpush1.msra.mxu0 %v66
  %2158 = vmatprep.subr.mxu0 %v75
  %2159 = vmatpush1.msra.mxu0 %v74
  %2160 = vmatprep.subr.mxu0 %v83
  %2161 = vmatpush1.msra.mxu0 %v82
  %2162 = vmatprep.subr.mxu0 %v91
  %2163 = vmatpush1.msra.mxu0 %v90
  %2164 = vmatprep.subr.mxu0 %v99
  %2165 = vmatpush1.msra.mxu0 %v98
  %2166 = vmatprep.subr.mxu0 %v107
  %2167 = vmatpush1.msra.mxu0 %v106
  %2168 = vmatprep.subr.mxu0 %v115
  %2169 = vmatpush1.msra.mxu0 %v114
  %2170 = vmatprep.subr.mxu0 %v123
  %2171 = vmatpush1.msra.mxu0 %v122
  %2172 = vmatprep.subr.mxu0 %v131
  %2173 = vmatpush1.msra.mxu0 %v130
  %2174 = vmatprep.subr.mxu0 %v139
  %2175 = vmatpush1.msra.mxu0 %v138
  %2176 = vmatprep.subr.mxu0 %v147
  %2177 = vmatpush1.msra.mxu0 %v146
  %2178 = vmatprep.subr.mxu0 %v155
  %2179 = vmatpush1.msra.mxu0 %v154
  %2180 = vmatprep.subr.mxu0 %v163
  %2181 = vmatpush1.msra.mxu0 %v162
  %2182 = vmatprep.subr.mxu0 %v171
  %2183 = vmatpush1.msra.mxu0 %v170
  %2184 = vmatprep.subr.mxu0 %v179
  %2185 = vmatpush1.msra.mxu0 %v178
  %2186 = vmatprep.subr.mxu0 %v187
  %2187 = vmatpush1.msra.mxu0 %v186
  %2188 = vmatprep.subr.mxu0 %v195
  %2189 = vmatpush1.msra.mxu0 %v194
  %2190 = vmatprep.subr.mxu0 %v203
  %2191 = vmatpush1.msra.mxu0 %v202
  %2192 = vmatprep.subr.mxu0 %v211
  %2193 = vmatpush1.msra.mxu0 %v210
  %2194 = vmatprep.subr.mxu0 %v219
  %2195 = vmatpush1.msra.mxu0 %v218
  %2196 = vmatprep.subr.mxu0 %v227
  %2197 = vmatpush1.msra.mxu0 %v226
  %2198 = vmatprep.subr.mxu0 %v235
  %2199 = vmatpush1.msra.mxu0 %v234
  %2200 = vmatprep.subr.mxu0 %v243
  %2201 = vmatpush1.msra.mxu0 %v242
  %2202 = vmatprep.subr.mxu0 %v251
  %2203 = vmatpush1.msra.mxu0 %v250
  %2204 = vmatprep.subr.mxu0 %v259
  %2205 = vmatpush1.msra.mxu0 %v258
  %2206 = vmatprep.subr.mxu0 %v267
  %2207 = vmatpush1.msra.mxu0 %v266
  %2208 = vmatprep.subr.mxu0 %v275
  %2209 = vmatpush1.msra.mxu0 %v274
  %2210 = vmatprep.subr.mxu0 %v283
  %2211 = vmatpush1.msra.mxu0 %v282
  %2212 = vmatprep.mubr.f32.mxu0 %v2145
  %2213 = vmatmul.mubr.f32.gmra.mrb[0].mxu0 %v2138
  %v2214 = vpop.f32.mrb[0].mxu0
  %v2215 = vadd.f32 0.0, %v2214
  %v2216 = vpop.f32.mrb[0].mxu0
  %v2217 = vadd.f32 0.0, %v2216
  %2218 = vdwg.mxu0
  %2219 = vmatprep.subr.mxu0 %v37
  %2220 = vmatpush1.msra.mxu0 %v36
  %2221 = vmatprep.subr.mxu0 %v45
  %2222 = vmatpush1.msra.mxu0 %v44
  %2223 = vmatprep.subr.mxu0 %v53
  %2224 = vmatpush1.msra.mxu0 %v52
  %2225 = vmatprep.subr.mxu0 %v61
  %2226 = vmatpush1.msra.mxu0 %v60
  %2227 = vmatprep.subr.mxu0 %v69
  %2228 = vmatpush1.msra.mxu0 %v68
  %2229 = vmatprep.subr.mxu0 %v77
  %2230 = vmatpush1.msra.mxu0 %v76
  %2231 = vmatprep.subr.mxu0 %v85
  %2232 = vmatpush1.msra.mxu0 %v84
  %2233 = vmatprep.subr.mxu0 %v93
  %2234 = vmatpush1.msra.mxu0 %v92
  %2235 = vmatprep.subr.mxu0 %v101
  %2236 = vmatpush1.msra.mxu0 %v100
  %2237 = vmatprep.subr.mxu0 %v109
  %2238 = vmatpush1.msra.mxu0 %v108
  %2239 = vmatprep.subr.mxu0 %v117
  %2240 = vmatpush1.msra.mxu0 %v116
  %2241 = vmatprep.subr.mxu0 %v125
  %2242 = vmatpush1.msra.mxu0 %v124
  %2243 = vmatprep.subr.mxu0 %v133
  %2244 = vmatpush1.msra.mxu0 %v132
  %2245 = vmatprep.subr.mxu0 %v141
  %2246 = vmatpush1.msra.mxu0 %v140
  %2247 = vmatprep.subr.mxu0 %v149
  %2248 = vmatpush1.msra.mxu0 %v148
  %2249 = vmatprep.subr.mxu0 %v157
  %2250 = vmatpush1.msra.mxu0 %v156
  %2251 = vmatprep.subr.mxu0 %v165
  %2252 = vmatpush1.msra.mxu0 %v164
  %2253 = vmatprep.subr.mxu0 %v173
  %2254 = vmatpush1.msra.mxu0 %v172
  %2255 = vmatprep.subr.mxu0 %v181
  %2256 = vmatpush1.msra.mxu0 %v180
  %2257 = vmatprep.subr.mxu0 %v189
  %2258 = vmatpush1.msra.mxu0 %v188
  %2259 = vmatprep.subr.mxu0 %v197
  %2260 = vmatpush1.msra.mxu0 %v196
  %2261 = vmatprep.subr.mxu0 %v205
  %2262 = vmatpush1.msra.mxu0 %v204
  %2263 = vmatprep.subr.mxu0 %v213
  %2264 = vmatpush1.msra.mxu0 %v212
  %2265 = vmatprep.subr.mxu0 %v221
  %2266 = vmatpush1.msra.mxu0 %v220
  %2267 = vmatprep.subr.mxu0 %v229
  %2268 = vmatpush1.msra.mxu0 %v228
  %2269 = vmatprep.subr.mxu0 %v237
  %2270 = vmatpush1.msra.mxu0 %v236
  %2271 = vmatprep.subr.mxu0 %v245
  %2272 = vmatpush1.msra.mxu0 %v244
  %2273 = vmatprep.subr.mxu0 %v253
  %2274 = vmatpush1.msra.mxu0 %v252
  %2275 = vmatprep.subr.mxu0 %v261
  %2276 = vmatpush1.msra.mxu0 %v260
  %2277 = vmatprep.subr.mxu0 %v269
  %2278 = vmatpush1.msra.mxu0 %v268
  %2279 = vmatprep.subr.mxu0 %v277
  %2280 = vmatpush1.msra.mxu0 %v276
  %2281 = vmatprep.subr.mxu0 %v285
  %2282 = vmatpush1.msra.mxu0 %v284
  %2283 = vmatprep.mubr.f32.mxu0 %v2145
  %2284 = vmatmul.mubr.f32.gmra.mrb[0].mxu0 %v2138
  %v2285 = vpop.f32.mrb[0].mxu0
  %v2286 = vadd.f32 0.0, %v2285
  %v2287 = vpop.f32.mrb[0].mxu0
  %v2288 = vadd.f32 0.0, %v2287
  %2289 = vdwg.mxu0
  %2290 = vmatprep.subr.mxu0 %v39
  %2291 = vmatpush1.msra.mxu0 %v38
  %2292 = vmatprep.subr.mxu0 %v47
  %2293 = vmatpush1.msra.mxu0 %v46
  %2294 = vmatprep.subr.mxu0 %v55
  %2295 = vmatpush1.msra.mxu0 %v54
  %2296 = vmatprep.subr.mxu0 %v63
  %2297 = vmatpush1.msra.mxu0 %v62
  %2298 = vmatprep.subr.mxu0 %v71
  %2299 = vmatpush1.msra.mxu0 %v70
  %2300 = vmatprep.subr.mxu0 %v79
  %2301 = vmatpush1.msra.mxu0 %v78
  %2302 = vmatprep.subr.mxu0 %v87
  %2303 = vmatpush1.msra.mxu0 %v86
  %2304 = vmatprep.subr.mxu0 %v95
  %2305 = vmatpush1.msra.mxu0 %v94
  %2306 = vmatprep.subr.mxu0 %v103
  %2307 = vmatpush1.msra.mxu0 %v102
  %2308 = vmatprep.subr.mxu0 %v111
  %2309 = vmatpush1.msra.mxu0 %v110
  %2310 = vmatprep.subr.mxu0 %v119
  %2311 = vmatpush1.msra.mxu0 %v118
  %2312 = vmatprep.subr.mxu0 %v127
  %2313 = vmatpush1.msra.mxu0 %v126
  %2314 = vmatprep.subr.mxu0 %v135
  %2315 = vmatpush1.msra.mxu0 %v134
  %2316 = vmatprep.subr.mxu0 %v143
  %2317 = vmatpush1.msra.mxu0 %v142
  %2318 = vmatprep.subr.mxu0 %v151
  %2319 = vmatpush1.msra.mxu0 %v150
  %2320 = vmatprep.subr.mxu0 %v159
  %2321 = vmatpush1.msra.mxu0 %v158
  %2322 = vmatprep.subr.mxu0 %v167
  %2323 = vmatpush1.msra.mxu0 %v166
  %2324 = vmatprep.subr.mxu0 %v175
  %2325 = vmatpush1.msra.mxu0 %v174
  %2326 = vmatprep.subr.mxu0 %v183
  %2327 = vmatpush1.msra.mxu0 %v182
  %2328 = vmatprep.subr.mxu0 %v191
  %2329 = vmatpush1.msra.mxu0 %v190
  %2330 = vmatprep.subr.mxu0 %v199
  %2331 = vmatpush1.msra.mxu0 %v198
  %2332 = vmatprep.subr.mxu0 %v207
  %2333 = vmatpush1.msra.mxu0 %v206
  %2334 = vmatprep.subr.mxu0 %v215
  %2335 = vmatpush1.msra.mxu0 %v214
  %2336 = vmatprep.subr.mxu0 %v223
  %2337 = vmatpush1.msra.mxu0 %v222
  %2338 = vmatprep.subr.mxu0 %v231
  %2339 = vmatpush1.msra.mxu0 %v230
  %2340 = vmatprep.subr.mxu0 %v239
  %2341 = vmatpush1.msra.mxu0 %v238
  %2342 = vmatprep.subr.mxu0 %v247
  %2343 = vmatpush1.msra.mxu0 %v246
  %2344 = vmatprep.subr.mxu0 %v255
  %2345 = vmatpush1.msra.mxu0 %v254
  %2346 = vmatprep.subr.mxu0 %v263
  %2347 = vmatpush1.msra.mxu0 %v262
  %2348 = vmatprep.subr.mxu0 %v271
  %2349 = vmatpush1.msra.mxu0 %v270
  %2350 = vmatprep.subr.mxu0 %v279
  %2351 = vmatpush1.msra.mxu0 %v278
  %2352 = vmatprep.subr.mxu0 %v287
  %2353 = vmatpush1.msra.mxu0 %v286
  %2354 = vmatprep.mubr.f32.mxu0 %v2145
  %2355 = vmatmul.mubr.f32.gmra.mrb[0].mxu0 %v2138
  %v2356 = vpop.f32.mrb[0].mxu0
  %v2357 = vadd.f32 0.0, %v2356
  %v2358 = vpop.f32.mrb[0].mxu0
  %v2359 = vadd.f32 0.0, %v2358
  %2360 = vdwg.mxu0
  %2361 = vmatprep.subr.mxu0 %v41
  %2362 = vmatpush1.msra.mxu0 %v40
  %2363 = vmatprep.subr.mxu0 %v49
  %2364 = vmatpush1.msra.mxu0 %v48
  %2365 = vmatprep.subr.mxu0 %v57
  %2366 = vmatpush1.msra.mxu0 %v56
  %2367 = vmatprep.subr.mxu0 %v65
  %2368 = vmatpush1.msra.mxu0 %v64
  %2369 = vmatprep.subr.mxu0 %v73
  %2370 = vmatpush1.msra.mxu0 %v72
  %2371 = vmatprep.subr.mxu0 %v81
  %2372 = vmatpush1.msra.mxu0 %v80
  %2373 = vmatprep.subr.mxu0 %v89
  %2374 = vmatpush1.msra.mxu0 %v88
  %2375 = vmatprep.subr.mxu0 %v97
  %2376 = vmatpush1.msra.mxu0 %v96
  %2377 = vmatprep.subr.mxu0 %v105
  %2378 = vmatpush1.msra.mxu0 %v104
  %2379 = vmatprep.subr.mxu0 %v113
  %2380 = vmatpush1.msra.mxu0 %v112
  %2381 = vmatprep.subr.mxu0 %v121
  %2382 = vmatpush1.msra.mxu0 %v120
  %2383 = vmatprep.subr.mxu0 %v129
  %2384 = vmatpush1.msra.mxu0 %v128
  %2385 = vmatprep.subr.mxu0 %v137
  %2386 = vmatpush1.msra.mxu0 %v136
  %2387 = vmatprep.subr.mxu0 %v145
  %2388 = vmatpush1.msra.mxu0 %v144
  %2389 = vmatprep.subr.mxu0 %v153
  %2390 = vmatpush1.msra.mxu0 %v152
  %2391 = vmatprep.subr.mxu0 %v161
  %2392 = vmatpush1.msra.mxu0 %v160
  %2393 = vmatprep.subr.mxu0 %v169
  %2394 = vmatpush1.msra.mxu0 %v168
  %2395 = vmatprep.subr.mxu0 %v177
  %2396 = vmatpush1.msra.mxu0 %v176
  %2397 = vmatprep.subr.mxu0 %v185
  %2398 = vmatpush1.msra.mxu0 %v184
  %2399 = vmatprep.subr.mxu0 %v193
  %2400 = vmatpush1.msra.mxu0 %v192
  %2401 = vmatprep.subr.mxu0 %v201
  %2402 = vmatpush1.msra.mxu0 %v200
  %2403 = vmatprep.subr.mxu0 %v209
  %2404 = vmatpush1.msra.mxu0 %v208
  %2405 = vmatprep.subr.mxu0 %v217
  %2406 = vmatpush1.msra.mxu0 %v216
  %2407 = vmatprep.subr.mxu0 %v225
  %2408 = vmatpush1.msra.mxu0 %v224
  %2409 = vmatprep.subr.mxu0 %v233
  %2410 = vmatpush1.msra.mxu0 %v232
  %2411 = vmatprep.subr.mxu0 %v241
  %2412 = vmatpush1.msra.mxu0 %v240
  %2413 = vmatprep.subr.mxu0 %v249
  %2414 = vmatpush1.msra.mxu0 %v248
  %2415 = vmatprep.subr.mxu0 %v257
  %2416 = vmatpush1.msra.mxu0 %v256
  %2417 = vmatprep.subr.mxu0 %v265
  %2418 = vmatpush1.msra.mxu0 %v264
  %2419 = vmatprep.subr.mxu0 %v273
  %2420 = vmatpush1.msra.mxu0 %v272
  %2421 = vmatprep.subr.mxu0 %v281
  %2422 = vmatpush1.msra.mxu0 %v280
  %2423 = vmatprep.subr.mxu0 %v289
  %2424 = vmatpush1.msra.mxu0 %v288
  %2425 = vmatprep.mubr.f32.mxu0 %v2145
  %2426 = vmatmul.mubr.f32.gmra.mrb[0].mxu0 %v2138
  %v2427 = vpop.f32.mrb[0].mxu0
  %v2428 = vadd.f32 0.0, %v2427
  %v2429 = vpop.f32.mrb[0].mxu0
  %v2430 = vadd.f32 0.0, %v2429
  %2431 = vdwg.mxu0
  %v2440 = vcombine.low %v2215, %v2217
  %v2441 = vcombine.low %v2286, %v2288
  %v2442 = vcombine.low %v2357, %v2359
  %v2443 = vcombine.low %v2428, %v2430
  %v2445 = vunpack.c.l.s4 1966171168
  %v2446 = vunpack.c.0.s8 %v2445
  %v2447 = vlaneseq
  %v2448 = vshrl.u32 %v2447, 7
  %v2449 = vsub.s32 %v2446, %v2448
  %v2450 = vrot.slane %v2440, %v2449
  %v2452 = vunpack.c.l.s4 1966171168
  %v2453 = vunpack.c.0.s8 %v2452
  %v2454 = vlaneseq
  %v2455 = vshrl.u32 %v2454, 7
  %v2456 = vsub.s32 %v2453, %v2455
  %v2457 = vrot.slane %v2441, %v2456
  %v2459 = vunpack.c.l.s4 1966171168
  %v2460 = vunpack.c.0.s8 %v2459
  %v2461 = vlaneseq
  %v2462 = vshrl.u32 %v2461, 7
  %v2463 = vsub.s32 %v2460, %v2462
  %v2464 = vrot.slane %v2442, %v2463
  %v2466 = vunpack.c.l.s4 1966171168
  %v2467 = vunpack.c.0.s8 %v2466
  %v2468 = vlaneseq
  %v2469 = vshrl.u32 %v2468, 7
  %v2470 = vsub.s32 %v2467, %v2469
  %v2471 = vrot.slane %v2443, %v2470
  %v2472 = vcombine.low %v2450, %v2457
  %v2473 = vcombine.high %v2450, %v2457
  %v2474 = vcombine.low %v2464, %v2471
  %v2475 = vcombine.high %v2464, %v2471
  %v2477 = vunpack.c.l.s4 1966171168
  %v2478 = vunpack.c.0.s8 %v2477
  %v2479 = vlaneseq
  %v2480 = vshrl.u32 %v2479, 7
  %v2481 = vsub.s32 %v2478, %v2480
  %v2482 = vrot.slane %v2472, %v2481
  %v2484 = vunpack.c.l.s4 1966171168
  %v2485 = vunpack.c.0.s8 %v2484
  %v2486 = vlaneseq
  %v2487 = vshrl.u32 %v2486, 7
  %v2488 = vsub.s32 %v2485, %v2487
  %v2489 = vrot.slane %v2473, %v2488
  %v2491 = vunpack.c.l.s4 1966171168
  %v2492 = vunpack.c.0.s8 %v2491
  %v2493 = vlaneseq
  %v2494 = vshrl.u32 %v2493, 7
  %v2495 = vsub.s32 %v2492, %v2494
  %v2496 = vrot.slane %v2474, %v2495
  %v2498 = vunpack.c.l.s4 1966171168
  %v2499 = vunpack.c.0.s8 %v2498
  %v2500 = vlaneseq
  %v2501 = vshrl.u32 %v2500, 7
  %v2502 = vsub.s32 %v2499, %v2501
  %v2503 = vrot.slane %v2475, %v2502
  %v2504 = vcombine.low %v2482, %v2496
  %v2505 = vcombine.low %v2489, %v2503
  %v2508 = vadd.f32 %v2116, %v2504
  %v2509 = vadd.f32 %v2120, %v2505
  %v2510 = vxor.u32 %v2508, 2147483648
  %v2511 = vxor.u32 %v2509, 2147483648
  %v2512 = vmul.f32 %v2510, 1.442695
  %v2513 = vpow.pop %v2512
  %v2514 = vmul.f32 %v2511, 1.442695
  %v2515 = vpow.pop %v2514
  %v2516 = vadd.f32 %v2513, 1.0
  %v2517 = vadd.f32 %v2515, 1.0
  %v2518 = vrcp.pop %v2516
  %v2519 = vmul.f32 1.0, %v2518
  %v2520 = vrcp.pop %v2517
  %v2521 = vmul.f32 1.0, %v2520
  %v2524 = vrot.slane %v2508, 2
  %v2525 = vrot.slane %v2509, 2
  %v2528 = vxor.u32 %v2524, 2147483648
  %v2529 = vxor.u32 %v2525, 2147483648
  %v2530 = vmul.f32 %v2528, 1.442695
  %v2531 = vpow.pop %v2530
  %v2532 = vmul.f32 %v2529, 1.442695
  %v2533 = vpow.pop %v2532
  %v2534 = vadd.f32 %v2531, 1.0
  %v2535 = vadd.f32 %v2533, 1.0
  %v2536 = vrcp.pop %v2534
  %v2537 = vmul.f32 1.0, %v2536
  %v2538 = vrcp.pop %v2535
  %v2539 = vmul.f32 1.0, %v2538
  %v2540 = vrot.slane %v2508, 4
  %v2541 = vrot.slane %v2509, 4
  %v2544 = vtanh.pop %v2540
  %v2545 = vtanh.pop %v2541
  %v2546 = vrot.slane %v2508, 6
  %v2547 = vrot.slane %v2509, 6
  %v2550 = vxor.u32 %v2546, 2147483648
  %v2551 = vxor.u32 %v2547, 2147483648
  %v2552 = vmul.f32 %v2550, 1.442695
  %v2553 = vpow.pop %v2552
  %v2554 = vmul.f32 %v2551, 1.442695
  %v2555 = vpow.pop %v2554
  %v2556 = vadd.f32 %v2553, 1.0
  %v2557 = vadd.f32 %v2555, 1.0
  %v2558 = vrcp.pop %v2556
  %v2559 = vmul.f32 1.0, %v2558
  %v2560 = vrcp.pop %v2557
  %v2561 = vmul.f32 1.0, %v2560
  %v2562 = vmul.f32 %v2537, %v2107
  %v2563 = vmul.f32 %v2539, %v2108
  %v2564 = vmul.f32 %v2519, %v2544
  %v2565 = vmul.f32 %v2521, %v2545
  %v2566 = vadd.f32 %v2562, %v2564
  %v2567 = vadd.f32 %v2563, %v2565
  %v2568 = vtanh.pop %v2566
  %v2569 = vtanh.pop %v2567
  %v2570 = vmul.f32 %v2559, %v2568
  %v2571 = vmul.f32 %v2561, %v2569
  %s2572 = scalar_lea.vmem %s0, 5
  %v2573 = vld [vmem:[%s2572] ss:$8 sm:$0xf]
  %v2574 = vld [vmem:[%s2572] ss:$8 sm:$0xf0]
  %v2575 = vor.u32 %v2573, %v2574
  %s2576 = scalar_lea.vmem %s0, 69
  %v2577 = vld [vmem:[%s2576] ss:$8 sm:$0xf]
  %v2578 = vld [vmem:[%s2576] ss:$8 sm:$0xf0]
  %v2579 = vor.u32 %v2577, %v2578
  %v2582 = vcombine.low %v2570, %v2571
  %v2584 = vunpack.c.l.s4 1966171168
  %v2585 = vunpack.c.0.s8 %v2584
  %v2586 = vlaneseq
  %v2587 = vshrl.u32 %v2586, 7
  %v2588 = vsub.s32 %v2585, %v2587
  %v2589 = vrot.slane %v2582, %v2588
  %v2590 = vcombine.high %v2589, %v2589
  %v2592 = vunpack.c.l.s4 1966171168
  %v2593 = vunpack.c.0.s8 %v2592
  %v2594 = vlaneseq
  %v2595 = vshrl.u32 %v2594, 7
  %v2596 = vsub.s32 %v2593, %v2595
  %v2597 = vrot.slane %v2589, %v2596
  %v2599 = vunpack.c.l.s4 1966171168
  %v2600 = vunpack.c.0.s8 %v2599
  %v2601 = vlaneseq
  %v2602 = vshrl.u32 %v2601, 7
  %v2603 = vsub.s32 %v2600, %v2602
  %v2604 = vrot.slane %v2590, %v2603
  %2607 = vmatprep.subr.mxu0 %v35
  %2608 = vmatpush1.msra.mxu0 %v34
  %2609 = vmatprep.subr.mxu0 %v43
  %2610 = vmatpush1.msra.mxu0 %v42
  %2611 = vmatprep.subr.mxu0 %v51
  %2612 = vmatpush1.msra.mxu0 %v50
  %2613 = vmatprep.subr.mxu0 %v59
  %2614 = vmatpush1.msra.mxu0 %v58
  %2615 = vmatprep.subr.mxu0 %v67
  %2616 = vmatpush1.msra.mxu0 %v66
  %2617 = vmatprep.subr.mxu0 %v75
  %2618 = vmatpush1.msra.mxu0 %v74
  %2619 = vmatprep.subr.mxu0 %v83
  %2620 = vmatpush1.msra.mxu0 %v82
  %2621 = vmatprep.subr.mxu0 %v91
  %2622 = vmatpush1.msra.mxu0 %v90
  %2623 = vmatprep.subr.mxu0 %v99
  %2624 = vmatpush1.msra.mxu0 %v98
  %2625 = vmatprep.subr.mxu0 %v107
  %2626 = vmatpush1.msra.mxu0 %v106
  %2627 = vmatprep.subr.mxu0 %v115
  %2628 = vmatpush1.msra.mxu0 %v114
  %2629 = vmatprep.subr.mxu0 %v123
  %2630 = vmatpush1.msra.mxu0 %v122
  %2631 = vmatprep.subr.mxu0 %v131
  %2632 = vmatpush1.msra.mxu0 %v130
  %2633 = vmatprep.subr.mxu0 %v139
  %2634 = vmatpush1.msra.mxu0 %v138
  %2635 = vmatprep.subr.mxu0 %v147
  %2636 = vmatpush1.msra.mxu0 %v146
  %2637 = vmatprep.subr.mxu0 %v155
  %2638 = vmatpush1.msra.mxu0 %v154
  %2639 = vmatprep.subr.mxu0 %v163
  %2640 = vmatpush1.msra.mxu0 %v162
  %2641 = vmatprep.subr.mxu0 %v171
  %2642 = vmatpush1.msra.mxu0 %v170
  %2643 = vmatprep.subr.mxu0 %v179
  %2644 = vmatpush1.msra.mxu0 %v178
  %2645 = vmatprep.subr.mxu0 %v187
  %2646 = vmatpush1.msra.mxu0 %v186
  %2647 = vmatprep.subr.mxu0 %v195
  %2648 = vmatpush1.msra.mxu0 %v194
  %2649 = vmatprep.subr.mxu0 %v203
  %2650 = vmatpush1.msra.mxu0 %v202
  %2651 = vmatprep.subr.mxu0 %v211
  %2652 = vmatpush1.msra.mxu0 %v210
  %2653 = vmatprep.subr.mxu0 %v219
  %2654 = vmatpush1.msra.mxu0 %v218
  %2655 = vmatprep.subr.mxu0 %v227
  %2656 = vmatpush1.msra.mxu0 %v226
  %2657 = vmatprep.subr.mxu0 %v235
  %2658 = vmatpush1.msra.mxu0 %v234
  %2659 = vmatprep.subr.mxu0 %v243
  %2660 = vmatpush1.msra.mxu0 %v242
  %2661 = vmatprep.subr.mxu0 %v251
  %2662 = vmatpush1.msra.mxu0 %v250
  %2663 = vmatprep.subr.mxu0 %v259
  %2664 = vmatpush1.msra.mxu0 %v258
  %2665 = vmatprep.subr.mxu0 %v267
  %2666 = vmatpush1.msra.mxu0 %v266
  %2667 = vmatprep.subr.mxu0 %v275
  %2668 = vmatpush1.msra.mxu0 %v274
  %2669 = vmatprep.subr.mxu0 %v283
  %2670 = vmatpush1.msra.mxu0 %v282
  %2671 = vmatprep.mubr.f32.mxu0 %v2604
  %2672 = vmatmul.mubr.f32.gmra.mrb[0].mxu0 %v2597
  %v2673 = vpop.f32.mrb[0].mxu0
  %v2674 = vadd.f32 0.0, %v2673
  %v2675 = vpop.f32.mrb[0].mxu0
  %v2676 = vadd.f32 0.0, %v2675
  %2677 = vdwg.mxu0
  %2678 = vmatprep.subr.mxu0 %v37
  %2679 = vmatpush1.msra.mxu0 %v36
  %2680 = vmatprep.subr.mxu0 %v45
  %2681 = vmatpush1.msra.mxu0 %v44
  %2682 = vmatprep.subr.mxu0 %v53
  %2683 = vmatpush1.msra.mxu0 %v52
  %2684 = vmatprep.subr.mxu0 %v61
  %2685 = vmatpush1.msra.mxu0 %v60
  %2686 = vmatprep.subr.mxu0 %v69
  %2687 = vmatpush1.msra.mxu0 %v68
  %2688 = vmatprep.subr.mxu0 %v77
  %2689 = vmatpush1.msra.mxu0 %v76
  %2690 = vmatprep.subr.mxu0 %v85
  %2691 = vmatpush1.msra.mxu0 %v84
  %2692 = vmatprep.subr.mxu0 %v93
  %2693 = vmatpush1.msra.mxu0 %v92
  %2694 = vmatprep.subr.mxu0 %v101
  %2695 = vmatpush1.msra.mxu0 %v100
  %2696 = vmatprep.subr.mxu0 %v109
  %2697 = vmatpush1.msra.mxu0 %v108
  %2698 = vmatprep.subr.mxu0 %v117
  %2699 = vmatpush1.msra.mxu0 %v116
  %2700 = vmatprep.subr.mxu0 %v125
  %2701 = vmatpush1.msra.mxu0 %v124
  %2702 = vmatprep.subr.mxu0 %v133
  %2703 = vmatpush1.msra.mxu0 %v132
  %2704 = vmatprep.subr.mxu0 %v141
  %2705 = vmatpush1.msra.mxu0 %v140
  %2706 = vmatprep.subr.mxu0 %v149
  %2707 = vmatpush1.msra.mxu0 %v148
  %2708 = vmatprep.subr.mxu0 %v157
  %2709 = vmatpush1.msra.mxu0 %v156
  %2710 = vmatprep.subr.mxu0 %v165
  %2711 = vmatpush1.msra.mxu0 %v164
  %2712 = vmatprep.subr.mxu0 %v173
  %2713 = vmatpush1.msra.mxu0 %v172
  %2714 = vmatprep.subr.mxu0 %v181
  %2715 = vmatpush1.msra.mxu0 %v180
  %2716 = vmatprep.subr.mxu0 %v189
  %2717 = vmatpush1.msra.mxu0 %v188
  %2718 = vmatprep.subr.mxu0 %v197
  %2719 = vmatpush1.msra.mxu0 %v196
  %2720 = vmatprep.subr.mxu0 %v205
  %2721 = vmatpush1.msra.mxu0 %v204
  %2722 = vmatprep.subr.mxu0 %v213
  %2723 = vmatpush1.msra.mxu0 %v212
  %2724 = vmatprep.subr.mxu0 %v221
  %2725 = vmatpush1.msra.mxu0 %v220
  %2726 = vmatprep.subr.mxu0 %v229
  %2727 = vmatpush1.msra.mxu0 %v228
  %2728 = vmatprep.subr.mxu0 %v237
  %2729 = vmatpush1.msra.mxu0 %v236
  %2730 = vmatprep.subr.mxu0 %v245
  %2731 = vmatpush1.msra.mxu0 %v244
  %2732 = vmatprep.subr.mxu0 %v253
  %2733 = vmatpush1.msra.mxu0 %v252
  %2734 = vmatprep.subr.mxu0 %v261
  %2735 = vmatpush1.msra.mxu0 %v260
  %2736 = vmatprep.subr.mxu0 %v269
  %2737 = vmatpush1.msra.mxu0 %v268
  %2738 = vmatprep.subr.mxu0 %v277
  %2739 = vmatpush1.msra.mxu0 %v276
  %2740 = vmatprep.subr.mxu0 %v285
  %2741 = vmatpush1.msra.mxu0 %v284
  %2742 = vmatprep.mubr.f32.mxu0 %v2604
  %2743 = vmatmul.mubr.f32.gmra.mrb[0].mxu0 %v2597
  %v2744 = vpop.f32.mrb[0].mxu0
  %v2745 = vadd.f32 0.0, %v2744
  %v2746 = vpop.f32.mrb[0].mxu0
  %v2747 = vadd.f32 0.0, %v2746
  %2748 = vdwg.mxu0
  %2749 = vmatprep.subr.mxu0 %v39
  %2750 = vmatpush1.msra.mxu0 %v38
  %2751 = vmatprep.subr.mxu0 %v47
  %2752 = vmatpush1.msra.mxu0 %v46
  %2753 = vmatprep.subr.mxu0 %v55
  %2754 = vmatpush1.msra.mxu0 %v54
  %2755 = vmatprep.subr.mxu0 %v63
  %2756 = vmatpush1.msra.mxu0 %v62
  %2757 = vmatprep.subr.mxu0 %v71
  %2758 = vmatpush1.msra.mxu0 %v70
  %2759 = vmatprep.subr.mxu0 %v79
  %2760 = vmatpush1.msra.mxu0 %v78
  %2761 = vmatprep.subr.mxu0 %v87
  %2762 = vmatpush1.msra.mxu0 %v86
  %2763 = vmatprep.subr.mxu0 %v95
  %2764 = vmatpush1.msra.mxu0 %v94
  %2765 = vmatprep.subr.mxu0 %v103
  %2766 = vmatpush1.msra.mxu0 %v102
  %2767 = vmatprep.subr.mxu0 %v111
  %2768 = vmatpush1.msra.mxu0 %v110
  %2769 = vmatprep.subr.mxu0 %v119
  %2770 = vmatpush1.msra.mxu0 %v118
  %2771 = vmatprep.subr.mxu0 %v127
  %2772 = vmatpush1.msra.mxu0 %v126
  %2773 = vmatprep.subr.mxu0 %v135
  %2774 = vmatpush1.msra.mxu0 %v134
  %2775 = vmatprep.subr.mxu0 %v143
  %2776 = vmatpush1.msra.mxu0 %v142
  %2777 = vmatprep.subr.mxu0 %v151
  %2778 = vmatpush1.msra.mxu0 %v150
  %2779 = vmatprep.subr.mxu0 %v159
  %2780 = vmatpush1.msra.mxu0 %v158
  %2781 = vmatprep.subr.mxu0 %v167
  %2782 = vmatpush1.msra.mxu0 %v166
  %2783 = vmatprep.subr.mxu0 %v175
  %2784 = vmatpush1.msra.mxu0 %v174
  %2785 = vmatprep.subr.mxu0 %v183
  %2786 = vmatpush1.msra.mxu0 %v182
  %2787 = vmatprep.subr.mxu0 %v191
  %2788 = vmatpush1.msra.mxu0 %v190
  %2789 = vmatprep.subr.mxu0 %v199
  %2790 = vmatpush1.msra.mxu0 %v198
  %2791 = vmatprep.subr.mxu0 %v207
  %2792 = vmatpush1.msra.mxu0 %v206
  %2793 = vmatprep.subr.mxu0 %v215
  %2794 = vmatpush1.msra.mxu0 %v214
  %2795 = vmatprep.subr.mxu0 %v223
  %2796 = vmatpush1.msra.mxu0 %v222
  %2797 = vmatprep.subr.mxu0 %v231
  %2798 = vmatpush1.msra.mxu0 %v230
  %2799 = vmatprep.subr.mxu0 %v239
  %2800 = vmatpush1.msra.mxu0 %v238
  %2801 = vmatprep.subr.mxu0 %v247
  %2802 = vmatpush1.msra.mxu0 %v246
  %2803 = vmatprep.subr.mxu0 %v255
  %2804 = vmatpush1.msra.mxu0 %v254
  %2805 = vmatprep.subr.mxu0 %v263
  %2806 = vmatpush1.msra.mxu0 %v262
  %2807 = vmatprep.subr.mxu0 %v271
  %2808 = vmatpush1.msra.mxu0 %v270
  %2809 = vmatprep.subr.mxu0 %v279
  %2810 = vmatpush1.msra.mxu0 %v278
  %2811 = vmatprep.subr.mxu0 %v287
  %2812 = vmatpush1.msra.mxu0 %v286
  %2813 = vmatprep.mubr.f32.mxu0 %v2604
  %2814 = vmatmul.mubr.f32.gmra.mrb[0].mxu0 %v2597
  %v2815 = vpop.f32.mrb[0].mxu0
  %v2816 = vadd.f32 0.0, %v2815
  %v2817 = vpop.f32.mrb[0].mxu0
  %v2818 = vadd.f32 0.0, %v2817
  %2819 = vdwg.mxu0
  %2820 = vmatprep.subr.mxu0 %v41
  %2821 = vmatpush1.msra.mxu0 %v40
  %2822 = vmatprep.subr.mxu0 %v49
  %2823 = vmatpush1.msra.mxu0 %v48
  %2824 = vmatprep.subr.mxu0 %v57
  %2825 = vmatpush1.msra.mxu0 %v56
  %2826 = vmatprep.subr.mxu0 %v65
  %2827 = vmatpush1.msra.mxu0 %v64
  %2828 = vmatprep.subr.mxu0 %v73
  %2829 = vmatpush1.msra.mxu0 %v72
  %2830 = vmatprep.subr.mxu0 %v81
  %2831 = vmatpush1.msra.mxu0 %v80
  %2832 = vmatprep.subr.mxu0 %v89
  %2833 = vmatpush1.msra.mxu0 %v88
  %2834 = vmatprep.subr.mxu0 %v97
  %2835 = vmatpush1.msra.mxu0 %v96
  %2836 = vmatprep.subr.mxu0 %v105
  %2837 = vmatpush1.msra.mxu0 %v104
  %2838 = vmatprep.subr.mxu0 %v113
  %2839 = vmatpush1.msra.mxu0 %v112
  %2840 = vmatprep.subr.mxu0 %v121
  %2841 = vmatpush1.msra.mxu0 %v120
  %2842 = vmatprep.subr.mxu0 %v129
  %2843 = vmatpush1.msra.mxu0 %v128
  %2844 = vmatprep.subr.mxu0 %v137
  %2845 = vmatpush1.msra.mxu0 %v136
  %2846 = vmatprep.subr.mxu0 %v145
  %2847 = vmatpush1.msra.mxu0 %v144
  %2848 = vmatprep.subr.mxu0 %v153
  %2849 = vmatpush1.msra.mxu0 %v152
  %2850 = vmatprep.subr.mxu0 %v161
  %2851 = vmatpush1.msra.mxu0 %v160
  %2852 = vmatprep.subr.mxu0 %v169
  %2853 = vmatpush1.msra.mxu0 %v168
  %2854 = vmatprep.subr.mxu0 %v177
  %2855 = vmatpush1.msra.mxu0 %v176
  %2856 = vmatprep.subr.mxu0 %v185
  %2857 = vmatpush1.msra.mxu0 %v184
  %2858 = vmatprep.subr.mxu0 %v193
  %2859 = vmatpush1.msra.mxu0 %v192
  %2860 = vmatprep.subr.mxu0 %v201
  %2861 = vmatpush1.msra.mxu0 %v200
  %2862 = vmatprep.subr.mxu0 %v209
  %2863 = vmatpush1.msra.mxu0 %v208
  %2864 = vmatprep.subr.mxu0 %v217
  %2865 = vmatpush1.msra.mxu0 %v216
  %2866 = vmatprep.subr.mxu0 %v225
  %2867 = vmatpush1.msra.mxu0 %v224
  %2868 = vmatprep.subr.mxu0 %v233
  %2869 = vmatpush1.msra.mxu0 %v232
  %2870 = vmatprep.subr.mxu0 %v241
  %2871 = vmatpush1.msra.mxu0 %v240
  %2872 = vmatprep.subr.mxu0 %v249
  %2873 = vmatpush1.msra.mxu0 %v248
  %2874 = vmatprep.subr.mxu0 %v257
  %2875 = vmatpush1.msra.mxu0 %v256
  %2876 = vmatprep.subr.mxu0 %v265
  %2877 = vmatpush1.msra.mxu0 %v264
  %2878 = vmatprep.subr.mxu0 %v273
  %2879 = vmatpush1.msra.mxu0 %v272
  %2880 = vmatprep.subr.mxu0 %v281
  %2881 = vmatpush1.msra.mxu0 %v280
  %2882 = vmatprep.subr.mxu0 %v289
  %2883 = vmatpush1.msra.mxu0 %v288
  %2884 = vmatprep.mubr.f32.mxu0 %v2604
  %2885 = vmatmul.mubr.f32.gmra.mrb[0].mxu0 %v2597
  %v2886 = vpop.f32.mrb[0].mxu0
  %v2887 = vadd.f32 0.0, %v2886
  %v2888 = vpop.f32.mrb[0].mxu0
  %v2889 = vadd.f32 0.0, %v2888
  %2890 = vdwg.mxu0
  %v2899 = vcombine.low %v2674, %v2676
  %v2900 = vcombine.low %v2745, %v2747
  %v2901 = vcombine.low %v2816, %v2818
  %v2902 = vcombine.low %v2887, %v2889
  %v2904 = vunpack.c.l.s4 1966171168
  %v2905 = vunpack.c.0.s8 %v2904
  %v2906 = vlaneseq
  %v2907 = vshrl.u32 %v2906, 7
  %v2908 = vsub.s32 %v2905, %v2907
  %v2909 = vrot.slane %v2899, %v2908
  %v2911 = vunpack.c.l.s4 1966171168
  %v2912 = vunpack.c.0.s8 %v2911
  %v2913 = vlaneseq
  %v2914 = vshrl.u32 %v2913, 7
  %v2915 = vsub.s32 %v2912, %v2914
  %v2916 = vrot.slane %v2900, %v2915
  %v2918 = vunpack.c.l.s4 1966171168
  %v2919 = vunpack.c.0.s8 %v2918
  %v2920 = vlaneseq
  %v2921 = vshrl.u32 %v2920, 7
  %v2922 = vsub.s32 %v2919, %v2921
  %v2923 = vrot.slane %v2901, %v2922
  %v2925 = vunpack.c.l.s4 1966171168
  %v2926 = vunpack.c.0.s8 %v2925
  %v2927 = vlaneseq
  %v2928 = vshrl.u32 %v2927, 7
  %v2929 = vsub.s32 %v2926, %v2928
  %v2930 = vrot.slane %v2902, %v2929
  %v2931 = vcombine.low %v2909, %v2916
  %v2932 = vcombine.high %v2909, %v2916
  %v2933 = vcombine.low %v2923, %v2930
  %v2934 = vcombine.high %v2923, %v2930
  %v2936 = vunpack.c.l.s4 1966171168
  %v2937 = vunpack.c.0.s8 %v2936
  %v2938 = vlaneseq
  %v2939 = vshrl.u32 %v2938, 7
  %v2940 = vsub.s32 %v2937, %v2939
  %v2941 = vrot.slane %v2931, %v2940
  %v2943 = vunpack.c.l.s4 1966171168
  %v2944 = vunpack.c.0.s8 %v2943
  %v2945 = vlaneseq
  %v2946 = vshrl.u32 %v2945, 7
  %v2947 = vsub.s32 %v2944, %v2946
  %v2948 = vrot.slane %v2932, %v2947
  %v2950 = vunpack.c.l.s4 1966171168
  %v2951 = vunpack.c.0.s8 %v2950
  %v2952 = vlaneseq
  %v2953 = vshrl.u32 %v2952, 7
  %v2954 = vsub.s32 %v2951, %v2953
  %v2955 = vrot.slane %v2933, %v2954
  %v2957 = vunpack.c.l.s4 1966171168
  %v2958 = vunpack.c.0.s8 %v2957
  %v2959 = vlaneseq
  %v2960 = vshrl.u32 %v2959, 7
  %v2961 = vsub.s32 %v2958, %v2960
  %v2962 = vrot.slane %v2934, %v2961
  %v2963 = vcombine.low %v2941, %v2955
  %v2964 = vcombine.low %v2948, %v2962
  %v2967 = vadd.f32 %v2575, %v2963
  %v2968 = vadd.f32 %v2579, %v2964
  %v2969 = vxor.u32 %v2967, 2147483648
  %v2970 = vxor.u32 %v2968, 2147483648
  %v2971 = vmul.f32 %v2969, 1.442695
  %v2972 = vpow.pop %v2971
  %v2973 = vmul.f32 %v2970, 1.442695
  %v2974 = vpow.pop %v2973
  %v2975 = vadd.f32 %v2972, 1.0
  %v2976 = vadd.f32 %v2974, 1.0
  %v2977 = vrcp.pop %v2975
  %v2978 = vmul.f32 1.0, %v2977
  %v2979 = vrcp.pop %v2976
  %v2980 = vmul.f32 1.0, %v2979
  %v2983 = vrot.slane %v2967, 2
  %v2984 = vrot.slane %v2968, 2
  %v2987 = vxor.u32 %v2983, 2147483648
  %v2988 = vxor.u32 %v2984, 2147483648
  %v2989 = vmul.f32 %v2987, 1.442695
  %v2990 = vpow.pop %v2989
  %v2991 = vmul.f32 %v2988, 1.442695
  %v2992 = vpow.pop %v2991
  %v2993 = vadd.f32 %v2990, 1.0
  %v2994 = vadd.f32 %v2992, 1.0
  %v2995 = vrcp.pop %v2993
  %v2996 = vmul.f32 1.0, %v2995
  %v2997 = vrcp.pop %v2994
  %v2998 = vmul.f32 1.0, %v2997
  %v2999 = vrot.slane %v2967, 4
  %v3000 = vrot.slane %v2968, 4
  %v3003 = vtanh.pop %v2999
  %v3004 = vtanh.pop %v3000
  %v3005 = vrot.slane %v2967, 6
  %v3006 = vrot.slane %v2968, 6
  %v3009 = vxor.u32 %v3005, 2147483648
  %v3010 = vxor.u32 %v3006, 2147483648
  %v3011 = vmul.f32 %v3009, 1.442695
  %v3012 = vpow.pop %v3011
  %v3013 = vmul.f32 %v3010, 1.442695
  %v3014 = vpow.pop %v3013
  %v3015 = vadd.f32 %v3012, 1.0
  %v3016 = vadd.f32 %v3014, 1.0
  %v3017 = vrcp.pop %v3015
  %v3018 = vmul.f32 1.0, %v3017
  %v3019 = vrcp.pop %v3016
  %v3020 = vmul.f32 1.0, %v3019
  %v3021 = vmul.f32 %v2996, %v2566
  %v3022 = vmul.f32 %v2998, %v2567
  %v3023 = vmul.f32 %v2978, %v3003
  %v3024 = vmul.f32 %v2980, %v3004
  %v3025 = vadd.f32 %v3021, %v3023
  %v3026 = vadd.f32 %v3022, %v3024
  %v3027 = vtanh.pop %v3025
  %v3028 = vtanh.pop %v3026
  %v3029 = vmul.f32 %v3018, %v3027
  %v3030 = vmul.f32 %v3020, %v3028
  %s3031 = scalar_lea.vmem %s0, 6
  %v3032 = vld [vmem:[%s3031] ss:$8 sm:$0xf]
  %v3033 = vld [vmem:[%s3031] ss:$8 sm:$0xf0]
  %v3034 = vor.u32 %v3032, %v3033
  %s3035 = scalar_lea.vmem %s0, 70
  %v3036 = vld [vmem:[%s3035] ss:$8 sm:$0xf]
  %v3037 = vld [vmem:[%s3035] ss:$8 sm:$0xf0]
  %v3038 = vor.u32 %v3036, %v3037
  %v3041 = vcombine.low %v3029, %v3030
  %v3043 = vunpack.c.l.s4 1966171168
  %v3044 = vunpack.c.0.s8 %v3043
  %v3045 = vlaneseq
  %v3046 = vshrl.u32 %v3045, 7
  %v3047 = vsub.s32 %v3044, %v3046
  %v3048 = vrot.slane %v3041, %v3047
  %v3049 = vcombine.high %v3048, %v3048
  %v3051 = vunpack.c.l.s4 1966171168
  %v3052 = vunpack.c.0.s8 %v3051
  %v3053 = vlaneseq
  %v3054 = vshrl.u32 %v3053, 7
  %v3055 = vsub.s32 %v3052, %v3054
  %v3056 = vrot.slane %v3048, %v3055
  %v3058 = vunpack.c.l.s4 1966171168
  %v3059 = vunpack.c.0.s8 %v3058
  %v3060 = vlaneseq
  %v3061 = vshrl.u32 %v3060, 7
  %v3062 = vsub.s32 %v3059, %v3061
  %v3063 = vrot.slane %v3049, %v3062
  %3066 = vmatprep.subr.mxu0 %v35
  %3067 = vmatpush1.msra.mxu0 %v34
  %3068 = vmatprep.subr.mxu0 %v43
  %3069 = vmatpush1.msra.mxu0 %v42
  %3070 = vmatprep.subr.mxu0 %v51
  %3071 = vmatpush1.msra.mxu0 %v50
  %3072 = vmatprep.subr.mxu0 %v59
  %3073 = vmatpush1.msra.mxu0 %v58
  %3074 = vmatprep.subr.mxu0 %v67
  %3075 = vmatpush1.msra.mxu0 %v66
  %3076 = vmatprep.subr.mxu0 %v75
  %3077 = vmatpush1.msra.mxu0 %v74
  %3078 = vmatprep.subr.mxu0 %v83
  %3079 = vmatpush1.msra.mxu0 %v82
  %3080 = vmatprep.subr.mxu0 %v91
  %3081 = vmatpush1.msra.mxu0 %v90
  %3082 = vmatprep.subr.mxu0 %v99
  %3083 = vmatpush1.msra.mxu0 %v98
  %3084 = vmatprep.subr.mxu0 %v107
  %3085 = vmatpush1.msra.mxu0 %v106
  %3086 = vmatprep.subr.mxu0 %v115
  %3087 = vmatpush1.msra.mxu0 %v114
  %3088 = vmatprep.subr.mxu0 %v123
  %3089 = vmatpush1.msra.mxu0 %v122
  %3090 = vmatprep.subr.mxu0 %v131
  %3091 = vmatpush1.msra.mxu0 %v130
  %3092 = vmatprep.subr.mxu0 %v139
  %3093 = vmatpush1.msra.mxu0 %v138
  %3094 = vmatprep.subr.mxu0 %v147
  %3095 = vmatpush1.msra.mxu0 %v146
  %3096 = vmatprep.subr.mxu0 %v155
  %3097 = vmatpush1.msra.mxu0 %v154
  %3098 = vmatprep.subr.mxu0 %v163
  %3099 = vmatpush1.msra.mxu0 %v162
  %3100 = vmatprep.subr.mxu0 %v171
  %3101 = vmatpush1.msra.mxu0 %v170
  %3102 = vmatprep.subr.mxu0 %v179
  %3103 = vmatpush1.msra.mxu0 %v178
  %3104 = vmatprep.subr.mxu0 %v187
  %3105 = vmatpush1.msra.mxu0 %v186
  %3106 = vmatprep.subr.mxu0 %v195
  %3107 = vmatpush1.msra.mxu0 %v194
  %3108 = vmatprep.subr.mxu0 %v203
  %3109 = vmatpush1.msra.mxu0 %v202
  %3110 = vmatprep.subr.mxu0 %v211
  %3111 = vmatpush1.msra.mxu0 %v210
  %3112 = vmatprep.subr.mxu0 %v219
  %3113 = vmatpush1.msra.mxu0 %v218
  %3114 = vmatprep.subr.mxu0 %v227
  %3115 = vmatpush1.msra.mxu0 %v226
  %3116 = vmatprep.subr.mxu0 %v235
  %3117 = vmatpush1.msra.mxu0 %v234
  %3118 = vmatprep.subr.mxu0 %v243
  %3119 = vmatpush1.msra.mxu0 %v242
  %3120 = vmatprep.subr.mxu0 %v251
  %3121 = vmatpush1.msra.mxu0 %v250
  %3122 = vmatprep.subr.mxu0 %v259
  %3123 = vmatpush1.msra.mxu0 %v258
  %3124 = vmatprep.subr.mxu0 %v267
  %3125 = vmatpush1.msra.mxu0 %v266
  %3126 = vmatprep.subr.mxu0 %v275
  %3127 = vmatpush1.msra.mxu0 %v274
  %3128 = vmatprep.subr.mxu0 %v283
  %3129 = vmatpush1.msra.mxu0 %v282
  %3130 = vmatprep.mubr.f32.mxu0 %v3063
  %3131 = vmatmul.mubr.f32.gmra.mrb[0].mxu0 %v3056
  %v3132 = vpop.f32.mrb[0].mxu0
  %v3133 = vadd.f32 0.0, %v3132
  %v3134 = vpop.f32.mrb[0].mxu0
  %v3135 = vadd.f32 0.0, %v3134
  %3136 = vdwg.mxu0
  %3137 = vmatprep.subr.mxu0 %v37
  %3138 = vmatpush1.msra.mxu0 %v36
  %3139 = vmatprep.subr.mxu0 %v45
  %3140 = vmatpush1.msra.mxu0 %v44
  %3141 = vmatprep.subr.mxu0 %v53
  %3142 = vmatpush1.msra.mxu0 %v52
  %3143 = vmatprep.subr.mxu0 %v61
  %3144 = vmatpush1.msra.mxu0 %v60
  %3145 = vmatprep.subr.mxu0 %v69
  %3146 = vmatpush1.msra.mxu0 %v68
  %3147 = vmatprep.subr.mxu0 %v77
  %3148 = vmatpush1.msra.mxu0 %v76
  %3149 = vmatprep.subr.mxu0 %v85
  %3150 = vmatpush1.msra.mxu0 %v84
  %3151 = vmatprep.subr.mxu0 %v93
  %3152 = vmatpush1.msra.mxu0 %v92
  %3153 = vmatprep.subr.mxu0 %v101
  %3154 = vmatpush1.msra.mxu0 %v100
  %3155 = vmatprep.subr.mxu0 %v109
  %3156 = vmatpush1.msra.mxu0 %v108
  %3157 = vmatprep.subr.mxu0 %v117
  %3158 = vmatpush1.msra.mxu0 %v116
  %3159 = vmatprep.subr.mxu0 %v125
  %3160 = vmatpush1.msra.mxu0 %v124
  %3161 = vmatprep.subr.mxu0 %v133
  %3162 = vmatpush1.msra.mxu0 %v132
  %3163 = vmatprep.subr.mxu0 %v141
  %3164 = vmatpush1.msra.mxu0 %v140
  %3165 = vmatprep.subr.mxu0 %v149
  %3166 = vmatpush1.msra.mxu0 %v148
  %3167 = vmatprep.subr.mxu0 %v157
  %3168 = vmatpush1.msra.mxu0 %v156
  %3169 = vmatprep.subr.mxu0 %v165
  %3170 = vmatpush1.msra.mxu0 %v164
  %3171 = vmatprep.subr.mxu0 %v173
  %3172 = vmatpush1.msra.mxu0 %v172
  %3173 = vmatprep.subr.mxu0 %v181
  %3174 = vmatpush1.msra.mxu0 %v180
  %3175 = vmatprep.subr.mxu0 %v189
  %3176 = vmatpush1.msra.mxu0 %v188
  %3177 = vmatprep.subr.mxu0 %v197
  %3178 = vmatpush1.msra.mxu0 %v196
  %3179 = vmatprep.subr.mxu0 %v205
  %3180 = vmatpush1.msra.mxu0 %v204
  %3181 = vmatprep.subr.mxu0 %v213
  %3182 = vmatpush1.msra.mxu0 %v212
  %3183 = vmatprep.subr.mxu0 %v221
  %3184 = vmatpush1.msra.mxu0 %v220
  %3185 = vmatprep.subr.mxu0 %v229
  %3186 = vmatpush1.msra.mxu0 %v228
  %3187 = vmatprep.subr.mxu0 %v237
  %3188 = vmatpush1.msra.mxu0 %v236
  %3189 = vmatprep.subr.mxu0 %v245
  %3190 = vmatpush1.msra.mxu0 %v244
  %3191 = vmatprep.subr.mxu0 %v253
  %3192 = vmatpush1.msra.mxu0 %v252
  %3193 = vmatprep.subr.mxu0 %v261
  %3194 = vmatpush1.msra.mxu0 %v260
  %3195 = vmatprep.subr.mxu0 %v269
  %3196 = vmatpush1.msra.mxu0 %v268
  %3197 = vmatprep.subr.mxu0 %v277
  %3198 = vmatpush1.msra.mxu0 %v276
  %3199 = vmatprep.subr.mxu0 %v285
  %3200 = vmatpush1.msra.mxu0 %v284
  %3201 = vmatprep.mubr.f32.mxu0 %v3063
  %3202 = vmatmul.mubr.f32.gmra.mrb[0].mxu0 %v3056
  %v3203 = vpop.f32.mrb[0].mxu0
  %v3204 = vadd.f32 0.0, %v3203
  %v3205 = vpop.f32.mrb[0].mxu0
  %v3206 = vadd.f32 0.0, %v3205
  %3207 = vdwg.mxu0
  %3208 = vmatprep.subr.mxu0 %v39
  %3209 = vmatpush1.msra.mxu0 %v38
  %3210 = vmatprep.subr.mxu0 %v47
  %3211 = vmatpush1.msra.mxu0 %v46
  %3212 = vmatprep.subr.mxu0 %v55
  %3213 = vmatpush1.msra.mxu0 %v54
  %3214 = vmatprep.subr.mxu0 %v63
  %3215 = vmatpush1.msra.mxu0 %v62
  %3216 = vmatprep.subr.mxu0 %v71
  %3217 = vmatpush1.msra.mxu0 %v70
  %3218 = vmatprep.subr.mxu0 %v79
  %3219 = vmatpush1.msra.mxu0 %v78
  %3220 = vmatprep.subr.mxu0 %v87
  %3221 = vmatpush1.msra.mxu0 %v86
  %3222 = vmatprep.subr.mxu0 %v95
  %3223 = vmatpush1.msra.mxu0 %v94
  %3224 = vmatprep.subr.mxu0 %v103
  %3225 = vmatpush1.msra.mxu0 %v102
  %3226 = vmatprep.subr.mxu0 %v111
  %3227 = vmatpush1.msra.mxu0 %v110
  %3228 = vmatprep.subr.mxu0 %v119
  %3229 = vmatpush1.msra.mxu0 %v118
  %3230 = vmatprep.subr.mxu0 %v127
  %3231 = vmatpush1.msra.mxu0 %v126
  %3232 = vmatprep.subr.mxu0 %v135
  %3233 = vmatpush1.msra.mxu0 %v134
  %3234 = vmatprep.subr.mxu0 %v143
  %3235 = vmatpush1.msra.mxu0 %v142
  %3236 = vmatprep.subr.mxu0 %v151
  %3237 = vmatpush1.msra.mxu0 %v150
  %3238 = vmatprep.subr.mxu0 %v159
  %3239 = vmatpush1.msra.mxu0 %v158
  %3240 = vmatprep.subr.mxu0 %v167
  %3241 = vmatpush1.msra.mxu0 %v166
  %3242 = vmatprep.subr.mxu0 %v175
  %3243 = vmatpush1.msra.mxu0 %v174
  %3244 = vmatprep.subr.mxu0 %v183
  %3245 = vmatpush1.msra.mxu0 %v182
  %3246 = vmatprep.subr.mxu0 %v191
  %3247 = vmatpush1.msra.mxu0 %v190
  %3248 = vmatprep.subr.mxu0 %v199
  %3249 = vmatpush1.msra.mxu0 %v198
  %3250 = vmatprep.subr.mxu0 %v207
  %3251 = vmatpush1.msra.mxu0 %v206
  %3252 = vmatprep.subr.mxu0 %v215
  %3253 = vmatpush1.msra.mxu0 %v214
  %3254 = vmatprep.subr.mxu0 %v223
  %3255 = vmatpush1.msra.mxu0 %v222
  %3256 = vmatprep.subr.mxu0 %v231
  %3257 = vmatpush1.msra.mxu0 %v230
  %3258 = vmatprep.subr.mxu0 %v239
  %3259 = vmatpush1.msra.mxu0 %v238
  %3260 = vmatprep.subr.mxu0 %v247
  %3261 = vmatpush1.msra.mxu0 %v246
  %3262 = vmatprep.subr.mxu0 %v255
  %3263 = vmatpush1.msra.mxu0 %v254
  %3264 = vmatprep.subr.mxu0 %v263
  %3265 = vmatpush1.msra.mxu0 %v262
  %3266 = vmatprep.subr.mxu0 %v271
  %3267 = vmatpush1.msra.mxu0 %v270
  %3268 = vmatprep.subr.mxu0 %v279
  %3269 = vmatpush1.msra.mxu0 %v278
  %3270 = vmatprep.subr.mxu0 %v287
  %3271 = vmatpush1.msra.mxu0 %v286
  %3272 = vmatprep.mubr.f32.mxu0 %v3063
  %3273 = vmatmul.mubr.f32.gmra.mrb[0].mxu0 %v3056
  %v3274 = vpop.f32.mrb[0].mxu0
  %v3275 = vadd.f32 0.0, %v3274
  %v3276 = vpop.f32.mrb[0].mxu0
  %v3277 = vadd.f32 0.0, %v3276
  %3278 = vdwg.mxu0
  %3279 = vmatprep.subr.mxu0 %v41
  %3280 = vmatpush1.msra.mxu0 %v40
  %3281 = vmatprep.subr.mxu0 %v49
  %3282 = vmatpush1.msra.mxu0 %v48
  %3283 = vmatprep.subr.mxu0 %v57
  %3284 = vmatpush1.msra.mxu0 %v56
  %3285 = vmatprep.subr.mxu0 %v65
  %3286 = vmatpush1.msra.mxu0 %v64
  %3287 = vmatprep.subr.mxu0 %v73
  %3288 = vmatpush1.msra.mxu0 %v72
  %3289 = vmatprep.subr.mxu0 %v81
  %3290 = vmatpush1.msra.mxu0 %v80
  %3291 = vmatprep.subr.mxu0 %v89
  %3292 = vmatpush1.msra.mxu0 %v88
  %3293 = vmatprep.subr.mxu0 %v97
  %3294 = vmatpush1.msra.mxu0 %v96
  %3295 = vmatprep.subr.mxu0 %v105
  %3296 = vmatpush1.msra.mxu0 %v104
  %3297 = vmatprep.subr.mxu0 %v113
  %3298 = vmatpush1.msra.mxu0 %v112
  %3299 = vmatprep.subr.mxu0 %v121
  %3300 = vmatpush1.msra.mxu0 %v120
  %3301 = vmatprep.subr.mxu0 %v129
  %3302 = vmatpush1.msra.mxu0 %v128
  %3303 = vmatprep.subr.mxu0 %v137
  %3304 = vmatpush1.msra.mxu0 %v136
  %3305 = vmatprep.subr.mxu0 %v145
  %3306 = vmatpush1.msra.mxu0 %v144
  %3307 = vmatprep.subr.mxu0 %v153
  %3308 = vmatpush1.msra.mxu0 %v152
  %3309 = vmatprep.subr.mxu0 %v161
  %3310 = vmatpush1.msra.mxu0 %v160
  %3311 = vmatprep.subr.mxu0 %v169
  %3312 = vmatpush1.msra.mxu0 %v168
  %3313 = vmatprep.subr.mxu0 %v177
  %3314 = vmatpush1.msra.mxu0 %v176
  %3315 = vmatprep.subr.mxu0 %v185
  %3316 = vmatpush1.msra.mxu0 %v184
  %3317 = vmatprep.subr.mxu0 %v193
  %3318 = vmatpush1.msra.mxu0 %v192
  %3319 = vmatprep.subr.mxu0 %v201
  %3320 = vmatpush1.msra.mxu0 %v200
  %3321 = vmatprep.subr.mxu0 %v209
  %3322 = vmatpush1.msra.mxu0 %v208
  %3323 = vmatprep.subr.mxu0 %v217
  %3324 = vmatpush1.msra.mxu0 %v216
  %3325 = vmatprep.subr.mxu0 %v225
  %3326 = vmatpush1.msra.mxu0 %v224
  %3327 = vmatprep.subr.mxu0 %v233
  %3328 = vmatpush1.msra.mxu0 %v232
  %3329 = vmatprep.subr.mxu0 %v241
  %3330 = vmatpush1.msra.mxu0 %v240
  %3331 = vmatprep.subr.mxu0 %v249
  %3332 = vmatpush1.msra.mxu0 %v248
  %3333 = vmatprep.subr.mxu0 %v257
  %3334 = vmatpush1.msra.mxu0 %v256
  %3335 = vmatprep.subr.mxu0 %v265
  %3336 = vmatpush1.msra.mxu0 %v264
  %3337 = vmatprep.subr.mxu0 %v273
  %3338 = vmatpush1.msra.mxu0 %v272
  %3339 = vmatprep.subr.mxu0 %v281
  %3340 = vmatpush1.msra.mxu0 %v280
  %3341 = vmatprep.subr.mxu0 %v289
  %3342 = vmatpush1.msra.mxu0 %v288
  %3343 = vmatprep.mubr.f32.mxu0 %v3063
  %3344 = vmatmul.mubr.f32.gmra.mrb[0].mxu0 %v3056
  %v3345 = vpop.f32.mrb[0].mxu0
  %v3346 = vadd.f32 0.0, %v3345
  %v3347 = vpop.f32.mrb[0].mxu0
  %v3348 = vadd.f32 0.0, %v3347
  %3349 = vdwg.mxu0
  %v3358 = vcombine.low %v3133, %v3135
  %v3359 = vcombine.low %v3204, %v3206
  %v3360 = vcombine.low %v3275, %v3277
  %v3361 = vcombine.low %v3346, %v3348
  %v3363 = vunpack.c.l.s4 1966171168
  %v3364 = vunpack.c.0.s8 %v3363
  %v3365 = vlaneseq
  %v3366 = vshrl.u32 %v3365, 7
  %v3367 = vsub.s32 %v3364, %v3366
  %v3368 = vrot.slane %v3358, %v3367
  %v3370 = vunpack.c.l.s4 1966171168
  %v3371 = vunpack.c.0.s8 %v3370
  %v3372 = vlaneseq
  %v3373 = vshrl.u32 %v3372, 7
  %v3374 = vsub.s32 %v3371, %v3373
  %v3375 = vrot.slane %v3359, %v3374
  %v3377 = vunpack.c.l.s4 1966171168
  %v3378 = vunpack.c.0.s8 %v3377
  %v3379 = vlaneseq
  %v3380 = vshrl.u32 %v3379, 7
  %v3381 = vsub.s32 %v3378, %v3380
  %v3382 = vrot.slane %v3360, %v3381
  %v3384 = vunpack.c.l.s4 1966171168
  %v3385 = vunpack.c.0.s8 %v3384
  %v3386 = vlaneseq
  %v3387 = vshrl.u32 %v3386, 7
  %v3388 = vsub.s32 %v3385, %v3387
  %v3389 = vrot.slane %v3361, %v3388
  %v3390 = vcombine.low %v3368, %v3375
  %v3391 = vcombine.high %v3368, %v3375
  %v3392 = vcombine.low %v3382, %v3389
  %v3393 = vcombine.high %v3382, %v3389
  %v3395 = vunpack.c.l.s4 1966171168
  %v3396 = vunpack.c.0.s8 %v3395
  %v3397 = vlaneseq
  %v3398 = vshrl.u32 %v3397, 7
  %v3399 = vsub.s32 %v3396, %v3398
  %v3400 = vrot.slane %v3390, %v3399
  %v3402 = vunpack.c.l.s4 1966171168
  %v3403 = vunpack.c.0.s8 %v3402
  %v3404 = vlaneseq
  %v3405 = vshrl.u32 %v3404, 7
  %v3406 = vsub.s32 %v3403, %v3405
  %v3407 = vrot.slane %v3391, %v3406
  %v3409 = vunpack.c.l.s4 1966171168
  %v3410 = vunpack.c.0.s8 %v3409
  %v3411 = vlaneseq
  %v3412 = vshrl.u32 %v3411, 7
  %v3413 = vsub.s32 %v3410, %v3412
  %v3414 = vrot.slane %v3392, %v3413
  %v3416 = vunpack.c.l.s4 1966171168
  %v3417 = vunpack.c.0.s8 %v3416
  %v3418 = vlaneseq
  %v3419 = vshrl.u32 %v3418, 7
  %v3420 = vsub.s32 %v3417, %v3419
  %v3421 = vrot.slane %v3393, %v3420
  %v3422 = vcombine.low %v3400, %v3414
  %v3423 = vcombine.low %v3407, %v3421
  %v3426 = vadd.f32 %v3034, %v3422
  %v3427 = vadd.f32 %v3038, %v3423
  %v3428 = vxor.u32 %v3426, 2147483648
  %v3429 = vxor.u32 %v3427, 2147483648
  %v3430 = vmul.f32 %v3428, 1.442695
  %v3431 = vpow.pop %v3430
  %v3432 = vmul.f32 %v3429, 1.442695
  %v3433 = vpow.pop %v3432
  %v3434 = vadd.f32 %v3431, 1.0
  %v3435 = vadd.f32 %v3433, 1.0
  %v3436 = vrcp.pop %v3434
  %v3437 = vmul.f32 1.0, %v3436
  %v3438 = vrcp.pop %v3435
  %v3439 = vmul.f32 1.0, %v3438
  %v3442 = vrot.slane %v3426, 2
  %v3443 = vrot.slane %v3427, 2
  %v3446 = vxor.u32 %v3442, 2147483648
  %v3447 = vxor.u32 %v3443, 2147483648
  %v3448 = vmul.f32 %v3446, 1.442695
  %v3449 = vpow.pop %v3448
  %v3450 = vmul.f32 %v3447, 1.442695
  %v3451 = vpow.pop %v3450
  %v3452 = vadd.f32 %v3449, 1.0
  %v3453 = vadd.f32 %v3451, 1.0
  %v3454 = vrcp.pop %v3452
  %v3455 = vmul.f32 1.0, %v3454
  %v3456 = vrcp.pop %v3453
  %v3457 = vmul.f32 1.0, %v3456
  %v3458 = vrot.slane %v3426, 4
  %v3459 = vrot.slane %v3427, 4
  %v3462 = vtanh.pop %v3458
  %v3463 = vtanh.pop %v3459
  %v3464 = vrot.slane %v3426, 6
  %v3465 = vrot.slane %v3427, 6
  %v3468 = vxor.u32 %v3464, 2147483648
  %v3469 = vxor.u32 %v3465, 2147483648
  %v3470 = vmul.f32 %v3468, 1.442695
  %v3471 = vpow.pop %v3470
  %v3472 = vmul.f32 %v3469, 1.442695
  %v3473 = vpow.pop %v3472
  %v3474 = vadd.f32 %v3471, 1.0
  %v3475 = vadd.f32 %v3473, 1.0
  %v3476 = vrcp.pop %v3474
  %v3477 = vmul.f32 1.0, %v3476
  %v3478 = vrcp.pop %v3475
  %v3479 = vmul.f32 1.0, %v3478
  %v3480 = vmul.f32 %v3455, %v3025
  %v3481 = vmul.f32 %v3457, %v3026
  %v3482 = vmul.f32 %v3437, %v3462
  %v3483 = vmul.f32 %v3439, %v3463
  %v3484 = vadd.f32 %v3480, %v3482
  %v3485 = vadd.f32 %v3481, %v3483
  %v3486 = vtanh.pop %v3484
  %v3487 = vtanh.pop %v3485
  %v3488 = vmul.f32 %v3477, %v3486
  %v3489 = vmul.f32 %v3479, %v3487
  %s3490 = scalar_lea.vmem %s0, 7
  %v3491 = vld [vmem:[%s3490] ss:$8 sm:$0xf]
  %v3492 = vld [vmem:[%s3490] ss:$8 sm:$0xf0]
  %v3493 = vor.u32 %v3491, %v3492
  %s3494 = scalar_lea.vmem %s0, 71
  %v3495 = vld [vmem:[%s3494] ss:$8 sm:$0xf]
  %v3496 = vld [vmem:[%s3494] ss:$8 sm:$0xf0]
  %v3497 = vor.u32 %v3495, %v3496
  %v3500 = vcombine.low %v3488, %v3489
  %v3502 = vunpack.c.l.s4 1966171168
  %v3503 = vunpack.c.0.s8 %v3502
  %v3504 = vlaneseq
  %v3505 = vshrl.u32 %v3504, 7
  %v3506 = vsub.s32 %v3503, %v3505
  %v3507 = vrot.slane %v3500, %v3506
  %v3508 = vcombine.high %v3507, %v3507
  %v3510 = vunpack.c.l.s4 1966171168
  %v3511 = vunpack.c.0.s8 %v3510
  %v3512 = vlaneseq
  %v3513 = vshrl.u32 %v3512, 7
  %v3514 = vsub.s32 %v3511, %v3513
  %v3515 = vrot.slane %v3507, %v3514
  %v3517 = vunpack.c.l.s4 1966171168
  %v3518 = vunpack.c.0.s8 %v3517
  %v3519 = vlaneseq
  %v3520 = vshrl.u32 %v3519, 7
  %v3521 = vsub.s32 %v3518, %v3520
  %v3522 = vrot.slane %v3508, %v3521
  %3525 = vmatprep.subr.mxu0 %v35
  %3526 = vmatpush1.msra.mxu0 %v34
  %3527 = vmatprep.subr.mxu0 %v43
  %3528 = vmatpush1.msra.mxu0 %v42
  %3529 = vmatprep.subr.mxu0 %v51
  %3530 = vmatpush1.msra.mxu0 %v50
  %3531 = vmatprep.subr.mxu0 %v59
  %3532 = vmatpush1.msra.mxu0 %v58
  %3533 = vmatprep.subr.mxu0 %v67
  %3534 = vmatpush1.msra.mxu0 %v66
  %3535 = vmatprep.subr.mxu0 %v75
  %3536 = vmatpush1.msra.mxu0 %v74
  %3537 = vmatprep.subr.mxu0 %v83
  %3538 = vmatpush1.msra.mxu0 %v82
  %3539 = vmatprep.subr.mxu0 %v91
  %3540 = vmatpush1.msra.mxu0 %v90
  %3541 = vmatprep.subr.mxu0 %v99
  %3542 = vmatpush1.msra.mxu0 %v98
  %3543 = vmatprep.subr.mxu0 %v107
  %3544 = vmatpush1.msra.mxu0 %v106
  %3545 = vmatprep.subr.mxu0 %v115
  %3546 = vmatpush1.msra.mxu0 %v114
  %3547 = vmatprep.subr.mxu0 %v123
  %3548 = vmatpush1.msra.mxu0 %v122
  %3549 = vmatprep.subr.mxu0 %v131
  %3550 = vmatpush1.msra.mxu0 %v130
  %3551 = vmatprep.subr.mxu0 %v139
  %3552 = vmatpush1.msra.mxu0 %v138
  %3553 = vmatprep.subr.mxu0 %v147
  %3554 = vmatpush1.msra.mxu0 %v146
  %3555 = vmatprep.subr.mxu0 %v155
  %3556 = vmatpush1.msra.mxu0 %v154
  %3557 = vmatprep.subr.mxu0 %v163
  %3558 = vmatpush1.msra.mxu0 %v162
  %3559 = vmatprep.subr.mxu0 %v171
  %3560 = vmatpush1.msra.mxu0 %v170
  %3561 = vmatprep.subr.mxu0 %v179
  %3562 = vmatpush1.msra.mxu0 %v178
  %3563 = vmatprep.subr.mxu0 %v187
  %3564 = vmatpush1.msra.mxu0 %v186
  %3565 = vmatprep.subr.mxu0 %v195
  %3566 = vmatpush1.msra.mxu0 %v194
  %3567 = vmatprep.subr.mxu0 %v203
  %3568 = vmatpush1.msra.mxu0 %v202
  %3569 = vmatprep.subr.mxu0 %v211
  %3570 = vmatpush1.msra.mxu0 %v210
  %3571 = vmatprep.subr.mxu0 %v219
  %3572 = vmatpush1.msra.mxu0 %v218
  %3573 = vmatprep.subr.mxu0 %v227
  %3574 = vmatpush1.msra.mxu0 %v226
  %3575 = vmatprep.subr.mxu0 %v235
  %3576 = vmatpush1.msra.mxu0 %v234
  %3577 = vmatprep.subr.mxu0 %v243
  %3578 = vmatpush1.msra.mxu0 %v242
  %3579 = vmatprep.subr.mxu0 %v251
  %3580 = vmatpush1.msra.mxu0 %v250
  %3581 = vmatprep.subr.mxu0 %v259
  %3582 = vmatpush1.msra.mxu0 %v258
  %3583 = vmatprep.subr.mxu0 %v267
  %3584 = vmatpush1.msra.mxu0 %v266
  %3585 = vmatprep.subr.mxu0 %v275
  %3586 = vmatpush1.msra.mxu0 %v274
  %3587 = vmatprep.subr.mxu0 %v283
  %3588 = vmatpush1.msra.mxu0 %v282
  %3589 = vmatprep.mubr.f32.mxu0 %v3522
  %3590 = vmatmul.mubr.f32.gmra.mrb[0].mxu0 %v3515
  %v3591 = vpop.f32.mrb[0].mxu0
  %v3592 = vadd.f32 0.0, %v3591
  %v3593 = vpop.f32.mrb[0].mxu0
  %v3594 = vadd.f32 0.0, %v3593
  %3595 = vdwg.mxu0
  %3596 = vmatprep.subr.mxu0 %v37
  %3597 = vmatpush1.msra.mxu0 %v36
  %3598 = vmatprep.subr.mxu0 %v45
  %3599 = vmatpush1.msra.mxu0 %v44
  %3600 = vmatprep.subr.mxu0 %v53
  %3601 = vmatpush1.msra.mxu0 %v52
  %3602 = vmatprep.subr.mxu0 %v61
  %3603 = vmatpush1.msra.mxu0 %v60
  %3604 = vmatprep.subr.mxu0 %v69
  %3605 = vmatpush1.msra.mxu0 %v68
  %3606 = vmatprep.subr.mxu0 %v77
  %3607 = vmatpush1.msra.mxu0 %v76
  %3608 = vmatprep.subr.mxu0 %v85
  %3609 = vmatpush1.msra.mxu0 %v84
  %3610 = vmatprep.subr.mxu0 %v93
  %3611 = vmatpush1.msra.mxu0 %v92
  %3612 = vmatprep.subr.mxu0 %v101
  %3613 = vmatpush1.msra.mxu0 %v100
  %3614 = vmatprep.subr.mxu0 %v109
  %3615 = vmatpush1.msra.mxu0 %v108
  %3616 = vmatprep.subr.mxu0 %v117
  %3617 = vmatpush1.msra.mxu0 %v116
  %3618 = vmatprep.subr.mxu0 %v125
  %3619 = vmatpush1.msra.mxu0 %v124
  %3620 = vmatprep.subr.mxu0 %v133
  %3621 = vmatpush1.msra.mxu0 %v132
  %3622 = vmatprep.subr.mxu0 %v141
  %3623 = vmatpush1.msra.mxu0 %v140
  %3624 = vmatprep.subr.mxu0 %v149
  %3625 = vmatpush1.msra.mxu0 %v148
  %3626 = vmatprep.subr.mxu0 %v157
  %3627 = vmatpush1.msra.mxu0 %v156
  %3628 = vmatprep.subr.mxu0 %v165
  %3629 = vmatpush1.msra.mxu0 %v164
  %3630 = vmatprep.subr.mxu0 %v173
  %3631 = vmatpush1.msra.mxu0 %v172
  %3632 = vmatprep.subr.mxu0 %v181
  %3633 = vmatpush1.msra.mxu0 %v180
  %3634 = vmatprep.subr.mxu0 %v189
  %3635 = vmatpush1.msra.mxu0 %v188
  %3636 = vmatprep.subr.mxu0 %v197
  %3637 = vmatpush1.msra.mxu0 %v196
  %3638 = vmatprep.subr.mxu0 %v205
  %3639 = vmatpush1.msra.mxu0 %v204
  %3640 = vmatprep.subr.mxu0 %v213
  %3641 = vmatpush1.msra.mxu0 %v212
  %3642 = vmatprep.subr.mxu0 %v221
  %3643 = vmatpush1.msra.mxu0 %v220
  %3644 = vmatprep.subr.mxu0 %v229
  %3645 = vmatpush1.msra.mxu0 %v228
  %3646 = vmatprep.subr.mxu0 %v237
  %3647 = vmatpush1.msra.mxu0 %v236
  %3648 = vmatprep.subr.mxu0 %v245
  %3649 = vmatpush1.msra.mxu0 %v244
  %3650 = vmatprep.subr.mxu0 %v253
  %3651 = vmatpush1.msra.mxu0 %v252
  %3652 = vmatprep.subr.mxu0 %v261
  %3653 = vmatpush1.msra.mxu0 %v260
  %3654 = vmatprep.subr.mxu0 %v269
  %3655 = vmatpush1.msra.mxu0 %v268
  %3656 = vmatprep.subr.mxu0 %v277
  %3657 = vmatpush1.msra.mxu0 %v276
  %3658 = vmatprep.subr.mxu0 %v285
  %3659 = vmatpush1.msra.mxu0 %v284
  %3660 = vmatprep.mubr.f32.mxu0 %v3522
  %3661 = vmatmul.mubr.f32.gmra.mrb[0].mxu0 %v3515
  %v3662 = vpop.f32.mrb[0].mxu0
  %v3663 = vadd.f32 0.0, %v3662
  %v3664 = vpop.f32.mrb[0].mxu0
  %v3665 = vadd.f32 0.0, %v3664
  %3666 = vdwg.mxu0
  %3667 = vmatprep.subr.mxu0 %v39
  %3668 = vmatpush1.msra.mxu0 %v38
  %3669 = vmatprep.subr.mxu0 %v47
  %3670 = vmatpush1.msra.mxu0 %v46
  %3671 = vmatprep.subr.mxu0 %v55
  %3672 = vmatpush1.msra.mxu0 %v54
  %3673 = vmatprep.subr.mxu0 %v63
  %3674 = vmatpush1.msra.mxu0 %v62
  %3675 = vmatprep.subr.mxu0 %v71
  %3676 = vmatpush1.msra.mxu0 %v70
  %3677 = vmatprep.subr.mxu0 %v79
  %3678 = vmatpush1.msra.mxu0 %v78
  %3679 = vmatprep.subr.mxu0 %v87
  %3680 = vmatpush1.msra.mxu0 %v86
  %3681 = vmatprep.subr.mxu0 %v95
  %3682 = vmatpush1.msra.mxu0 %v94
  %3683 = vmatprep.subr.mxu0 %v103
  %3684 = vmatpush1.msra.mxu0 %v102
  %3685 = vmatprep.subr.mxu0 %v111
  %3686 = vmatpush1.msra.mxu0 %v110
  %3687 = vmatprep.subr.mxu0 %v119
  %3688 = vmatpush1.msra.mxu0 %v118
  %3689 = vmatprep.subr.mxu0 %v127
  %3690 = vmatpush1.msra.mxu0 %v126
  %3691 = vmatprep.subr.mxu0 %v135
  %3692 = vmatpush1.msra.mxu0 %v134
  %3693 = vmatprep.subr.mxu0 %v143
  %3694 = vmatpush1.msra.mxu0 %v142
  %3695 = vmatprep.subr.mxu0 %v151
  %3696 = vmatpush1.msra.mxu0 %v150
  %3697 = vmatprep.subr.mxu0 %v159
  %3698 = vmatpush1.msra.mxu0 %v158
  %3699 = vmatprep.subr.mxu0 %v167
  %3700 = vmatpush1.msra.mxu0 %v166
  %3701 = vmatprep.subr.mxu0 %v175
  %3702 = vmatpush1.msra.mxu0 %v174
  %3703 = vmatprep.subr.mxu0 %v183
  %3704 = vmatpush1.msra.mxu0 %v182
  %3705 = vmatprep.subr.mxu0 %v191
  %3706 = vmatpush1.msra.mxu0 %v190
  %3707 = vmatprep.subr.mxu0 %v199
  %3708 = vmatpush1.msra.mxu0 %v198
  %3709 = vmatprep.subr.mxu0 %v207
  %3710 = vmatpush1.msra.mxu0 %v206
  %3711 = vmatprep.subr.mxu0 %v215
  %3712 = vmatpush1.msra.mxu0 %v214
  %3713 = vmatprep.subr.mxu0 %v223
  %3714 = vmatpush1.msra.mxu0 %v222
  %3715 = vmatprep.subr.mxu0 %v231
  %3716 = vmatpush1.msra.mxu0 %v230
  %3717 = vmatprep.subr.mxu0 %v239
  %3718 = vmatpush1.msra.mxu0 %v238
  %3719 = vmatprep.subr.mxu0 %v247
  %3720 = vmatpush1.msra.mxu0 %v246
  %3721 = vmatprep.subr.mxu0 %v255
  %3722 = vmatpush1.msra.mxu0 %v254
  %3723 = vmatprep.subr.mxu0 %v263
  %3724 = vmatpush1.msra.mxu0 %v262
  %3725 = vmatprep.subr.mxu0 %v271
  %3726 = vmatpush1.msra.mxu0 %v270
  %3727 = vmatprep.subr.mxu0 %v279
  %3728 = vmatpush1.msra.mxu0 %v278
  %3729 = vmatprep.subr.mxu0 %v287
  %3730 = vmatpush1.msra.mxu0 %v286
  %3731 = vmatprep.mubr.f32.mxu0 %v3522
  %3732 = vmatmul.mubr.f32.gmra.mrb[0].mxu0 %v3515
  %v3733 = vpop.f32.mrb[0].mxu0
  %v3734 = vadd.f32 0.0, %v3733
  %v3735 = vpop.f32.mrb[0].mxu0
  %v3736 = vadd.f32 0.0, %v3735
  %3737 = vdwg.mxu0
  %3738 = vmatprep.subr.mxu0 %v41
  %3739 = vmatpush1.msra.mxu0 %v40
  %3740 = vmatprep.subr.mxu0 %v49
  %3741 = vmatpush1.msra.mxu0 %v48
  %3742 = vmatprep.subr.mxu0 %v57
  %3743 = vmatpush1.msra.mxu0 %v56
  %3744 = vmatprep.subr.mxu0 %v65
  %3745 = vmatpush1.msra.mxu0 %v64
  %3746 = vmatprep.subr.mxu0 %v73
  %3747 = vmatpush1.msra.mxu0 %v72
  %3748 = vmatprep.subr.mxu0 %v81
  %3749 = vmatpush1.msra.mxu0 %v80
  %3750 = vmatprep.subr.mxu0 %v89
  %3751 = vmatpush1.msra.mxu0 %v88
  %3752 = vmatprep.subr.mxu0 %v97
  %3753 = vmatpush1.msra.mxu0 %v96
  %3754 = vmatprep.subr.mxu0 %v105
  %3755 = vmatpush1.msra.mxu0 %v104
  %3756 = vmatprep.subr.mxu0 %v113
  %3757 = vmatpush1.msra.mxu0 %v112
  %3758 = vmatprep.subr.mxu0 %v121
  %3759 = vmatpush1.msra.mxu0 %v120
  %3760 = vmatprep.subr.mxu0 %v129
  %3761 = vmatpush1.msra.mxu0 %v128
  %3762 = vmatprep.subr.mxu0 %v137
  %3763 = vmatpush1.msra.mxu0 %v136
  %3764 = vmatprep.subr.mxu0 %v145
  %3765 = vmatpush1.msra.mxu0 %v144
  %3766 = vmatprep.subr.mxu0 %v153
  %3767 = vmatpush1.msra.mxu0 %v152
  %3768 = vmatprep.subr.mxu0 %v161
  %3769 = vmatpush1.msra.mxu0 %v160
  %3770 = vmatprep.subr.mxu0 %v169
  %3771 = vmatpush1.msra.mxu0 %v168
  %3772 = vmatprep.subr.mxu0 %v177
  %3773 = vmatpush1.msra.mxu0 %v176
  %3774 = vmatprep.subr.mxu0 %v185
  %3775 = vmatpush1.msra.mxu0 %v184
  %3776 = vmatprep.subr.mxu0 %v193
  %3777 = vmatpush1.msra.mxu0 %v192
  %3778 = vmatprep.subr.mxu0 %v201
  %3779 = vmatpush1.msra.mxu0 %v200
  %3780 = vmatprep.subr.mxu0 %v209
  %3781 = vmatpush1.msra.mxu0 %v208
  %3782 = vmatprep.subr.mxu0 %v217
  %3783 = vmatpush1.msra.mxu0 %v216
  %3784 = vmatprep.subr.mxu0 %v225
  %3785 = vmatpush1.msra.mxu0 %v224
  %3786 = vmatprep.subr.mxu0 %v233
  %3787 = vmatpush1.msra.mxu0 %v232
  %3788 = vmatprep.subr.mxu0 %v241
  %3789 = vmatpush1.msra.mxu0 %v240
  %3790 = vmatprep.subr.mxu0 %v249
  %3791 = vmatpush1.msra.mxu0 %v248
  %3792 = vmatprep.subr.mxu0 %v257
  %3793 = vmatpush1.msra.mxu0 %v256
  %3794 = vmatprep.subr.mxu0 %v265
  %3795 = vmatpush1.msra.mxu0 %v264
  %3796 = vmatprep.subr.mxu0 %v273
  %3797 = vmatpush1.msra.mxu0 %v272
  %3798 = vmatprep.subr.mxu0 %v281
  %3799 = vmatpush1.msra.mxu0 %v280
  %3800 = vmatprep.subr.mxu0 %v289
  %3801 = vmatpush1.msra.mxu0 %v288
  %3802 = vmatprep.mubr.f32.mxu0 %v3522
  %3803 = vmatmul.mubr.f32.gmra.mrb[0].mxu0 %v3515
  %v3804 = vpop.f32.mrb[0].mxu0
  %v3805 = vadd.f32 0.0, %v3804
  %v3806 = vpop.f32.mrb[0].mxu0
  %v3807 = vadd.f32 0.0, %v3806
  %3808 = vdwg.mxu0
  %v3817 = vcombine.low %v3592, %v3594
  %v3818 = vcombine.low %v3663, %v3665
  %v3819 = vcombine.low %v3734, %v3736
  %v3820 = vcombine.low %v3805, %v3807
  %v3822 = vunpack.c.l.s4 1966171168
  %v3823 = vunpack.c.0.s8 %v3822
  %v3824 = vlaneseq
  %v3825 = vshrl.u32 %v3824, 7
  %v3826 = vsub.s32 %v3823, %v3825
  %v3827 = vrot.slane %v3817, %v3826
  %v3829 = vunpack.c.l.s4 1966171168
  %v3830 = vunpack.c.0.s8 %v3829
  %v3831 = vlaneseq
  %v3832 = vshrl.u32 %v3831, 7
  %v3833 = vsub.s32 %v3830, %v3832
  %v3834 = vrot.slane %v3818, %v3833
  %v3836 = vunpack.c.l.s4 1966171168
  %v3837 = vunpack.c.0.s8 %v3836
  %v3838 = vlaneseq
  %v3839 = vshrl.u32 %v3838, 7
  %v3840 = vsub.s32 %v3837, %v3839
  %v3841 = vrot.slane %v3819, %v3840
  %v3843 = vunpack.c.l.s4 1966171168
  %v3844 = vunpack.c.0.s8 %v3843
  %v3845 = vlaneseq
  %v3846 = vshrl.u32 %v3845, 7
  %v3847 = vsub.s32 %v3844, %v3846
  %v3848 = vrot.slane %v3820, %v3847
  %v3849 = vcombine.low %v3827, %v3834
  %v3850 = vcombine.high %v3827, %v3834
  %v3851 = vcombine.low %v3841, %v3848
  %v3852 = vcombine.high %v3841, %v3848
  %v3854 = vunpack.c.l.s4 1966171168
  %v3855 = vunpack.c.0.s8 %v3854
  %v3856 = vlaneseq
  %v3857 = vshrl.u32 %v3856, 7
  %v3858 = vsub.s32 %v3855, %v3857
  %v3859 = vrot.slane %v3849, %v3858
  %v3861 = vunpack.c.l.s4 1966171168
  %v3862 = vunpack.c.0.s8 %v3861
  %v3863 = vlaneseq
  %v3864 = vshrl.u32 %v3863, 7
  %v3865 = vsub.s32 %v3862, %v3864
  %v3866 = vrot.slane %v3850, %v3865
  %v3868 = vunpack.c.l.s4 1966171168
  %v3869 = vunpack.c.0.s8 %v3868
  %v3870 = vlaneseq
  %v3871 = vshrl.u32 %v3870, 7
  %v3872 = vsub.s32 %v3869, %v3871
  %v3873 = vrot.slane %v3851, %v3872
  %v3875 = vunpack.c.l.s4 1966171168
  %v3876 = vunpack.c.0.s8 %v3875
  %v3877 = vlaneseq
  %v3878 = vshrl.u32 %v3877, 7
  %v3879 = vsub.s32 %v3876, %v3878
  %v3880 = vrot.slane %v3852, %v3879
  %v3881 = vcombine.low %v3859, %v3873
  %v3882 = vcombine.low %v3866, %v3880
  %v3885 = vadd.f32 %v3493, %v3881
  %v3886 = vadd.f32 %v3497, %v3882
  %v3887 = vxor.u32 %v3885, 2147483648
  %v3888 = vxor.u32 %v3886, 2147483648
  %v3889 = vmul.f32 %v3887, 1.442695
  %v3890 = vpow.pop %v3889
  %v3891 = vmul.f32 %v3888, 1.442695
  %v3892 = vpow.pop %v3891
  %v3893 = vadd.f32 %v3890, 1.0
  %v3894 = vadd.f32 %v3892, 1.0
  %v3895 = vrcp.pop %v3893
  %v3896 = vmul.f32 1.0, %v3895
  %v3897 = vrcp.pop %v3894
  %v3898 = vmul.f32 1.0, %v3897
  %v3901 = vrot.slane %v3885, 2
  %v3902 = vrot.slane %v3886, 2
  %v3905 = vxor.u32 %v3901, 2147483648
  %v3906 = vxor.u32 %v3902, 2147483648
  %v3907 = vmul.f32 %v3905, 1.442695
  %v3908 = vpow.pop %v3907
  %v3909 = vmul.f32 %v3906, 1.442695
  %v3910 = vpow.pop %v3909
  %v3911 = vadd.f32 %v3908, 1.0
  %v3912 = vadd.f32 %v3910, 1.0
  %v3913 = vrcp.pop %v3911
  %v3914 = vmul.f32 1.0, %v3913
  %v3915 = vrcp.pop %v3912
  %v3916 = vmul.f32 1.0, %v3915
  %v3917 = vrot.slane %v3885, 4
  %v3918 = vrot.slane %v3886, 4
  %v3921 = vtanh.pop %v3917
  %v3922 = vtanh.pop %v3918
  %v3923 = vrot.slane %v3885, 6
  %v3924 = vrot.slane %v3886, 6
  %v3927 = vxor.u32 %v3923, 2147483648
  %v3928 = vxor.u32 %v3924, 2147483648
  %v3929 = vmul.f32 %v3927, 1.442695
  %v3930 = vpow.pop %v3929
  %v3931 = vmul.f32 %v3928, 1.442695
  %v3932 = vpow.pop %v3931
  %v3933 = vadd.f32 %v3930, 1.0
  %v3934 = vadd.f32 %v3932, 1.0
  %v3935 = vrcp.pop %v3933
  %v3936 = vmul.f32 1.0, %v3935
  %v3937 = vrcp.pop %v3934
  %v3938 = vmul.f32 1.0, %v3937
  %v3939 = vmul.f32 %v3914, %v3484
  %v3940 = vmul.f32 %v3916, %v3485
  %v3941 = vmul.f32 %v3896, %v3921
  %v3942 = vmul.f32 %v3898, %v3922
  %v3943 = vadd.f32 %v3939, %v3941
  %v3944 = vadd.f32 %v3940, %v3942
  %v3945 = vtanh.pop %v3943
  %v3946 = vtanh.pop %v3944
  %v3947 = vmul.f32 %v3936, %v3945
  %v3948 = vmul.f32 %v3938, %v3946
  %v3951 = vcombine.low %v3947, %v3948
  %v3953 = vunpack.c.l.s4 1935823168
  %v3954 = vunpack.c.0.s8 %v3953
  %v3955 = vlaneseq
  %v3956 = vshrl.u32 %v3955, 7
  %v3957 = vsub.s32 %v3954, %v3956
  %v3958 = vrot.slane %v3951, %v3957
  %3960 = vst [vmem:[#allocation2] sm:$0xf] %v3958
  %v3963 = vcombine.low %v3943, %v3944
  %v3965 = vunpack.c.l.s4 1935823168
  %v3966 = vunpack.c.0.s8 %v3965
  %v3967 = vlaneseq
  %v3968 = vshrl.u32 %v3967, 7
  %v3969 = vsub.s32 %v3966, %v3968
  %v3970 = vrot.slane %v3963, %v3969
  %3972 = vst [vmem:[#allocation3] sm:$0xf] %v3970
  // Predicated region
  $region22: #{lstm_anno_forward.3} parent=0 // pred_check
    %p3973 = pneg %p19
  $region23: #{lstm_anno_forward.3} parent=0 // pred_check_branch
    %3975 = sbr.rel (%p3973) target = $region25
  $region24: #{lstm_anno_forward.3} parent=0 // pred_region
    %v3976 = vld [vmem:[%s2] sm:$0x3]
    %v3978 = vlaneseq
    %v3979 = vshrl.u32 %v3978, 7
    %v3980 = vsub.s32 0, %v3979
    %v3981 = vrot.slane %v3976, %v3980
    %v3982 = vlaneseq
    %v3983 = vshrl.u32 %v3982, 7
    %v3984 = vsub.s32 1, %v3983
    %v3985 = vrot.slane %v3976, %v3984
    %v3986 = vcombine.low %v3981, %v3985
    %v3988 = vunpack.c.l.s4 1966171168
    %v3989 = vunpack.c.0.s8 %v3988
    %v3990 = vlaneseq
    %v3991 = vshrl.u32 %v3990, 7
    %v3992 = vsub.s32 %v3989, %v3991
    %v3993 = vrot.slane %v3986, %v3992
    %v3994 = vcombine.high %v3993, %v3993
    %v3996 = vunpack.c.l.s4 1966171168
    %v3997 = vunpack.c.0.s8 %v3996
    %v3998 = vlaneseq
    %v3999 = vshrl.u32 %v3998, 7
    %v4000 = vsub.s32 %v3997, %v3999
    %v4001 = vrot.slane %v3993, %v4000
    %v4003 = vunpack.c.l.s4 1966171168
    %v4004 = vunpack.c.0.s8 %v4003
    %v4005 = vlaneseq
    %v4006 = vshrl.u32 %v4005, 7
    %v4007 = vsub.s32 %v4004, %v4006
    %v4008 = vrot.slane %v3994, %v4007
    %v4011 = vmul.f32 %v3947, %v4001
    %v4012 = vmul.f32 %v3948, %v4008
    %v4015 = vcombine.low %v4011, %v4012
    %v4017 = vunpack.c.l.s4 1966171168
    %v4018 = vunpack.c.0.s8 %v4017
    %v4019 = vlaneseq
    %v4020 = vshrl.u32 %v4019, 7
    %v4021 = vsub.s32 %v4018, %v4020
    %v4022 = vrot.slane %v4015, %v4021
    %v4023 = vcombine.high %v4022, %v4022
    %v4025 = vunpack.c.l.s4 1966171168
    %v4026 = vunpack.c.0.s8 %v4025
    %v4027 = vlaneseq
    %v4028 = vshrl.u32 %v4027, 7
    %v4029 = vsub.s32 %v4026, %v4028
    %v4030 = vrot.slane %v4022, %v4029
    %v4032 = vunpack.c.l.s4 1966171168
    %v4033 = vunpack.c.0.s8 %v4032
    %v4034 = vlaneseq
    %v4035 = vshrl.u32 %v4034, 7
    %v4036 = vsub.s32 %v4033, %v4035
    %v4037 = vrot.slane %v4023, %v4036
    %vm4040 = vcmask 1041408
    %v4041 = vsel %vm4040, %v4030, 0.0
    %v4042 = vsel %vm4040, %v4037, 0.0
    %v4043 = vadd.f32 %v4041, %v4042
    %4044 = vadd.xlane.f32.xlu0 %v4043
    %v4045 = vpop.xlane.xlu0 %4044
    %v4046 = vld [vmem:[#allocation4] sm:$0x1]
    %v4048 = vlaneseq
    %v4049 = vshrl.u32 %v4048, 7
    %v4050 = vsub.s32 0, %v4049
    %v4051 = vrot.slane %v4046, %v4050
    %v4053 = vadd.f32 %v4045, %v4051
    %vm4054 = vcmask 1024
    %4055 = vst.msk [vmem:[%s4] sm:$0x3] %vm4054, %v4053
  $region25: #{lstm_anno_forward.3} parent=0 // pred_fallthru
    _
  // Predicated region
  $region26: #{lstm_anno_forward.3} parent=0 // pred_check
    _
  $region27: #{lstm_anno_forward.3} parent=0 // pred_check_branch
    %4057 = sbr.rel (0) target = $region29
  $region28: #{lstm_anno_forward.3} parent=0 // pred_region
    _
  $region29: #{lstm_anno_forward.3} parent=0 // pred_fallthru
    _
  // Predicated region
  $region30: #{lstm_anno_forward.3} parent=0 // pred_check
    _
  $region31: #{lstm_anno_forward.3} parent=0 // pred_check_branch
    %4059 = sbr.rel (0) target = $region33
  $region32: #{lstm_anno_forward.3} parent=0 // pred_region
    _
  $region33: #{lstm_anno_forward.3} parent=0 // pred_fallthru
    _

</llo_original>
